<compile_context>
chip_gen: v5e
topology: v5e:2x2
jax: 0.10.0
libtpu: 0.0.40
codegen_flags: <defaults>
</compile_context>

<pallas_src>
import functools

import jax
import jax.numpy as jnp
import numpy as np
from jax import lax
from jax.experimental import pallas as pl
from jax.experimental.pallas import tpu as pltpu

LN_EPS = 1e-5             # CLIP layer_norm_eps
NEG_INF = -1e9            # additive attention-mask value


def _round_up(n, m):
    return ((n + m - 1) // m) * m


def _vmem_limit_bytes():
    # Generation-aware scoped-VMEM limit: ~5/8 of physical, capped at 64 MiB
    # (v7x: 64 MiB/TC physical -> 40 MiB; v5e/v6e: 128 MiB -> 64 MiB).
    cap = 64 * 1024 * 1024
    try:
        info = pltpu.get_tpu_info()
        cap = getattr(info, "vmem_capacity_bytes", cap) or cap
    except Exception:
        pass
    return min((cap * 5) // 8, 64 * 1024 * 1024)


def quick_gelu(x):
    # CLIP hidden_act = "quick_gelu"
    return x * jax.nn.sigmoid(1.702 * x)


def _layernorm(x, gamma, beta):
    mu = jnp.mean(x, axis=-1, keepdims=True)
    var = jnp.mean((x - mu) ** 2, axis=-1, keepdims=True)
    return (x - mu) * lax.rsqrt(var + LN_EPS) * gamma + beta


# ----------------------------------------------------------------------------
# Fused encoder layer kernel.  Grid = (B, L):
#   axis 0 (parallel)  : one padded sequence per step (megacore split on v7x)
#   axis 1 (arbitrary) : layer index; weights streamed per layer (double-
#                        buffered), residual x resident in the output block.
# ----------------------------------------------------------------------------
def encoder_layer_kernel(x_in_ref, mask_ref,
                         ln1g_ref, ln1b_ref, wqkv_ref, bqkv_ref,
                         wo_ref, bo_ref, ln2g_ref, ln2b_ref,
                         w1_ref, b1_ref, w2_ref, b2_ref,
                         x_out_ref, *, num_heads, scale):
    layer = pl.program_id(1)

    @pl.when(layer == 0)
    def _():
        # Load the embedding stream into the (resident) output block once.
        x_out_ref[...] = x_in_ref[...]

    x = x_out_ref[0]                       # (S, D) f32 residual (in VMEM)
    mask = mask_ref[0]                     # (S, S) f32 additive causal+padding
    D = x.shape[-1]
    H = num_heads
    Dh = D // H

    # ---- pre-LN + fused QKV projection (one MXU stream, bf16 in / f32 acc) --
    xn = _layernorm(x, ln1g_ref[0], ln1b_ref[0]).astype(jnp.bfloat16)
    qkv = jnp.dot(xn, wqkv_ref[0],
                  preferred_element_type=jnp.float32) + bqkv_ref[0]   # (S, 3D)

    # ---- attention: heads unrolled over static lane slices; everything stays
    #      in VMEM; ctx is assembled lane-dense as (S, D). --------------------
    ctx_parts = []
    for h in range(H):
        lo = h * Dh
        q_h = (qkv[:, lo:lo + Dh] * scale).astype(jnp.bfloat16)          # (S, Dh)
        k_h = qkv[:, D + lo:D + lo + Dh].astype(jnp.bfloat16)            # (S, Dh)
        v_h = qkv[:, 2 * D + lo:2 * D + lo + Dh].astype(jnp.bfloat16)    # (S, Dh)

        s = lax.dot_general(q_h, k_h, (((1,), (1,)), ((), ())),
                            preferred_element_type=jnp.float32)          # (S, S)
        s = s + mask
        s = s - jnp.max(s, axis=-1, keepdims=True)
        p = jnp.exp(s)
        # NOTE: fully padded query rows get a uniform softmax over real keys;
        # harmless — padded rows are never pooled.
        p = p * pl.reciprocal(jnp.sum(p, axis=-1, keepdims=True), approx=True)
        ctx_parts.append(jnp.dot(p.astype(jnp.bfloat16), v_h,
                                 preferred_element_type=jnp.float32))     # (S, Dh)
    ctx = jnp.concatenate(ctx_parts, axis=-1).astype(jnp.bfloat16)        # (S, D)

    attn = jnp.dot(ctx, wo_ref[0], preferred_element_type=jnp.float32) + bo_ref[0]
    x = x + attn

    # ---- pre-LN quick-GELU MLP + residual -----------------------------------
    xn2 = _layernorm(x, ln2g_ref[0], ln2b_ref[0]).astype(jnp.bfloat16)
    h1 = jnp.dot(xn2, w1_ref[0], preferred_element_type=jnp.float32) + b1_ref[0]
    h1 = quick_gelu(h1).astype(jnp.bfloat16)
    h2 = jnp.dot(h1, w2_ref[0], preferred_element_type=jnp.float32) + b2_ref[0]
    x_out_ref[0] = x + h2


def encoder_stack_call(x, mask, enc, num_heads, scale):
    B, S, D = x.shape
    L = enc['wqkv'].shape[0]
    F = enc['w1'].shape[-1]

    seq_map = lambda b, l: (b, 0, 0)       # constant across layers -> resident
    lay_map = lambda b, l: (l, 0, 0)       # streamed per layer (Buffered(2))

    kernel = functools.partial(encoder_layer_kernel,
                               num_heads=num_heads, scale=scale)
    return pl.pallas_call(
        kernel,
        out_shape=jax.ShapeDtypeStruct((B, S, D), jnp.float32),
        grid=(B, L),
        in_specs=[
            pl.BlockSpec((1, S, D), seq_map),           # x (embeddings)
            pl.BlockSpec((1, S, S), seq_map),           # additive mask
            pl.BlockSpec((1, 1, D), lay_map),           # ln1_g
            pl.BlockSpec((1, 1, D), lay_map),           # ln1_b
            pl.BlockSpec((1, D, 3 * D), lay_map),       # wqkv (bf16)
            pl.BlockSpec((1, 1, 3 * D), lay_map),       # bqkv
            pl.BlockSpec((1, D, D), lay_map),           # wo   (bf16)
            pl.BlockSpec((1, 1, D), lay_map),           # bo
            pl.BlockSpec((1, 1, D), lay_map),           # ln2_g
            pl.BlockSpec((1, 1, D), lay_map),           # ln2_b
            pl.BlockSpec((1, D, F), lay_map),           # w1   (bf16)
            pl.BlockSpec((1, 1, F), lay_map),           # b1
            pl.BlockSpec((1, F, D), lay_map),           # w2   (bf16)
            pl.BlockSpec((1, 1, D), lay_map),           # b2
        ],
        out_specs=pl.BlockSpec((1, S, D), seq_map),     # resident residual
        compiler_params=pltpu.CompilerParams(
            dimension_semantics=("parallel", "arbitrary"),
            vmem_limit_bytes=_vmem_limit_bytes()),
    )(x, mask,
      enc['ln1_g'], enc['ln1_b'], enc['wqkv'], enc['bqkv'],
      enc['wo'], enc['bo'], enc['ln2_g'], enc['ln2_b'],
      enc['w1'], enc['b1'], enc['w2'], enc['b2'])


# ----------------------------------------------------------------------------
# Head kernel: final_layer_norm (on the pooled EOS token — LN is per-token so
# pool-then-LN == LN-then-pool), text_projection (no bias) and the classifier
# Linear -> Tanh -> Linear.  Tiny; single block, no grid.
# ----------------------------------------------------------------------------
def head_kernel(pooled_ref, lnfg_ref, lnfb_ref, wproj_ref,
                wc1_ref, bc1_ref, wc2_ref, bc2_ref, o_ref):
    x = pooled_ref[...]                                        # (B, D) f32
    xn = _layernorm(x, lnfg_ref[...], lnfb_ref[...]).astype(jnp.bfloat16)
    emb = jnp.dot(xn, wproj_ref[...], preferred_element_type=jnp.float32)
    h = jnp.tanh(jnp.dot(emb.astype(jnp.bfloat16), wc1_ref[...],
                         preferred_element_type=jnp.float32) + bc1_ref[...])
    o_ref[...] = jnp.dot(h.astype(jnp.bfloat16), wc2_ref[...],
                         preferred_element_type=jnp.float32) + bc2_ref[...]


# ----------------------------------------------------------------------------
# Full forward (embeddings / mask construction / pooling-index are JAX glue).
# ----------------------------------------------------------------------------
def vit_for_text_forward(params, input_ids, attention_mask):
    B, S = input_ids.shape
    H = params['num_heads']
    D = params['token_emb'].shape[1]
    Dh = D // H
    S_pad = _round_up(S, 128)        # lane-dense score tiles / softmax

    # embeddings: token + position, zero-padded to S_pad
    x = params['token_emb'][input_ids] + params['pos_emb'][None, :S, :]
    x = jnp.pad(x, ((0, 0), (0, S_pad - S), (0, 0)))

    # additive mask (causal + key padding) built once per batch element
    am = jnp.pad(attention_mask.astype(jnp.float32), ((0, 0), (0, S_pad - S)))
    causal = jnp.where(jnp.arange(S_pad)[None, :] > jnp.arange(S_pad)[:, None],
                       NEG_INF, 0.0)
    mask = causal[None, :, :] + ((1.0 - am) * NEG_INF)[:, None, :]   # (B,S,S)

    x = encoder_stack_call(x, mask, params['enc'], H, Dh ** -0.5)    # (B,S_pad,D)

    # pooled output = hidden state at the first EOS position
    eos_pos = jnp.argmax((input_ids == params['eos_id']).astype(jnp.int32), axis=-1)
    pooled = x[jnp.arange(B), eos_pos]                               # (B, D)

    C = params['wc2'].shape[1]
    logits = pl.pallas_call(
        head_kernel,
        out_shape=jax.ShapeDtypeStruct((B, C), jnp.float32),
    )(pooled, params['lnf_g'], params['lnf_b'], params['wproj'],
      params['wc1'], params['bc1'], params['wc2'], params['bc2'])
    return logits


# ----------------------------------------------------------------------------
# Pure-JAX reference (mirrors the same bf16-weight / f32-accumulate math).
# ----------------------------------------------------------------------------
def reference_forward(params, input_ids, attention_mask):
    B, S = input_ids.shape
    D = params['token_emb'].shape[1]
    H = params['num_heads']
    Dh = D // H
    S_pad = _round_up(S, 128)
    enc = params['enc']
    L = enc['wqkv'].shape[0]

    def mm(a, w):
        return jnp.dot(a.astype(jnp.bfloat16), w,
                       preferred_element_type=jnp.float32)

    def ln(v, g, b):
        mu = v.mean(-1, keepdims=True)
        var = ((v - mu) ** 2).mean(-1, keepdims=True)
        return (v - mu) / jnp.sqrt(var + LN_EPS) * g + b

    x = params['token_emb'][input_ids] + params['pos_emb'][None, :S, :]
    x = jnp.pad(x, ((0, 0), (0, S_pad - S), (0, 0)))
    am = jnp.pad(attention_mask.astype(jnp.float32), ((0, 0), (0, S_pad - S)))
    causal = jnp.where(jnp.arange(S_pad)[None, :] > jnp.arange(S_pad)[:, None],
                       NEG_INF, 0.0)
    mask = causal[None, None, :, :] + ((1.0 - am) * NEG_INF)[:, None, None, :]

    scale = Dh ** -0.5
    for l in range(L):
        xn = ln(x, enc['ln1_g'][l, 0], enc['ln1_b'][l, 0])
        qkv = mm(xn, enc['wqkv'][l]) + enc['bqkv'][l, 0]
        q = (qkv[..., 0:D] * scale).astype(jnp.bfloat16)
        k = qkv[..., D:2 * D].astype(jnp.bfloat16)
        v = qkv[..., 2 * D:3 * D].astype(jnp.bfloat16)
        qh = q.reshape(B, S_pad, H, Dh).transpose(0, 2, 1, 3)
        kh = k.reshape(B, S_pad, H, Dh).transpose(0, 2, 1, 3)
        vh = v.reshape(B, S_pad, H, Dh).transpose(0, 2, 1, 3)
        s = jnp.einsum('bhqd,bhkd->bhqk', qh, kh,
                       preferred_element_type=jnp.float32) + mask
        p = jax.nn.softmax(s, axis=-1)
        ctx = jnp.einsum('bhqk,bhkd->bhqd', p.astype(jnp.bfloat16), vh,
                         preferred_element_type=jnp.float32)
        ctx = ctx.transpose(0, 2, 1, 3).reshape(B, S_pad, D).astype(jnp.bfloat16)
        x = x + mm(ctx, enc['wo'][l]) + enc['bo'][l, 0]
        xn2 = ln(x, enc['ln2_g'][l, 0], enc['ln2_b'][l, 0])
        h1 = quick_gelu(mm(xn2, enc['w1'][l]) + enc['b1'][l, 0]).astype(jnp.bfloat16)
        x = x + mm(h1, enc['w2'][l]) + enc['b2'][l, 0]

    eos_pos = jnp.argmax((input_ids == params['eos_id']).astype(jnp.int32), axis=-1)
    pooled = x[jnp.arange(B), eos_pos]
    xn = ln(pooled, params['lnf_g'][0], params['lnf_b'][0])
    emb = mm(xn, params['wproj'])
    hcls = jnp.tanh(mm(emb, params['wc1']) + params['bc1'][0])
    return mm(hcls, params['wc2']) + params['bc2'][0]


# ----------------------------------------------------------------------------
# Deterministic synthetic parameter initialization (shapes follow the module;
# scaled down: D=hidden, F=mlp intermediate, P=projection_dim, C=2 classes).
# Per-layer tensors are stacked along a leading L axis (streamed per layer).
# Matmul weights stored in bf16; LN params / biases / embeddings in f32.
# ----------------------------------------------------------------------------
def init_params(key, vocab, max_seq, D, F, H, P, C, L):
    scale = 0.05
    ks = list(jax.random.split(key, 32))

    def nrm_f32(shape, s=scale):
        return s * jax.random.normal(ks.pop(), shape, jnp.float32)

    def nrm_bf16(shape):
        return nrm_f32(shape).astype(jnp.bfloat16)

    enc = {
        'ln1_g': 1.0 + nrm_f32((L, 1, D), 0.1), 'ln1_b': nrm_f32((L, 1, D)),
        'wqkv': nrm_bf16((L, D, 3 * D)),        'bqkv': nrm_f32((L, 1, 3 * D)),
        'wo': nrm_bf16((L, D, D)),              'bo': nrm_f32((L, 1, D)),
        'ln2_g': 1.0 + nrm_f32((L, 1, D), 0.1), 'ln2_b': nrm_f32((L, 1, D)),
        'w1': nrm_bf16((L, D, F)),              'b1': nrm_f32((L, 1, F)),
        'w2': nrm_bf16((L, F, D)),              'b2': nrm_f32((L, 1, D)),
    }
    params = {
        'token_emb': nrm_f32((vocab, D)),
        'pos_emb': nrm_f32((max_seq, D)),
        'num_heads': H,
        'eos_id': vocab - 1,
        'enc': enc,
        'lnf_g': 1.0 + nrm_f32((1, D), 0.1), 'lnf_b': nrm_f32((1, D)),
        'wproj': nrm_bf16((D, P)),                           # text_projection (no bias)
        'wc1': nrm_bf16((P, P)), 'bc1': nrm_f32((1, P)),
        'wc2': nrm_bf16((P, C)), 'bc2': nrm_f32((1, C)),
    }
    return params


if __name__ == "__main__":
    key = jax.random.PRNGKey(0)
    k_param, k_ids = jax.random.split(key)

    # small shapes consistent with the module's forward (real: D=768, heads=12
    # -> Dh=64, F=3072, P=512, L=12, vocab=49408, seq=77). Demo keeps Dh=64.
    B, S, VOCAB, D, H, F, P, C, L = 2, 8, 64, 128, 2, 256, 128, 2, 2

    params = init_params(k_param, VOCAB, S, D, F, H, P, C, L)
    eos_id = params['eos_id']
    pad_id = 1                                  # pad_token_id=1 from the config

    ids = np.array(jax.random.randint(k_ids, (B, S), 2, VOCAB - 1), dtype=np.int32)
    attn = np.ones((B, S), np.int32)
    lengths = [6, 8]
    for b, length in enumerate(lengths):
        ids[b, length - 1] = eos_id
        if length < S:
            ids[b, length:] = pad_id
            attn[b, length:] = 0

    input_ids = jnp.asarray(ids, jnp.int32)
    attention_mask = jnp.asarray(attn, jnp.int32)

    logits = vit_for_text_forward(params, input_ids, attention_mask)
    logits = jax.block_until_ready(logits)
    assert logits.shape == (B, C)

    ref = reference_forward(params, input_ids, attention_mask)
    np.testing.assert_allclose(np.asarray(logits), np.asarray(ref),
                               rtol=2e-2, atol=2e-3)

    print("KERNEL_OK")
</pallas_src>

<mosaic_0001>
module attributes {stable_mosaic.version = 11 : i64} {
  func.func @encoder_layer_kernel(%arg0: i32, %arg1: i32, %arg2: memref<1x128x128xf32, #tpu.memory_space<vmem>>, %arg3: memref<1x128x128xf32, #tpu.memory_space<vmem>>, %arg4: memref<1x1x128xf32, #tpu.memory_space<vmem>>, %arg5: memref<1x1x128xf32, #tpu.memory_space<vmem>>, %arg6: memref<1x128x384xbf16, #tpu.memory_space<vmem>>, %arg7: memref<1x1x384xf32, #tpu.memory_space<vmem>>, %arg8: memref<1x128x128xbf16, #tpu.memory_space<vmem>>, %arg9: memref<1x1x128xf32, #tpu.memory_space<vmem>>, %arg10: memref<1x1x128xf32, #tpu.memory_space<vmem>>, %arg11: memref<1x1x128xf32, #tpu.memory_space<vmem>>, %arg12: memref<1x128x256xbf16, #tpu.memory_space<vmem>>, %arg13: memref<1x1x256xf32, #tpu.memory_space<vmem>>, %arg14: memref<1x256x128xbf16, #tpu.memory_space<vmem>>, %arg15: memref<1x1x128xf32, #tpu.memory_space<vmem>>, %arg16: memref<1x128x128xf32, #tpu.memory_space<vmem>>) attributes {dimension_semantics = [#tpu.dimension_semantics<parallel>, #tpu.dimension_semantics<arbitrary>], iteration_bounds = array<i64: 2, 2>, scalar_prefetch = 0 : i64, scratch_operands = 0 : i64, tpu.core_type = #tpu.core_type<tc>, window_params = [{transform_indices = @transform_0, window_bounds = array<i64: 1, 128, 128>}, {transform_indices = @transform_1, window_bounds = array<i64: 1, 128, 128>}, {transform_indices = @transform_2, window_bounds = array<i64: 1, 1, 128>}, {transform_indices = @transform_3, window_bounds = array<i64: 1, 1, 128>}, {transform_indices = @transform_4, window_bounds = array<i64: 1, 128, 384>}, {transform_indices = @transform_5, window_bounds = array<i64: 1, 1, 384>}, {transform_indices = @transform_6, window_bounds = array<i64: 1, 128, 128>}, {transform_indices = @transform_7, window_bounds = array<i64: 1, 1, 128>}, {transform_indices = @transform_8, window_bounds = array<i64: 1, 1, 128>}, {transform_indices = @transform_9, window_bounds = array<i64: 1, 1, 128>}, {transform_indices = @transform_10, window_bounds = array<i64: 1, 128, 256>}, {transform_indices = @transform_11, window_bounds = array<i64: 1, 1, 256>}, {transform_indices = @transform_12, window_bounds = array<i64: 1, 256, 128>}, {transform_indices = @transform_13, window_bounds = array<i64: 1, 1, 128>}, {transform_indices = @transform_14, window_bounds = array<i64: 1, 128, 128>}]} {
    %c0_i32 = arith.constant 0 : i32
    %0 = arith.cmpi eq, %arg1, %c0_i32 : i32
    %1 = arith.extui %0 : i1 to i32
    %c0_i32_0 = arith.constant 0 : i32
    %2 = arith.cmpi ne, %1, %c0_i32_0 : i32
    scf.if %2 {
      %c0_70 = arith.constant 0 : index
      %c0_71 = arith.constant 0 : index
      %c0_72 = arith.constant 0 : index
      %149 = vector.load %arg2[%c0_70, %c0_71, %c0_72] : memref<1x128x128xf32, #tpu.memory_space<vmem>>, vector<1x128x128xf32>
      %c0_73 = arith.constant 0 : index
      %c0_74 = arith.constant 0 : index
      %c0_75 = arith.constant 0 : index
      %150 = vector.load %arg16[%c0_73, %c0_74, %c0_75] : memref<1x128x128xf32, #tpu.memory_space<vmem>>, vector<1x128x128xf32>
      tpu.vector_store %arg16[%c0_73, %c0_74, %c0_75], %149 {strides = array<i32>} : memref<1x128x128xf32, #tpu.memory_space<vmem>>, vector<1x128x128xf32>,
    } else {
    }
    %c0 = arith.constant 0 : index
    %c0_1 = arith.constant 0 : index
    %c0_2 = arith.constant 0 : index
    %3 = vector.load %arg16[%c0, %c0_1, %c0_2] : memref<1x128x128xf32, #tpu.memory_space<vmem>>, vector<1x128x128xf32>
    %4 = vector.shape_cast %3 : vector<1x128x128xf32> to vector<128x128xf32>
    %c0_3 = arith.constant 0 : index
    %c0_4 = arith.constant 0 : index
    %c0_5 = arith.constant 0 : index
    %5 = vector.load %arg3[%c0_3, %c0_4, %c0_5] : memref<1x128x128xf32, #tpu.memory_space<vmem>>, vector<1x128x128xf32>
    %6 = vector.shape_cast %5 : vector<1x128x128xf32> to vector<128x128xf32>
    %c0_6 = arith.constant 0 : index
    %c0_7 = arith.constant 0 : index
    %c0_8 = arith.constant 0 : index
    %7 = vector.load %arg4[%c0_6, %c0_7, %c0_8] : memref<1x1x128xf32, #tpu.memory_space<vmem>>, vector<1x1x128xf32>
    %8 = vector.shape_cast %7 : vector<1x1x128xf32> to vector<1x128xf32>
    %c0_9 = arith.constant 0 : index
    %c0_10 = arith.constant 0 : index
    %c0_11 = arith.constant 0 : index
    %9 = vector.load %arg5[%c0_9, %c0_10, %c0_11] : memref<1x1x128xf32, #tpu.memory_space<vmem>>, vector<1x1x128xf32>
    %10 = vector.shape_cast %9 : vector<1x1x128xf32> to vector<1x128xf32>
    %cst = arith.constant dense<0.000000e+00> : vector<128xf32>
    %11 = vector.multi_reduction <add>, %4, %cst [1] : vector<128x128xf32> to vector<128xf32>
    %12 = vector.shape_cast %11 : vector<128xf32> to vector<128x1xf32>
    %cst_12 = arith.constant 1.280000e+02 : f32
    %13 = vector.broadcast %cst_12 : f32 to vector<128x1xf32>
    %14 = arith.divf %12, %13 : vector<128x1xf32>
    %15 = vector.broadcast %14 : vector<128x1xf32> to vector<128x128xf32>
    %16 = arith.subf %4, %15 : vector<128x128xf32>
    %17 = arith.mulf %16, %16 : vector<128x128xf32>
    %cst_13 = arith.constant dense<0.000000e+00> : vector<128xf32>
    %18 = vector.multi_reduction <add>, %17, %cst_13 [1] : vector<128x128xf32> to vector<128xf32>
    %19 = vector.shape_cast %18 : vector<128xf32> to vector<128x1xf32>
    %cst_14 = arith.constant 1.280000e+02 : f32
    %20 = vector.broadcast %cst_14 : f32 to vector<128x1xf32>
    %21 = arith.divf %19, %20 : vector<128x1xf32>
    %22 = vector.broadcast %14 : vector<128x1xf32> to vector<128x128xf32>
    %23 = arith.subf %4, %22 : vector<128x128xf32>
    %cst_15 = arith.constant 9.99999974E-6 : f32
    %24 = vector.broadcast %cst_15 : f32 to vector<128x1xf32>
    %25 = arith.addf %21, %24 : vector<128x1xf32>
    %26 = math.rsqrt %25 : vector<128x1xf32>
    %27 = vector.broadcast %26 : vector<128x1xf32> to vector<128x128xf32>
    %28 = arith.mulf %23, %27 : vector<128x128xf32>
    %29 = vector.broadcast %8 : vector<1x128xf32> to vector<128x128xf32>
    %30 = arith.mulf %28, %29 : vector<128x128xf32>
    %31 = vector.broadcast %10 : vector<1x128xf32> to vector<128x128xf32>
    %32 = arith.addf %30, %31 : vector<128x128xf32>
    %33 = arith.truncf %32 : vector<128x128xf32> to vector<128x128xbf16>
    %c0_16 = arith.constant 0 : index
    %c0_17 = arith.constant 0 : index
    %c0_18 = arith.constant 0 : index
    %34 = vector.load %arg6[%c0_16, %c0_17, %c0_18] : memref<1x128x384xbf16, #tpu.memory_space<vmem>>, vector<1x128x384xbf16>
    %35 = vector.shape_cast %34 : vector<1x128x384xbf16> to vector<128x384xbf16>
    %cst_19 = arith.constant dense<0.000000e+00> : vector<128x384xf32>
    %36 = tpu.matmul %33, %35, %cst_19 {dimension_numbers = #tpu.dot_dimension_numbers<[1], [0], [0], [1], [0, 0, 1, 1], [], []>} : vector<128x128xbf16>, vector<128x384xbf16>, vector<128x384xf32> -> vector<128x384xf32>
    %c0_20 = arith.constant 0 : index
    %c0_21 = arith.constant 0 : index
    %c0_22 = arith.constant 0 : index
    %37 = vector.load %arg7[%c0_20, %c0_21, %c0_22] : memref<1x1x384xf32, #tpu.memory_space<vmem>>, vector<1x1x384xf32>
    %38 = vector.shape_cast %37 : vector<1x1x384xf32> to vector<1x384xf32>
    %39 = vector.broadcast %38 : vector<1x384xf32> to vector<128x384xf32>
    %40 = arith.addf %36, %39 : vector<128x384xf32>
    %41 = vector.extract_strided_slice %40 {offsets = [0, 0], sizes = [128, 64], strides = [1, 1]} : vector<128x384xf32> to vector<128x64xf32>
    %cst_23 = arith.constant 1.250000e-01 : f32
    %42 = vector.broadcast %cst_23 : f32 to vector<128x64xf32>
    %43 = arith.mulf %41, %42 : vector<128x64xf32>
    %44 = arith.truncf %43 : vector<128x64xf32> to vector<128x64xbf16>
    %45 = vector.extract_strided_slice %40 {offsets = [0, 128], sizes = [128, 64], strides = [1, 1]} : vector<128x384xf32> to vector<128x64xf32>
    %46 = arith.truncf %45 : vector<128x64xf32> to vector<128x64xbf16>
    %47 = vector.extract_strided_slice %40 {offsets = [0, 256], sizes = [128, 64], strides = [1, 1]} : vector<128x384xf32> to vector<128x64xf32>
    %48 = arith.truncf %47 : vector<128x64xf32> to vector<128x64xbf16>
    %cst_24 = arith.constant dense<0.000000e+00> : vector<128x128xf32>
    %49 = tpu.matmul %44, %46, %cst_24 {dimension_numbers = #tpu.dot_dimension_numbers<[1], [1], [0], [0], [0, 0, 1, 0], [], []>} : vector<128x64xbf16>, vector<128x64xbf16>, vector<128x128xf32> -> vector<128x128xf32>
    %50 = arith.addf %49, %6 : vector<128x128xf32>
    %cst_25 = arith.constant dense<0xFF800000> : vector<128xf32>
    %51 = vector.multi_reduction <maximumf>, %50, %cst_25 [1] : vector<128x128xf32> to vector<128xf32>
    %52 = vector.shape_cast %51 : vector<128xf32> to vector<128x1xf32>
    %53 = vector.broadcast %52 : vector<128x1xf32> to vector<128x128xf32>
    %54 = arith.subf %50, %53 : vector<128x128xf32>
    %55 = math.exp %54 : vector<128x128xf32>
    %cst_26 = arith.constant dense<0.000000e+00> : vector<128xf32>
    %56 = vector.multi_reduction <add>, %55, %cst_26 [1] : vector<128x128xf32> to vector<128xf32>
    %57 = vector.shape_cast %56 : vector<128xf32> to vector<128x1xf32>
    %58 = tpu.reciprocal %57 {approx = true} : vector<128x1xf32> -> vector<128x1xf32>
    %59 = vector.broadcast %58 : vector<128x1xf32> to vector<128x128xf32>
    %60 = arith.mulf %55, %59 : vector<128x128xf32>
    %61 = arith.truncf %60 : vector<128x128xf32> to vector<128x128xbf16>
    %cst_27 = arith.constant dense<0.000000e+00> : vector<128x64xf32>
    %62 = tpu.matmul %61, %48, %cst_27 {dimension_numbers = #tpu.dot_dimension_numbers<[1], [0], [0], [1], [0, 0, 1, 1], [], []>} : vector<128x128xbf16>, vector<128x64xbf16>, vector<128x64xf32> -> vector<128x64xf32>
    %63 = vector.extract_strided_slice %40 {offsets = [0, 64], sizes = [128, 64], strides = [1, 1]} : vector<128x384xf32> to vector<128x64xf32>
    %cst_28 = arith.constant 1.250000e-01 : f32
    %64 = vector.broadcast %cst_28 : f32 to vector<128x64xf32>
    %65 = arith.mulf %63, %64 : vector<128x64xf32>
    %66 = arith.truncf %65 : vector<128x64xf32> to vector<128x64xbf16>
    %67 = vector.extract_strided_slice %40 {offsets = [0, 192], sizes = [128, 64], strides = [1, 1]} : vector<128x384xf32> to vector<128x64xf32>
    %68 = arith.truncf %67 : vector<128x64xf32> to vector<128x64xbf16>
    %69 = vector.extract_strided_slice %40 {offsets = [0, 320], sizes = [128, 64], strides = [1, 1]} : vector<128x384xf32> to vector<128x64xf32>
    %70 = arith.truncf %69 : vector<128x64xf32> to vector<128x64xbf16>
    %cst_29 = arith.constant dense<0.000000e+00> : vector<128x128xf32>
    %71 = tpu.matmul %66, %68, %cst_29 {dimension_numbers = #tpu.dot_dimension_numbers<[1], [1], [0], [0], [0, 0, 1, 0], [], []>} : vector<128x64xbf16>, vector<128x64xbf16>, vector<128x128xf32> -> vector<128x128xf32>
    %72 = arith.addf %71, %6 : vector<128x128xf32>
    %cst_30 = arith.constant dense<0xFF800000> : vector<128xf32>
    %73 = vector.multi_reduction <maximumf>, %72, %cst_30 [1] : vector<128x128xf32> to vector<128xf32>
    %74 = vector.shape_cast %73 : vector<128xf32> to vector<128x1xf32>
    %75 = vector.broadcast %74 : vector<128x1xf32> to vector<128x128xf32>
    %76 = arith.subf %72, %75 : vector<128x128xf32>
    %77 = math.exp %76 : vector<128x128xf32>
    %cst_31 = arith.constant dense<0.000000e+00> : vector<128xf32>
    %78 = vector.multi_reduction <add>, %77, %cst_31 [1] : vector<128x128xf32> to vector<128xf32>
    %79 = vector.shape_cast %78 : vector<128xf32> to vector<128x1xf32>
    %80 = tpu.reciprocal %79 {approx = true} : vector<128x1xf32> -> vector<128x1xf32>
    %81 = vector.broadcast %80 : vector<128x1xf32> to vector<128x128xf32>
    %82 = arith.mulf %77, %81 : vector<128x128xf32>
    %83 = arith.truncf %82 : vector<128x128xf32> to vector<128x128xbf16>
    %cst_32 = arith.constant dense<0.000000e+00> : vector<128x64xf32>
    %84 = tpu.matmul %83, %70, %cst_32 {dimension_numbers = #tpu.dot_dimension_numbers<[1], [0], [0], [1], [0, 0, 1, 1], [], []>} : vector<128x128xbf16>, vector<128x64xbf16>, vector<128x64xf32> -> vector<128x64xf32>
    %85 = tpu.concatenate %62, %84 in 1 : vector<128x64xf32>, vector<128x64xf32> -> vector<128x128xf32>
    %86 = arith.truncf %85 : vector<128x128xf32> to vector<128x128xbf16>
    %c0_33 = arith.constant 0 : index
    %c0_34 = arith.constant 0 : index
    %c0_35 = arith.constant 0 : index
    %87 = vector.load %arg8[%c0_33, %c0_34, %c0_35] : memref<1x128x128xbf16, #tpu.memory_space<vmem>>, vector<1x128x128xbf16>
    %88 = vector.shape_cast %87 : vector<1x128x128xbf16> to vector<128x128xbf16>
    %cst_36 = arith.constant dense<0.000000e+00> : vector<128x128xf32>
    %89 = tpu.matmul %86, %88, %cst_36 {dimension_numbers = #tpu.dot_dimension_numbers<[1], [0], [0], [1], [0, 0, 1, 1], [], []>} : vector<128x128xbf16>, vector<128x128xbf16>, vector<128x128xf32> -> vector<128x128xf32>
    %c0_37 = arith.constant 0 : index
    %c0_38 = arith.constant 0 : index
    %c0_39 = arith.constant 0 : index
    %90 = vector.load %arg9[%c0_37, %c0_38, %c0_39] : memref<1x1x128xf32, #tpu.memory_space<vmem>>, vector<1x1x128xf32>
    %91 = vector.shape_cast %90 : vector<1x1x128xf32> to vector<1x128xf32>
    %92 = vector.broadcast %91 : vector<1x128xf32> to vector<128x128xf32>
    %93 = arith.addf %89, %92 : vector<128x128xf32>
    %94 = arith.addf %4, %93 : vector<128x128xf32>
    %c0_40 = arith.constant 0 : index
    %c0_41 = arith.constant 0 : index
    %c0_42 = arith.constant 0 : index
    %95 = vector.load %arg10[%c0_40, %c0_41, %c0_42] : memref<1x1x128xf32, #tpu.memory_space<vmem>>, vector<1x1x128xf32>
    %96 = vector.shape_cast %95 : vector<1x1x128xf32> to vector<1x128xf32>
    %c0_43 = arith.constant 0 : index
    %c0_44 = arith.constant 0 : index
    %c0_45 = arith.constant 0 : index
    %97 = vector.load %arg11[%c0_43, %c0_44, %c0_45] : memref<1x1x128xf32, #tpu.memory_space<vmem>>, vector<1x1x128xf32>
    %98 = vector.shape_cast %97 : vector<1x1x128xf32> to vector<1x128xf32>
    %cst_46 = arith.constant dense<0.000000e+00> : vector<128xf32>
    %99 = vector.multi_reduction <add>, %94, %cst_46 [1] : vector<128x128xf32> to vector<128xf32>
    %100 = vector.shape_cast %99 : vector<128xf32> to vector<128x1xf32>
    %cst_47 = arith.constant 1.280000e+02 : f32
    %101 = vector.broadcast %cst_47 : f32 to vector<128x1xf32>
    %102 = arith.divf %100, %101 : vector<128x1xf32>
    %103 = vector.broadcast %102 : vector<128x1xf32> to vector<128x128xf32>
    %104 = arith.subf %94, %103 : vector<128x128xf32>
    %105 = arith.mulf %104, %104 : vector<128x128xf32>
    %cst_48 = arith.constant dense<0.000000e+00> : vector<128xf32>
    %106 = vector.multi_reduction <add>, %105, %cst_48 [1] : vector<128x128xf32> to vector<128xf32>
    %107 = vector.shape_cast %106 : vector<128xf32> to vector<128x1xf32>
    %cst_49 = arith.constant 1.280000e+02 : f32
    %108 = vector.broadcast %cst_49 : f32 to vector<128x1xf32>
    %109 = arith.divf %107, %108 : vector<128x1xf32>
    %110 = vector.broadcast %102 : vector<128x1xf32> to vector<128x128xf32>
    %111 = arith.subf %94, %110 : vector<128x128xf32>
    %cst_50 = arith.constant 9.99999974E-6 : f32
    %112 = vector.broadcast %cst_50 : f32 to vector<128x1xf32>
    %113 = arith.addf %109, %112 : vector<128x1xf32>
    %114 = math.rsqrt %113 : vector<128x1xf32>
    %115 = vector.broadcast %114 : vector<128x1xf32> to vector<128x128xf32>
    %116 = arith.mulf %111, %115 : vector<128x128xf32>
    %117 = vector.broadcast %96 : vector<1x128xf32> to vector<128x128xf32>
    %118 = arith.mulf %116, %117 : vector<128x128xf32>
    %119 = vector.broadcast %98 : vector<1x128xf32> to vector<128x128xf32>
    %120 = arith.addf %118, %119 : vector<128x128xf32>
    %121 = arith.truncf %120 : vector<128x128xf32> to vector<128x128xbf16>
    %c0_51 = arith.constant 0 : index
    %c0_52 = arith.constant 0 : index
    %c0_53 = arith.constant 0 : index
    %122 = vector.load %arg12[%c0_51, %c0_52, %c0_53] : memref<1x128x256xbf16, #tpu.memory_space<vmem>>, vector<1x128x256xbf16>
    %123 = vector.shape_cast %122 : vector<1x128x256xbf16> to vector<128x256xbf16>
    %cst_54 = arith.constant dense<0.000000e+00> : vector<128x256xf32>
    %124 = tpu.matmul %121, %123, %cst_54 {dimension_numbers = #tpu.dot_dimension_numbers<[1], [0], [0], [1], [0, 0, 1, 1], [], []>} : vector<128x128xbf16>, vector<128x256xbf16>, vector<128x256xf32> -> vector<128x256xf32>
    %c0_55 = arith.constant 0 : index
    %c0_56 = arith.constant 0 : index
    %c0_57 = arith.constant 0 : index
    %125 = vector.load %arg13[%c0_55, %c0_56, %c0_57] : memref<1x1x256xf32, #tpu.memory_space<vmem>>, vector<1x1x256xf32>
    %126 = vector.shape_cast %125 : vector<1x1x256xf32> to vector<1x256xf32>
    %127 = vector.broadcast %126 : vector<1x256xf32> to vector<128x256xf32>
    %128 = arith.addf %124, %127 : vector<128x256xf32>
    %cst_58 = arith.constant 1.702000e+00 : f32
    %129 = vector.broadcast %cst_58 : f32 to vector<128x256xf32>
    %130 = arith.mulf %129, %128 : vector<128x256xf32>
    %131 = arith.negf %130 : vector<128x256xf32>
    %132 = math.exp %131 : vector<128x256xf32>
    %cst_59 = arith.constant 1.000000e+00 : f32
    %133 = vector.broadcast %cst_59 : f32 to vector<128x256xf32>
    %134 = arith.addf %133, %132 : vector<128x256xf32>
    %135 = arith.divf %133, %134 : vector<128x256xf32>
    %136 = arith.mulf %128, %135 : vector<128x256xf32>
    %137 = arith.truncf %136 : vector<128x256xf32> to vector<128x256xbf16>
    %c0_60 = arith.constant 0 : index
    %c0_61 = arith.constant 0 : index
    %c0_62 = arith.constant 0 : index
    %138 = vector.load %arg14[%c0_60, %c0_61, %c0_62] : memref<1x256x128xbf16, #tpu.memory_space<vmem>>, vector<1x256x128xbf16>
    %139 = vector.shape_cast %138 : vector<1x256x128xbf16> to vector<256x128xbf16>
    %cst_63 = arith.constant dense<0.000000e+00> : vector<128x128xf32>
    %140 = tpu.matmul %137, %139, %cst_63 {dimension_numbers = #tpu.dot_dimension_numbers<[1], [0], [0], [1], [0, 0, 1, 1], [], []>} : vector<128x256xbf16>, vector<256x128xbf16>, vector<128x128xf32> -> vector<128x128xf32>
    %c0_64 = arith.constant 0 : index
    %c0_65 = arith.constant 0 : index
    %c0_66 = arith.constant 0 : index
    %141 = vector.load %arg15[%c0_64, %c0_65, %c0_66] : memref<1x1x128xf32, #tpu.memory_space<vmem>>, vector<1x1x128xf32>
    %142 = vector.shape_cast %141 : vector<1x1x128xf32> to vector<1x128xf32>
    %143 = vector.broadcast %142 : vector<1x128xf32> to vector<128x128xf32>
    %144 = arith.addf %140, %143 : vector<128x128xf32>
    %145 = arith.addf %94, %144 : vector<128x128xf32>
    %c0_67 = arith.constant 0 : index
    %c0_68 = arith.constant 0 : index
    %c0_69 = arith.constant 0 : index
    %146 = vector.load %arg16[%c0_67, %c0_68, %c0_69] : memref<1x128x128xf32, #tpu.memory_space<vmem>>, vector<1x128x128xf32>
    %147 = vector.shape_cast %146 : vector<1x128x128xf32> to vector<128x128xf32>
    %148 = vector.shape_cast %145 : vector<128x128xf32> to vector<1x128x128xf32>
    tpu.vector_store %arg16[%c0_67, %c0_68, %c0_69], %148 {strides = array<i32>} : memref<1x128x128xf32, #tpu.memory_space<vmem>>, vector<1x128x128xf32>,
    return
  }
  func.func @transform_0(%arg0: i32, %arg1: i32) -> (i32, i32, i32) {
    %c0_i32 = arith.constant 0 : i32
    %c0_i32_0 = arith.constant 0 : i32
    %c0_i32_1 = arith.constant 0 : i32
    return %arg0, %c0_i32, %c0_i32_0 : i32, i32, i32
  }
  func.func @transform_1(%arg0: i32, %arg1: i32) -> (i32, i32, i32) {
    %c0_i32 = arith.constant 0 : i32
    %c0_i32_0 = arith.constant 0 : i32
    %c0_i32_1 = arith.constant 0 : i32
    return %arg0, %c0_i32, %c0_i32_0 : i32, i32, i32
  }
  func.func @transform_2(%arg0: i32, %arg1: i32) -> (i32, i32, i32) {
    %c0_i32 = arith.constant 0 : i32
    %c0_i32_0 = arith.constant 0 : i32
    %c0_i32_1 = arith.constant 0 : i32
    return %arg1, %c0_i32, %c0_i32_0 : i32, i32, i32
  }
  func.func @transform_3(%arg0: i32, %arg1: i32) -> (i32, i32, i32) {
    %c0_i32 = arith.constant 0 : i32
    %c0_i32_0 = arith.constant 0 : i32
    %c0_i32_1 = arith.constant 0 : i32
    return %arg1, %c0_i32, %c0_i32_0 : i32, i32, i32
  }
  func.func @transform_4(%arg0: i32, %arg1: i32) -> (i32, i32, i32) {
    %c0_i32 = arith.constant 0 : i32
    %c0_i32_0 = arith.constant 0 : i32
    %c0_i32_1 = arith.constant 0 : i32
    return %arg1, %c0_i32, %c0_i32_0 : i32, i32, i32
  }
  func.func @transform_5(%arg0: i32, %arg1: i32) -> (i32, i32, i32) {
    %c0_i32 = arith.constant 0 : i32
    %c0_i32_0 = arith.constant 0 : i32
    %c0_i32_1 = arith.constant 0 : i32
    return %arg1, %c0_i32, %c0_i32_0 : i32, i32, i32
  }
  func.func @transform_6(%arg0: i32, %arg1: i32) -> (i32, i32, i32) {
    %c0_i32 = arith.constant 0 : i32
    %c0_i32_0 = arith.constant 0 : i32
    %c0_i32_1 = arith.constant 0 : i32
    return %arg1, %c0_i32, %c0_i32_0 : i32, i32, i32
  }
  func.func @transform_7(%arg0: i32, %arg1: i32) -> (i32, i32, i32) {
    %c0_i32 = arith.constant 0 : i32
    %c0_i32_0 = arith.constant 0 : i32
    %c0_i32_1 = arith.constant 0 : i32
    return %arg1, %c0_i32, %c0_i32_0 : i32, i32, i32
  }
  func.func @transform_8(%arg0: i32, %arg1: i32) -> (i32, i32, i32) {
    %c0_i32 = arith.constant 0 : i32
    %c0_i32_0 = arith.constant 0 : i32
    %c0_i32_1 = arith.constant 0 : i32
    return %arg1, %c0_i32, %c0_i32_0 : i32, i32, i32
  }
  func.func @transform_9(%arg0: i32, %arg1: i32) -> (i32, i32, i32) {
    %c0_i32 = arith.constant 0 : i32
    %c0_i32_0 = arith.constant 0 : i32
    %c0_i32_1 = arith.constant 0 : i32
    return %arg1, %c0_i32, %c0_i32_0 : i32, i32, i32
  }
  func.func @transform_10(%arg0: i32, %arg1: i32) -> (i32, i32, i32) {
    %c0_i32 = arith.constant 0 : i32
    %c0_i32_0 = arith.constant 0 : i32
    %c0_i32_1 = arith.constant 0 : i32
    return %arg1, %c0_i32, %c0_i32_0 : i32, i32, i32
  }
  func.func @transform_11(%arg0: i32, %arg1: i32) -> (i32, i32, i32) {
    %c0_i32 = arith.constant 0 : i32
    %c0_i32_0 = arith.constant 0 : i32
    %c0_i32_1 = arith.constant 0 : i32
    return %arg1, %c0_i32, %c0_i32_0 : i32, i32, i32
  }
  func.func @transform_12(%arg0: i32, %arg1: i32) -> (i32, i32, i32) {
    %c0_i32 = arith.constant 0 : i32
    %c0_i32_0 = arith.constant 0 : i32
    %c0_i32_1 = arith.constant 0 : i32
    return %arg1, %c0_i32, %c0_i32_0 : i32, i32, i32
  }
  func.func @transform_13(%arg0: i32, %arg1: i32) -> (i32, i32, i32) {
    %c0_i32 = arith.constant 0 : i32
    %c0_i32_0 = arith.constant 0 : i32
    %c0_i32_1 = arith.constant 0 : i32
    return %arg1, %c0_i32, %c0_i32_0 : i32, i32, i32
  }
  func.func @transform_14(%arg0: i32, %arg1: i32) -> (i32, i32, i32) {
    %c0_i32 = arith.constant 0 : i32
    %c0_i32_0 = arith.constant 0 : i32
    %c0_i32_1 = arith.constant 0 : i32
    return %arg0, %c0_i32, %c0_i32_0 : i32, i32, i32
  }
}

</mosaic_0001>

<llo_original>
// kernel: tpu_custom_call.1
$region0: #{tpu_custom_call.1}
  #allocation0 [shape = 'u32[]', space=smem, size = 0x4, offset = 0x4, fixed_abs, tag = 'smem constant byte address 0x4 - core index']
  #allocation1 [shape = 'u32[72,128]{1,0:T(1,128)}', space=vmem, size = 0x9000, scoped, tag = 'internal scratch']
  %s0 = inlined_call_operand.hbm [shape: f32[2,128,128], index: 0, kind: input, shape index: {}]
  %s1 = inlined_call_operand.hbm [shape: f32[2,128,128], index: 1, kind: input, shape index: {}]
  %s2 = inlined_call_operand.hbm [shape: f32[2,1,128], index: 2, kind: input, shape index: {}]
  %s3 = inlined_call_operand.vmem [shape: f32[2,1,128], index: 3, kind: input, shape index: {}]
  %s4 = inlined_call_operand.hbm [shape: bf16[2,128,384], index: 4, kind: input, shape index: {}]
  %s5 = inlined_call_operand.hbm [shape: f32[2,1,384], index: 5, kind: input, shape index: {}]
  %s6 = inlined_call_operand.hbm [shape: bf16[2,128,128], index: 6, kind: input, shape index: {}]
  %s7 = inlined_call_operand.hbm [shape: f32[2,1,128], index: 7, kind: input, shape index: {}]
  %s8 = inlined_call_operand.hbm [shape: f32[2,1,128], index: 8, kind: input, shape index: {}]
  %s9 = inlined_call_operand.vmem [shape: f32[2,1,128], index: 9, kind: input, shape index: {}]
  %s10 = inlined_call_operand.hbm [shape: bf16[2,128,256], index: 10, kind: input, shape index: {}]
  %s11 = inlined_call_operand.vmem [shape: f32[2,1,256], index: 11, kind: input, shape index: {}]
  %s12 = inlined_call_operand.hbm [shape: bf16[2,256,128], index: 12, kind: input, shape index: {}]
  %s13 = inlined_call_operand.vmem [shape: f32[2,1,128], index: 13, kind: input, shape index: {}]
  %s14 = inlined_call_operand.hbm [shape: f32[2,128,128], index: 14, kind: output, shape index: {}]
  %s15 = sld [smem:[#allocation0]]
  $region133: #{tpu_custom_call.1} parent=0
    _
  %s17 = ssub.s32 1, %s15
  %s18 = scalar_select 0, %s17, %s15
  $region1: #{tpu_custom_call.1} parent=0
    #allocation2 [shape = 'u8[131072]{0}', space=vmem, size = 0x20000, scoped, tag = 'input window, operand 0']
    #allocation3 [shape = 's32[2]{0}', space=sflag, size = 0x8, scoped, tag = 'scoped memory for tpu_custom_call.1']
    #allocation4 [shape = 's32[2]{0}', space=sflag, size = 0x8, scoped, tag = 'scoped memory for tpu_custom_call.1']
    #allocation5 [shape = 'u8[131072]{0}', space=vmem, size = 0x20000, scoped, tag = 'input window, operand 1']
    #allocation6 [shape = 's32[2]{0}', space=sflag, size = 0x8, scoped, tag = 'scoped memory for tpu_custom_call.1']
    #allocation7 [shape = 'u8[1024]{0}', space=vmem, size = 0x400, scoped, tag = 'input window, operand 2']
    #allocation8 [shape = 'u8[196608]{0}', space=vmem, size = 0x30000, scoped, tag = 'input window, operand 4']
    #allocation9 [shape = 's32[2]{0}', space=sflag, size = 0x8, scoped, tag = 'scoped memory for tpu_custom_call.1']
    #allocation10 [shape = 'u8[3072]{0}', space=vmem, size = 0xc00, scoped, tag = 'input window, operand 5']
    #allocation11 [shape = 'u8[65536]{0}', space=vmem, size = 0x10000, scoped, tag = 'input window, operand 6']
    #allocation12 [shape = 's32[2]{0}', space=sflag, size = 0x8, scoped, tag = 'scoped memory for tpu_custom_call.1']
    #allocation13 [shape = 'u8[1024]{0}', space=vmem, size = 0x400, scoped, tag = 'input window, operand 7']
    #allocation14 [shape = 'u8[1024]{0}', space=vmem, size = 0x400, scoped, tag = 'input window, operand 8']
    #allocation15 [shape = 's32[2]{0}', space=sflag, size = 0x8, scoped, tag = 'scoped memory for tpu_custom_call.1']
    #allocation16 [shape = 'u8[131072]{0}', space=vmem, size = 0x20000, scoped, tag = 'input window, operand 10']
    #allocation17 [shape = 'u8[131072]{0}', space=vmem, size = 0x20000, scoped, tag = 'input window, operand 12']
    #allocation18 [shape = 's32[2]{0}', space=sflag, size = 0x8, scoped, tag = 'scoped memory for tpu_custom_call.1']
    #allocation19 [shape = 'u8[131072]{0}', space=vmem, size = 0x20000, scoped, tag = 'output window, operand 0']
    %19 = vsyncpa [#allocation3], 0
    %s20 = scalar_lea.sflag [#allocation3], 1
    %21 = vsyncpa %s20, 0
    %22 = vsyncpa [#allocation6], 0
    %s23 = scalar_lea.sflag [#allocation6], 1
    %24 = vsyncpa %s23, 0
    %25 = vsyncpa [#allocation9], 0
    %s26 = scalar_lea.sflag [#allocation9], 1
    %27 = vsyncpa %s26, 0
    %28 = vsyncpa [#allocation12], 0
    %s29 = scalar_lea.sflag [#allocation12], 1
    %30 = vsyncpa %s29, 0
    %31 = vsyncpa [#allocation15], 0
    %s32 = scalar_lea.sflag [#allocation15], 1
    %33 = vsyncpa %s32, 0
    %34 = vsyncpa [#allocation18], 0
    %s35 = scalar_lea.sflag [#allocation18], 1
    %36 = vsyncpa %s35, 0
    %37 = vsyncpa [#allocation4], 0
    %s38 = scalar_lea.sflag [#allocation4], 1
    %39 = vsyncpa %s38, 0
    loop: start=0, step=1, limit=6
    $region2: #{tpu_custom_call.1} parent=1 // loop_pre_header
      _
    $region3: #{tpu_custom_call.1} parent=1 // loop_header
      %s41 = sphi 0, %s45
      %p42 = scmp.ge.s32.totalorder %s41, 6
      %s48 = sphi 0, %s60
      %s49 = sphi 0, %s56
      %s50 = sphi 0, %s48
      %s51 = sphi 0, %s49
      %s52 = sphi 0, %s50
      %s53 = sphi 0, %s51
      %s63 = sphi 0, %s65
      %s66 = sphi 0, %s63
      %s67 = sphi 0, %s66
      %s83 = sphi 0, %s67
      %s89 = sphi 0, %s91
      %s92 = sphi 0, %s89
      %s93 = sphi 0, %s92
      %s109 = sphi 0, %s93
      %s115 = sphi 0, %s117
      %s118 = sphi 0, %s115
      %s119 = sphi 0, %s118
      %s135 = sphi 0, %s119
      %s141 = sphi 0, %s143
      %s144 = sphi 0, %s141
      %s145 = sphi 0, %s144
      %s161 = sphi 0, %s145
      %s167 = sphi 0, %s169
      %s170 = sphi 0, %s167
      %s171 = sphi 0, %s170
      %s187 = sphi 0, %s171
      %s193 = sphi 0, %s195
      %s196 = sphi 0, %s193
      %s197 = sphi 0, %s196
      %s213 = sphi 0, %s197
      %s219 = sphi 0, %s221
      %s222 = sphi 0, %s219
      %s223 = sphi 0, %s222
      %s239 = sphi 0, %s223
      %s245 = sphi 0, %s247
      %s248 = sphi 0, %s245
      %s249 = sphi 0, %s248
      %s265 = sphi 0, %s249
      %s271 = sphi 0, %s273
      %s274 = sphi 0, %s271
      %s275 = sphi 0, %s274
      %s291 = sphi 0, %s275
      %s297 = sphi 0, %s299
      %s300 = sphi 0, %s297
      %s301 = sphi 0, %s300
      %s317 = sphi 0, %s301
      %s323 = sphi 0, %s325
      %s326 = sphi 0, %s323
      %s327 = sphi 0, %s326
      %s343 = sphi 0, %s327
      %s349 = sphi 0, %s351
      %s352 = sphi 0, %s349
      %s353 = sphi 0, %s352
      %s369 = sphi 0, %s353
      %s375 = sphi 0, %s377
      %s378 = sphi 0, %s375
      %s379 = sphi 0, %s378
      %s395 = sphi 0, %s379
      %s401 = sphi 0, %s403
      %s404 = sphi 0, %s401
      %s405 = sphi 0, %s404
      %s421 = sphi 0, %s405
      %s427 = sphi 0, %s429
      %s430 = sphi 0, %s427
      %s431 = sphi 0, %s430
      %s447 = sphi 0, %s431
    $region4: #{tpu_custom_call.1} parent=1 // loop_header_branch
      %44 = sbr.rel (%p42) target = $region8
    $region5: #{tpu_custom_call.1} parent=1 // loop_body
      %s46 = ssub.s32 %s41, 1
      %s47 = ssub.s32 %s41, 2
      %s54 = sadd.s32 1, %s49
      %p55 = scmp.ge.s32.totalorder %s54, 2
      %s56 = scalar_select %p55, 0, %s54
      %s57 = sadd.s32 1, %s48
      %s58 = scalar_select %p55, %s57, %s48
      %p59 = scmp.ge.s32.totalorder %s58, 2
      %s60 = scalar_select %p59, 0, %s58
      %s61 = ssub.s32 %s48, %s60
      %p62 = scmp.eq.s32.totalorder %s61, 0
      %s64 = sadd.s32 %s63, 1
      %s65 = scalar_select %p62, %s63, %s64
      %p68 = pneg %p62
      %p69 = scmp.eq.s32.totalorder %s41, 3
      %p70 = por %p68, %p69
      %p71 = scmp.ne.s32.totalorder %s63, %s66
      %p72 = scmp.eq.s32.totalorder %s41, 0
      %p73 = por %p71, %p72
      %p74 = scmp.ne.s32.totalorder %s63, %s66
      %p75 = scmp.eq.s32.totalorder %s46, 3
      %p76 = por %p74, %p75
      %p77 = scmp.ne.s32.totalorder %s66, %s67
      %p78 = scmp.eq.s32.totalorder %s46, 0
      %p79 = por %p77, %p78
      %p80 = scmp.ne.s32.totalorder %s66, %s67
      %p81 = scmp.eq.s32.totalorder %s47, 3
      %p82 = por %p80, %p81
      %p84 = scmp.ne.s32.totalorder %s67, %s83
      %p85 = scmp.eq.s32.totalorder %s47, 0
      %p86 = por %p84, %p85
      %s87 = ssub.s32 %s48, %s60
      %p88 = scmp.eq.s32.totalorder %s87, 0
      %s90 = sadd.s32 %s89, 1
      %s91 = scalar_select %p88, %s89, %s90
      %p94 = pneg %p88
      %p95 = scmp.eq.s32.totalorder %s41, 3
      %p96 = por %p94, %p95
      %p97 = scmp.ne.s32.totalorder %s89, %s92
      %p98 = scmp.eq.s32.totalorder %s41, 0
      %p99 = por %p97, %p98
      %p100 = scmp.ne.s32.totalorder %s89, %s92
      %p101 = scmp.eq.s32.totalorder %s46, 3
      %p102 = por %p100, %p101
      %p103 = scmp.ne.s32.totalorder %s92, %s93
      %p104 = scmp.eq.s32.totalorder %s46, 0
      %p105 = por %p103, %p104
      %p106 = scmp.ne.s32.totalorder %s92, %s93
      %p107 = scmp.eq.s32.totalorder %s47, 3
      %p108 = por %p106, %p107
      %p110 = scmp.ne.s32.totalorder %s93, %s109
      %p111 = scmp.eq.s32.totalorder %s47, 0
      %p112 = por %p110, %p111
      %s113 = ssub.s32 %s49, %s56
      %p114 = scmp.eq.s32.totalorder %s113, 0
      %s116 = sadd.s32 %s115, 1
      %s117 = scalar_select %p114, %s115, %s116
      %p120 = pneg %p114
      %p121 = scmp.eq.s32.totalorder %s41, 3
      %p122 = por %p120, %p121
      %p123 = scmp.ne.s32.totalorder %s115, %s118
      %p124 = scmp.eq.s32.totalorder %s41, 0
      %p125 = por %p123, %p124
      %p126 = scmp.ne.s32.totalorder %s115, %s118
      %p127 = scmp.eq.s32.totalorder %s46, 3
      %p128 = por %p126, %p127
      %p129 = scmp.ne.s32.totalorder %s118, %s119
      %p130 = scmp.eq.s32.totalorder %s46, 0
      %p131 = por %p129, %p130
      %p132 = scmp.ne.s32.totalorder %s118, %s119
      %p133 = scmp.eq.s32.totalorder %s47, 3
      %p134 = por %p132, %p133
      %p136 = scmp.ne.s32.totalorder %s119, %s135
      %p137 = scmp.eq.s32.totalorder %s47, 0
      %p138 = por %p136, %p137
      %s139 = ssub.s32 %s49, %s56
      %p140 = scmp.eq.s32.totalorder %s139, 0
      %s142 = sadd.s32 %s141, 1
      %s143 = scalar_select %p140, %s141, %s142
      %p146 = pneg %p140
      %p147 = scmp.eq.s32.totalorder %s41, 3
      %p148 = por %p146, %p147
      %p149 = scmp.ne.s32.totalorder %s141, %s144
      %p150 = scmp.eq.s32.totalorder %s41, 0
      %p151 = por %p149, %p150
      %p152 = scmp.ne.s32.totalorder %s141, %s144
      %p153 = scmp.eq.s32.totalorder %s46, 3
      %p154 = por %p152, %p153
      %p155 = scmp.ne.s32.totalorder %s144, %s145
      %p156 = scmp.eq.s32.totalorder %s46, 0
      %p157 = por %p155, %p156
      %p158 = scmp.ne.s32.totalorder %s144, %s145
      %p159 = scmp.eq.s32.totalorder %s47, 3
      %p160 = por %p158, %p159
      %p162 = scmp.ne.s32.totalorder %s145, %s161
      %p163 = scmp.eq.s32.totalorder %s47, 0
      %p164 = por %p162, %p163
      %s165 = ssub.s32 %s49, %s56
      %p166 = scmp.eq.s32.totalorder %s165, 0
      %s168 = sadd.s32 %s167, 1
      %s169 = scalar_select %p166, %s167, %s168
      %p172 = pneg %p166
      %p173 = scmp.eq.s32.totalorder %s41, 3
      %p174 = por %p172, %p173
      %p175 = scmp.ne.s32.totalorder %s167, %s170
      %p176 = scmp.eq.s32.totalorder %s41, 0
      %p177 = por %p175, %p176
      %p178 = scmp.ne.s32.totalorder %s167, %s170
      %p179 = scmp.eq.s32.totalorder %s46, 3
      %p180 = por %p178, %p179
      %p181 = scmp.ne.s32.totalorder %s170, %s171
      %p182 = scmp.eq.s32.totalorder %s46, 0
      %p183 = por %p181, %p182
      %p184 = scmp.ne.s32.totalorder %s170, %s171
      %p185 = scmp.eq.s32.totalorder %s47, 3
      %p186 = por %p184, %p185
      %p188 = scmp.ne.s32.totalorder %s171, %s187
      %p189 = scmp.eq.s32.totalorder %s47, 0
      %p190 = por %p188, %p189
      %s191 = ssub.s32 %s49, %s56
      %p192 = scmp.eq.s32.totalorder %s191, 0
      %s194 = sadd.s32 %s193, 1
      %s195 = scalar_select %p192, %s193, %s194
      %p198 = pneg %p192
      %p199 = scmp.eq.s32.totalorder %s41, 3
      %p200 = por %p198, %p199
      %p201 = scmp.ne.s32.totalorder %s193, %s196
      %p202 = scmp.eq.s32.totalorder %s41, 0
      %p203 = por %p201, %p202
      %p204 = scmp.ne.s32.totalorder %s193, %s196
      %p205 = scmp.eq.s32.totalorder %s46, 3
      %p206 = por %p204, %p205
      %p207 = scmp.ne.s32.totalorder %s196, %s197
      %p208 = scmp.eq.s32.totalorder %s46, 0
      %p209 = por %p207, %p208
      %p210 = scmp.ne.s32.totalorder %s196, %s197
      %p211 = scmp.eq.s32.totalorder %s47, 3
      %p212 = por %p210, %p211
      %p214 = scmp.ne.s32.totalorder %s197, %s213
      %p215 = scmp.eq.s32.totalorder %s47, 0
      %p216 = por %p214, %p215
      %s217 = ssub.s32 %s49, %s56
      %p218 = scmp.eq.s32.totalorder %s217, 0
      %s220 = sadd.s32 %s219, 1
      %s221 = scalar_select %p218, %s219, %s220
      %p224 = pneg %p218
      %p225 = scmp.eq.s32.totalorder %s41, 3
      %p226 = por %p224, %p225
      %p227 = scmp.ne.s32.totalorder %s219, %s222
      %p228 = scmp.eq.s32.totalorder %s41, 0
      %p229 = por %p227, %p228
      %p230 = scmp.ne.s32.totalorder %s219, %s222
      %p231 = scmp.eq.s32.totalorder %s46, 3
      %p232 = por %p230, %p231
      %p233 = scmp.ne.s32.totalorder %s222, %s223
      %p234 = scmp.eq.s32.totalorder %s46, 0
      %p235 = por %p233, %p234
      %p236 = scmp.ne.s32.totalorder %s222, %s223
      %p237 = scmp.eq.s32.totalorder %s47, 3
      %p238 = por %p236, %p237
      %p240 = scmp.ne.s32.totalorder %s223, %s239
      %p241 = scmp.eq.s32.totalorder %s47, 0
      %p242 = por %p240, %p241
      %s243 = ssub.s32 %s49, %s56
      %p244 = scmp.eq.s32.totalorder %s243, 0
      %s246 = sadd.s32 %s245, 1
      %s247 = scalar_select %p244, %s245, %s246
      %p250 = pneg %p244
      %p251 = scmp.eq.s32.totalorder %s41, 3
      %p252 = por %p250, %p251
      %p253 = scmp.ne.s32.totalorder %s245, %s248
      %p254 = scmp.eq.s32.totalorder %s41, 0
      %p255 = por %p253, %p254
      %p256 = scmp.ne.s32.totalorder %s245, %s248
      %p257 = scmp.eq.s32.totalorder %s46, 3
      %p258 = por %p256, %p257
      %p259 = scmp.ne.s32.totalorder %s248, %s249
      %p260 = scmp.eq.s32.totalorder %s46, 0
      %p261 = por %p259, %p260
      %p262 = scmp.ne.s32.totalorder %s248, %s249
      %p263 = scmp.eq.s32.totalorder %s47, 3
      %p264 = por %p262, %p263
      %p266 = scmp.ne.s32.totalorder %s249, %s265
      %p267 = scmp.eq.s32.totalorder %s47, 0
      %p268 = por %p266, %p267
      %s269 = ssub.s32 %s49, %s56
      %p270 = scmp.eq.s32.totalorder %s269, 0
      %s272 = sadd.s32 %s271, 1
      %s273 = scalar_select %p270, %s271, %s272
      %p276 = pneg %p270
      %p277 = scmp.eq.s32.totalorder %s41, 3
      %p278 = por %p276, %p277
      %p279 = scmp.ne.s32.totalorder %s271, %s274
      %p280 = scmp.eq.s32.totalorder %s41, 0
      %p281 = por %p279, %p280
      %p282 = scmp.ne.s32.totalorder %s271, %s274
      %p283 = scmp.eq.s32.totalorder %s46, 3
      %p284 = por %p282, %p283
      %p285 = scmp.ne.s32.totalorder %s274, %s275
      %p286 = scmp.eq.s32.totalorder %s46, 0
      %p287 = por %p285, %p286
      %p288 = scmp.ne.s32.totalorder %s274, %s275
      %p289 = scmp.eq.s32.totalorder %s47, 3
      %p290 = por %p288, %p289
      %p292 = scmp.ne.s32.totalorder %s275, %s291
      %p293 = scmp.eq.s32.totalorder %s47, 0
      %p294 = por %p292, %p293
      %s295 = ssub.s32 %s49, %s56
      %p296 = scmp.eq.s32.totalorder %s295, 0
      %s298 = sadd.s32 %s297, 1
      %s299 = scalar_select %p296, %s297, %s298
      %p302 = pneg %p296
      %p303 = scmp.eq.s32.totalorder %s41, 3
      %p304 = por %p302, %p303
      %p305 = scmp.ne.s32.totalorder %s297, %s300
      %p306 = scmp.eq.s32.totalorder %s41, 0
      %p307 = por %p305, %p306
      %p308 = scmp.ne.s32.totalorder %s297, %s300
      %p309 = scmp.eq.s32.totalorder %s46, 3
      %p310 = por %p308, %p309
      %p311 = scmp.ne.s32.totalorder %s300, %s301
      %p312 = scmp.eq.s32.totalorder %s46, 0
      %p313 = por %p311, %p312
      %p314 = scmp.ne.s32.totalorder %s300, %s301
      %p315 = scmp.eq.s32.totalorder %s47, 3
      %p316 = por %p314, %p315
      %p318 = scmp.ne.s32.totalorder %s301, %s317
      %p319 = scmp.eq.s32.totalorder %s47, 0
      %p320 = por %p318, %p319
      %s321 = ssub.s32 %s49, %s56
      %p322 = scmp.eq.s32.totalorder %s321, 0
      %s324 = sadd.s32 %s323, 1
      %s325 = scalar_select %p322, %s323, %s324
      %p328 = pneg %p322
      %p329 = scmp.eq.s32.totalorder %s41, 3
      %p330 = por %p328, %p329
      %p331 = scmp.ne.s32.totalorder %s323, %s326
      %p332 = scmp.eq.s32.totalorder %s41, 0
      %p333 = por %p331, %p332
      %p334 = scmp.ne.s32.totalorder %s323, %s326
      %p335 = scmp.eq.s32.totalorder %s46, 3
      %p336 = por %p334, %p335
      %p337 = scmp.ne.s32.totalorder %s326, %s327
      %p338 = scmp.eq.s32.totalorder %s46, 0
      %p339 = por %p337, %p338
      %p340 = scmp.ne.s32.totalorder %s326, %s327
      %p341 = scmp.eq.s32.totalorder %s47, 3
      %p342 = por %p340, %p341
      %p344 = scmp.ne.s32.totalorder %s327, %s343
      %p345 = scmp.eq.s32.totalorder %s47, 0
      %p346 = por %p344, %p345
      %s347 = ssub.s32 %s49, %s56
      %p348 = scmp.eq.s32.totalorder %s347, 0
      %s350 = sadd.s32 %s349, 1
      %s351 = scalar_select %p348, %s349, %s350
      %p354 = pneg %p348
      %p355 = scmp.eq.s32.totalorder %s41, 3
      %p356 = por %p354, %p355
      %p357 = scmp.ne.s32.totalorder %s349, %s352
      %p358 = scmp.eq.s32.totalorder %s41, 0
      %p359 = por %p357, %p358
      %p360 = scmp.ne.s32.totalorder %s349, %s352
      %p361 = scmp.eq.s32.totalorder %s46, 3
      %p362 = por %p360, %p361
      %p363 = scmp.ne.s32.totalorder %s352, %s353
      %p364 = scmp.eq.s32.totalorder %s46, 0
      %p365 = por %p363, %p364
      %p366 = scmp.ne.s32.totalorder %s352, %s353
      %p367 = scmp.eq.s32.totalorder %s47, 3
      %p368 = por %p366, %p367
      %p370 = scmp.ne.s32.totalorder %s353, %s369
      %p371 = scmp.eq.s32.totalorder %s47, 0
      %p372 = por %p370, %p371
      %s373 = ssub.s32 %s49, %s56
      %p374 = scmp.eq.s32.totalorder %s373, 0
      %s376 = sadd.s32 %s375, 1
      %s377 = scalar_select %p374, %s375, %s376
      %p380 = pneg %p374
      %p381 = scmp.eq.s32.totalorder %s41, 3
      %p382 = por %p380, %p381
      %p383 = scmp.ne.s32.totalorder %s375, %s378
      %p384 = scmp.eq.s32.totalorder %s41, 0
      %p385 = por %p383, %p384
      %p386 = scmp.ne.s32.totalorder %s375, %s378
      %p387 = scmp.eq.s32.totalorder %s46, 3
      %p388 = por %p386, %p387
      %p389 = scmp.ne.s32.totalorder %s378, %s379
      %p390 = scmp.eq.s32.totalorder %s46, 0
      %p391 = por %p389, %p390
      %p392 = scmp.ne.s32.totalorder %s378, %s379
      %p393 = scmp.eq.s32.totalorder %s47, 3
      %p394 = por %p392, %p393
      %p396 = scmp.ne.s32.totalorder %s379, %s395
      %p397 = scmp.eq.s32.totalorder %s47, 0
      %p398 = por %p396, %p397
      %s399 = ssub.s32 %s49, %s56
      %p400 = scmp.eq.s32.totalorder %s399, 0
      %s402 = sadd.s32 %s401, 1
      %s403 = scalar_select %p400, %s401, %s402
      %p406 = pneg %p400
      %p407 = scmp.eq.s32.totalorder %s41, 3
      %p408 = por %p406, %p407
      %p409 = scmp.ne.s32.totalorder %s401, %s404
      %p410 = scmp.eq.s32.totalorder %s41, 0
      %p411 = por %p409, %p410
      %p412 = scmp.ne.s32.totalorder %s401, %s404
      %p413 = scmp.eq.s32.totalorder %s46, 3
      %p414 = por %p412, %p413
      %p415 = scmp.ne.s32.totalorder %s404, %s405
      %p416 = scmp.eq.s32.totalorder %s46, 0
      %p417 = por %p415, %p416
      %p418 = scmp.ne.s32.totalorder %s404, %s405
      %p419 = scmp.eq.s32.totalorder %s47, 3
      %p420 = por %p418, %p419
      %p422 = scmp.ne.s32.totalorder %s405, %s421
      %p423 = scmp.eq.s32.totalorder %s47, 0
      %p424 = por %p422, %p423
      %s425 = ssub.s32 %s48, %s60
      %p426 = scmp.eq.s32.totalorder %s425, 0
      %s428 = sadd.s32 %s427, 1
      %s429 = scalar_select %p426, %s427, %s428
      %p432 = pneg %p426
      %p433 = scmp.eq.s32.totalorder %s41, 3
      %p434 = por %p432, %p433
      %p435 = scmp.ne.s32.totalorder %s427, %s430
      %p436 = scmp.eq.s32.totalorder %s41, 0
      %p437 = por %p435, %p436
      %p438 = scmp.ne.s32.totalorder %s427, %s430
      %p439 = scmp.eq.s32.totalorder %s46, 3
      %p440 = por %p438, %p439
      %p441 = scmp.ne.s32.totalorder %s430, %s431
      %p442 = scmp.eq.s32.totalorder %s46, 0
      %p443 = por %p441, %p442
      %p444 = scmp.ne.s32.totalorder %s430, %s431
      %p445 = scmp.eq.s32.totalorder %s47, 3
      %p446 = por %p444, %p445
      %p448 = scmp.ne.s32.totalorder %s431, %s447
      %p449 = scmp.eq.s32.totalorder %s47, 0
      %p450 = por %p448, %p449
      %p451 = scmp.le.s32.totalorder 1, %s41
      %p452 = scmp.lt.s32.totalorder %s41, 5
      %p453 = pnand %p451, %p452
      %p454 = pneg %p453
      // Predicated region
      $region9: #{tpu_custom_call.1} parent=5 // pred_check
        _
      $region10: #{tpu_custom_call.1} parent=5 // pred_check_branch
        %456 = sbr.rel (%p453) target = $region12
      $region11: #{tpu_custom_call.1} parent=5 // pred_region
        %s457 = ssub.s32 %s41, 1
      $region12: #{tpu_custom_call.1} parent=5 // pred_fallthru
        _
      %p458 = scmp.lt.s32.totalorder %s41, 4
      // Predicated region
      $region13: #{tpu_custom_call.1} parent=5 // pred_check
        %p459 = pneg %p458
      $region14: #{tpu_custom_call.1} parent=5 // pred_check_branch
        %461 = sbr.rel (%p459) target = $region16
      $region15: #{tpu_custom_call.1} parent=5 // pred_region
        // Predicated region
        $region17: #{tpu_custom_call.1} parent=15 // pred_check
          %p462 = pneg %p73
        $region18: #{tpu_custom_call.1} parent=15 // pred_check_branch
          %464 = sbr.rel (%p462) target = $region20
        $region19: #{tpu_custom_call.1} parent=15 // pred_region
          %s465 = sand.u32 %s63, 1
          %s466 = scalar_lea.sflag [#allocation3], %s465
          %s467 = sand.u32 %s63, 1
          %s468 = smul.addr %s467, 128
          %s469 = scalar_lea.vmem [#allocation2], %s468
          %471 = vsyncadd %s466, 0
          %s472 = smul.addr %s48, 16
          %s473 = smul.addr %s472, 8
          %s474 = scalar_lea.hbm %s0, %s473
          %s475 = sshll.u32 %s474, 4
          %s476 = int_to_ptr.hbm [resolvable:$true] %s475
          %s477 = sshll.u32 %s469, 4
          %s478 = int_to_ptr.vmem [resolvable:$true] %s477
          %483 = dma.hbm_to_vmem [thread:$0]  %s476, 2048, %s478, %s466, 128, 128, 8
        $region20: #{tpu_custom_call.1} parent=15 // pred_fallthru
          _
        // Predicated region
        $region21: #{tpu_custom_call.1} parent=15 // pred_check
          %p484 = pneg %p99
        $region22: #{tpu_custom_call.1} parent=15 // pred_check_branch
          %486 = sbr.rel (%p484) target = $region24
        $region23: #{tpu_custom_call.1} parent=15 // pred_region
          %s487 = sand.u32 %s41, 1
          %s488 = scalar_lea.sflag [#allocation6], %s487
          %s489 = sand.u32 %s89, 1
          %s490 = smul.addr %s489, 128
          %s491 = scalar_lea.vmem [#allocation5], %s490
          %493 = vsyncadd %s488, 0
          %s494 = smul.addr %s48, 16
          %s495 = smul.addr %s494, 8
          %s496 = scalar_lea.hbm %s1, %s495
          %s497 = sshll.u32 %s496, 4
          %s498 = int_to_ptr.hbm [resolvable:$true] %s497
          %s499 = sshll.u32 %s491, 4
          %s500 = int_to_ptr.vmem [resolvable:$true] %s499
          %505 = dma.hbm_to_vmem [thread:$0]  %s498, 2048, %s500, %s488, 128, 128, 8
        $region24: #{tpu_custom_call.1} parent=15 // pred_fallthru
          _
        // Predicated region
        $region25: #{tpu_custom_call.1} parent=15 // pred_check
          %p506 = pneg %p125
        $region26: #{tpu_custom_call.1} parent=15 // pred_check_branch
          %508 = sbr.rel (%p506) target = $region28
        $region27: #{tpu_custom_call.1} parent=15 // pred_region
          %s509 = sand.u32 %s41, 1
          %s510 = scalar_lea.sflag [#allocation6], %s509
          %s511 = sand.u32 %s115, 1
          %s512 = scalar_lea.vmem [#allocation7], %s511
          %514 = vsyncadd %s510, 0
          %s515 = scalar_lea.hbm %s2, %s49
          %s517 = sshll.u32 %s515, 4
          %s518 = int_to_ptr.hbm [resolvable:$true] %s517
          %s519 = sshll.u32 %s512, 4
          %s520 = int_to_ptr.vmem [resolvable:$true] %s519
          %522 = dma.hbm_to_vmem [thread:$0]  %s518, 16, %s520, %s510
        $region28: #{tpu_custom_call.1} parent=15 // pred_fallthru
          _
        // Predicated region
        $region29: #{tpu_custom_call.1} parent=15 // pred_check
          %p523 = pneg %p151
        $region30: #{tpu_custom_call.1} parent=15 // pred_check_branch
          %525 = sbr.rel (%p523) target = $region32
        $region31: #{tpu_custom_call.1} parent=15 // pred_region
          %p526 = scmp.lt.s32.totalorder %s49, 1
          %s527 = scalar_select %p526, %s49, 1
          %s528 = scalar_lea.vmem %s3, %s527
        $region32: #{tpu_custom_call.1} parent=15 // pred_fallthru
          _
        // Predicated region
        $region33: #{tpu_custom_call.1} parent=15 // pred_check
          %p529 = pneg %p177
        $region34: #{tpu_custom_call.1} parent=15 // pred_check_branch
          %531 = sbr.rel (%p529) target = $region36
        $region35: #{tpu_custom_call.1} parent=15 // pred_region
          %s532 = sand.u32 %s41, 1
          %s533 = scalar_lea.sflag [#allocation9], %s532
          %s534 = sand.u32 %s167, 1
          %s535 = smul.addr %s534, 192
          %s536 = scalar_lea.vmem [#allocation8], %s535
          %538 = vsyncadd %s533, 0
          %s539 = smul.addr %s49, 48
          %s540 = smul.addr %s539, 4
          %s541 = scalar_lea.hbm %s4, %s540
          %s542 = sshll.u32 %s541, 4
          %s543 = int_to_ptr.hbm [resolvable:$true] %s542
          %s544 = sshll.u32 %s536, 4
          %s545 = int_to_ptr.vmem [resolvable:$true] %s544
          %550 = dma.hbm_to_vmem [thread:$0]  %s543, 3072, %s545, %s533, 192, 192, 12
        $region36: #{tpu_custom_call.1} parent=15 // pred_fallthru
          _
        // Predicated region
        $region37: #{tpu_custom_call.1} parent=15 // pred_check
          %p551 = pneg %p203
        $region38: #{tpu_custom_call.1} parent=15 // pred_check_branch
          %553 = sbr.rel (%p551) target = $region40
        $region39: #{tpu_custom_call.1} parent=15 // pred_region
          %s554 = sand.u32 %s41, 1
          %s555 = scalar_lea.sflag [#allocation9], %s554
          %s556 = sand.u32 %s193, 1
          %s557 = smul.addr %s556, 3
          %s558 = scalar_lea.vmem [#allocation10], %s557
          %560 = vsyncadd %s555, 0
          %s561 = smul.addr %s49, 3
          %s562 = scalar_lea.hbm %s5, %s561
          %s564 = sshll.u32 %s562, 4
          %s565 = int_to_ptr.hbm [resolvable:$true] %s564
          %s566 = sshll.u32 %s558, 4
          %s567 = int_to_ptr.vmem [resolvable:$true] %s566
          %569 = dma.hbm_to_vmem [thread:$0]  %s565, 48, %s567, %s555
        $region40: #{tpu_custom_call.1} parent=15 // pred_fallthru
          _
        // Predicated region
        $region41: #{tpu_custom_call.1} parent=15 // pred_check
          %p570 = pneg %p229
        $region42: #{tpu_custom_call.1} parent=15 // pred_check_branch
          %572 = sbr.rel (%p570) target = $region44
        $region43: #{tpu_custom_call.1} parent=15 // pred_region
          %s573 = sand.u32 %s41, 1
          %s574 = scalar_lea.sflag [#allocation12], %s573
          %s575 = sand.u32 %s219, 1
          %s576 = smul.addr %s575, 64
          %s577 = scalar_lea.vmem [#allocation11], %s576
          %579 = vsyncadd %s574, 0
          %s580 = smul.addr %s49, 16
          %s581 = smul.addr %s580, 4
          %s582 = scalar_lea.hbm %s6, %s581
          %s583 = sshll.u32 %s582, 4
          %s584 = int_to_ptr.hbm [resolvable:$true] %s583
          %s585 = sshll.u32 %s577, 4
          %s586 = int_to_ptr.vmem [resolvable:$true] %s585
          %591 = dma.hbm_to_vmem [thread:$0]  %s584, 1024, %s586, %s574, 64, 64, 4
        $region44: #{tpu_custom_call.1} parent=15 // pred_fallthru
          _
        // Predicated region
        $region45: #{tpu_custom_call.1} parent=15 // pred_check
          %p592 = pneg %p255
        $region46: #{tpu_custom_call.1} parent=15 // pred_check_branch
          %594 = sbr.rel (%p592) target = $region48
        $region47: #{tpu_custom_call.1} parent=15 // pred_region
          %s595 = sand.u32 %s41, 1
          %s596 = scalar_lea.sflag [#allocation12], %s595
          %s597 = sand.u32 %s245, 1
          %s598 = scalar_lea.vmem [#allocation13], %s597
          %600 = vsyncadd %s596, 0
          %s601 = scalar_lea.hbm %s7, %s49
          %s603 = sshll.u32 %s601, 4
          %s604 = int_to_ptr.hbm [resolvable:$true] %s603
          %s605 = sshll.u32 %s598, 4
          %s606 = int_to_ptr.vmem [resolvable:$true] %s605
          %608 = dma.hbm_to_vmem [thread:$0]  %s604, 16, %s606, %s596
        $region48: #{tpu_custom_call.1} parent=15 // pred_fallthru
          _
        // Predicated region
        $region49: #{tpu_custom_call.1} parent=15 // pred_check
          %p609 = pneg %p281
        $region50: #{tpu_custom_call.1} parent=15 // pred_check_branch
          %611 = sbr.rel (%p609) target = $region52
        $region51: #{tpu_custom_call.1} parent=15 // pred_region
          %s612 = sand.u32 %s41, 1
          %s613 = scalar_lea.sflag [#allocation15], %s612
          %s614 = sand.u32 %s271, 1
          %s615 = scalar_lea.vmem [#allocation14], %s614
          %617 = vsyncadd %s613, 0
          %s618 = scalar_lea.hbm %s8, %s49
          %s620 = sshll.u32 %s618, 4
          %s621 = int_to_ptr.hbm [resolvable:$true] %s620
          %s622 = sshll.u32 %s615, 4
          %s623 = int_to_ptr.vmem [resolvable:$true] %s622
          %625 = dma.hbm_to_vmem [thread:$0]  %s621, 16, %s623, %s613
        $region52: #{tpu_custom_call.1} parent=15 // pred_fallthru
          _
        // Predicated region
        $region53: #{tpu_custom_call.1} parent=15 // pred_check
          %p626 = pneg %p307
        $region54: #{tpu_custom_call.1} parent=15 // pred_check_branch
          %628 = sbr.rel (%p626) target = $region56
        $region55: #{tpu_custom_call.1} parent=15 // pred_region
          %p629 = scmp.lt.s32.totalorder %s49, 1
          %s630 = scalar_select %p629, %s49, 1
          %s631 = scalar_lea.vmem %s9, %s630
        $region56: #{tpu_custom_call.1} parent=15 // pred_fallthru
          _
        // Predicated region
        $region57: #{tpu_custom_call.1} parent=15 // pred_check
          %p632 = pneg %p333
        $region58: #{tpu_custom_call.1} parent=15 // pred_check_branch
          %634 = sbr.rel (%p632) target = $region60
        $region59: #{tpu_custom_call.1} parent=15 // pred_region
          %s635 = sand.u32 %s41, 1
          %s636 = scalar_lea.sflag [#allocation15], %s635
          %s637 = sand.u32 %s323, 1
          %s638 = smul.addr %s637, 128
          %s639 = scalar_lea.vmem [#allocation16], %s638
          %641 = vsyncadd %s636, 0
          %s642 = smul.addr %s49, 32
          %s643 = smul.addr %s642, 4
          %s644 = scalar_lea.hbm %s10, %s643
          %s645 = sshll.u32 %s644, 4
          %s646 = int_to_ptr.hbm [resolvable:$true] %s645
          %s647 = sshll.u32 %s639, 4
          %s648 = int_to_ptr.vmem [resolvable:$true] %s647
          %653 = dma.hbm_to_vmem [thread:$0]  %s646, 2048, %s648, %s636, 128, 128, 8
        $region60: #{tpu_custom_call.1} parent=15 // pred_fallthru
          _
        // Predicated region
        $region61: #{tpu_custom_call.1} parent=15 // pred_check
          %p654 = pneg %p359
        $region62: #{tpu_custom_call.1} parent=15 // pred_check_branch
          %656 = sbr.rel (%p654) target = $region64
        $region63: #{tpu_custom_call.1} parent=15 // pred_region
          %p657 = scmp.lt.s32.totalorder %s49, 1
          %s658 = scalar_select %p657, %s49, 1
          %s659 = smul.addr %s658, 2
          %s660 = scalar_lea.vmem %s11, %s659
        $region64: #{tpu_custom_call.1} parent=15 // pred_fallthru
          _
        // Predicated region
        $region65: #{tpu_custom_call.1} parent=15 // pred_check
          %p661 = pneg %p385
        $region66: #{tpu_custom_call.1} parent=15 // pred_check_branch
          %663 = sbr.rel (%p661) target = $region68
        $region67: #{tpu_custom_call.1} parent=15 // pred_region
          %s664 = sand.u32 %s375, 1
          %s665 = scalar_lea.sflag [#allocation18], %s664
          %s666 = sand.u32 %s375, 1
          %s667 = smul.addr %s666, 128
          %s668 = scalar_lea.vmem [#allocation17], %s667
          %670 = vsyncadd %s665, 0
          %s671 = smul.addr %s49, 32
          %s672 = smul.addr %s671, 4
          %s673 = scalar_lea.hbm %s12, %s672
          %s674 = sshll.u32 %s673, 4
          %s675 = int_to_ptr.hbm [resolvable:$true] %s674
          %s676 = sshll.u32 %s668, 4
          %s677 = int_to_ptr.vmem [resolvable:$true] %s676
          %682 = dma.hbm_to_vmem [thread:$0]  %s675, 2048, %s677, %s665, 64, 64, 4
        $region68: #{tpu_custom_call.1} parent=15 // pred_fallthru
          _
        // Predicated region
        $region69: #{tpu_custom_call.1} parent=15 // pred_check
          %p683 = pneg %p411
        $region70: #{tpu_custom_call.1} parent=15 // pred_check_branch
          %685 = sbr.rel (%p683) target = $region72
        $region71: #{tpu_custom_call.1} parent=15 // pred_region
          %p686 = scmp.lt.s32.totalorder %s49, 1
          %s687 = scalar_select %p686, %s49, 1
          %s688 = scalar_lea.vmem %s13, %s687
        $region72: #{tpu_custom_call.1} parent=15 // pred_fallthru
          _
      $region16: #{tpu_custom_call.1} parent=5 // pred_fallthru
        _
      %p689 = scmp.le.s32.totalorder 1, %s41
      %p690 = scmp.lt.s32.totalorder %s41, 5
      %p691 = pnand %p689, %p690
      %p692 = pneg %p691
      // Predicated region
      $region73: #{tpu_custom_call.1} parent=5 // pred_check
        _
      $region74: #{tpu_custom_call.1} parent=5 // pred_check_branch
        %694 = sbr.rel (%p691) target = $region76
      $region75: #{tpu_custom_call.1} parent=5 // pred_region
        %s695 = ssub.s32 %s41, 1
        %s696 = sand.u32 %s66, 1
        %s697 = scalar_lea.sflag [#allocation3], %s696
        %s698 = sand.u32 %s66, 1
        %s699 = smul.addr %s698, 128
        %s700 = scalar_lea.vmem [#allocation2], %s699
        // Predicated region
        $region77: #{tpu_custom_call.1} parent=75 // pred_check
          %p701 = pneg %p79
        $region78: #{tpu_custom_call.1} parent=75 // pred_check_branch
          %703 = sbr.rel (%p701) target = $region80
        $region79: #{tpu_custom_call.1} parent=75 // pred_region
          %705 = dma.done %s697, 2048
        $region80: #{tpu_custom_call.1} parent=75 // pred_fallthru
          _
        %s706 = sand.u32 %s46, 1
        %s707 = scalar_lea.sflag [#allocation6], %s706
        %s708 = sand.u32 %s92, 1
        %s709 = smul.addr %s708, 128
        %s710 = scalar_lea.vmem [#allocation5], %s709
        // Predicated region
        $region81: #{tpu_custom_call.1} parent=75 // pred_check
          %p711 = pneg %p105
        $region82: #{tpu_custom_call.1} parent=75 // pred_check_branch
          %713 = sbr.rel (%p711) target = $region84
        $region83: #{tpu_custom_call.1} parent=75 // pred_region
          %715 = dma.done %s707, 2048
        $region84: #{tpu_custom_call.1} parent=75 // pred_fallthru
          _
        %s716 = sand.u32 %s46, 1
        %s717 = scalar_lea.sflag [#allocation6], %s716
        %s718 = sand.u32 %s118, 1
        %s719 = scalar_lea.vmem [#allocation7], %s718
        // Predicated region
        $region85: #{tpu_custom_call.1} parent=75 // pred_check
          %p720 = pneg %p131
        $region86: #{tpu_custom_call.1} parent=75 // pred_check_branch
          %722 = sbr.rel (%p720) target = $region88
        $region87: #{tpu_custom_call.1} parent=75 // pred_region
          %724 = dma.done %s717, 16
        $region88: #{tpu_custom_call.1} parent=75 // pred_fallthru
          _
        %s725 = sand.u32 %s46, 1
        %s726 = scalar_lea.sflag [#allocation9], %s725
        %s727 = sand.u32 %s170, 1
        %s728 = smul.addr %s727, 192
        %s729 = scalar_lea.vmem [#allocation8], %s728
        // Predicated region
        $region89: #{tpu_custom_call.1} parent=75 // pred_check
          %p730 = pneg %p183
        $region90: #{tpu_custom_call.1} parent=75 // pred_check_branch
          %732 = sbr.rel (%p730) target = $region92
        $region91: #{tpu_custom_call.1} parent=75 // pred_region
          %734 = dma.done %s726, 3072
        $region92: #{tpu_custom_call.1} parent=75 // pred_fallthru
          _
        %s735 = sand.u32 %s46, 1
        %s736 = scalar_lea.sflag [#allocation9], %s735
        %s737 = sand.u32 %s196, 1
        %s738 = smul.addr %s737, 3
        %s739 = scalar_lea.vmem [#allocation10], %s738
        // Predicated region
        $region93: #{tpu_custom_call.1} parent=75 // pred_check
          %p740 = pneg %p209
        $region94: #{tpu_custom_call.1} parent=75 // pred_check_branch
          %742 = sbr.rel (%p740) target = $region96
        $region95: #{tpu_custom_call.1} parent=75 // pred_region
          %744 = dma.done %s736, 48
        $region96: #{tpu_custom_call.1} parent=75 // pred_fallthru
          _
        %s745 = sand.u32 %s46, 1
        %s746 = scalar_lea.sflag [#allocation12], %s745
        %s747 = sand.u32 %s222, 1
        %s748 = smul.addr %s747, 64
        %s749 = scalar_lea.vmem [#allocation11], %s748
        // Predicated region
        $region97: #{tpu_custom_call.1} parent=75 // pred_check
          %p750 = pneg %p235
        $region98: #{tpu_custom_call.1} parent=75 // pred_check_branch
          %752 = sbr.rel (%p750) target = $region100
        $region99: #{tpu_custom_call.1} parent=75 // pred_region
          %754 = dma.done %s746, 1024
        $region100: #{tpu_custom_call.1} parent=75 // pred_fallthru
          _
        %s755 = sand.u32 %s46, 1
        %s756 = scalar_lea.sflag [#allocation12], %s755
        %s757 = sand.u32 %s248, 1
        %s758 = scalar_lea.vmem [#allocation13], %s757
        // Predicated region
        $region101: #{tpu_custom_call.1} parent=75 // pred_check
          %p759 = pneg %p261
        $region102: #{tpu_custom_call.1} parent=75 // pred_check_branch
          %761 = sbr.rel (%p759) target = $region104
        $region103: #{tpu_custom_call.1} parent=75 // pred_region
          %763 = dma.done %s756, 16
        $region104: #{tpu_custom_call.1} parent=75 // pred_fallthru
          _
        %s764 = sand.u32 %s46, 1
        %s765 = scalar_lea.sflag [#allocation15], %s764
        %s766 = sand.u32 %s274, 1
        %s767 = scalar_lea.vmem [#allocation14], %s766
        // Predicated region
        $region105: #{tpu_custom_call.1} parent=75 // pred_check
          %p768 = pneg %p287
        $region106: #{tpu_custom_call.1} parent=75 // pred_check_branch
          %770 = sbr.rel (%p768) target = $region108
        $region107: #{tpu_custom_call.1} parent=75 // pred_region
          %772 = dma.done %s765, 16
        $region108: #{tpu_custom_call.1} parent=75 // pred_fallthru
          _
        %s773 = sand.u32 %s46, 1
        %s774 = scalar_lea.sflag [#allocation15], %s773
        %s775 = sand.u32 %s326, 1
        %s776 = smul.addr %s775, 128
        %s777 = scalar_lea.vmem [#allocation16], %s776
        // Predicated region
        $region109: #{tpu_custom_call.1} parent=75 // pred_check
          %p778 = pneg %p339
        $region110: #{tpu_custom_call.1} parent=75 // pred_check_branch
          %780 = sbr.rel (%p778) target = $region112
        $region111: #{tpu_custom_call.1} parent=75 // pred_region
          %782 = dma.done %s774, 2048
        $region112: #{tpu_custom_call.1} parent=75 // pred_fallthru
          _
        %s783 = sand.u32 %s378, 1
        %s784 = scalar_lea.sflag [#allocation18], %s783
        %s785 = sand.u32 %s378, 1
        %s786 = smul.addr %s785, 128
        %s787 = scalar_lea.vmem [#allocation17], %s786
        // Predicated region
        $region113: #{tpu_custom_call.1} parent=75 // pred_check
          %p788 = pneg %p391
        $region114: #{tpu_custom_call.1} parent=75 // pred_check_branch
          %790 = sbr.rel (%p788) target = $region116
        $region115: #{tpu_custom_call.1} parent=75 // pred_region
          %792 = dma.done %s784, 2048
        $region116: #{tpu_custom_call.1} parent=75 // pred_fallthru
          _
        %s793 = sand.u32 %s66, 1
        %s794 = scalar_lea.sflag [#allocation3], %s793
        %s795 = sand.u32 %s66, 1
        %s796 = smul.addr %s795, 128
        %s797 = scalar_lea.vmem [#allocation2], %s796
        %p798 = pneg %p79
        %p799 = pneg %p76
        %s800 = sand.u32 %s46, 1
        %s801 = scalar_lea.sflag [#allocation6], %s800
        %s802 = sand.u32 %s92, 1
        %s803 = smul.addr %s802, 128
        %s804 = scalar_lea.vmem [#allocation5], %s803
        %p805 = pneg %p105
        %p806 = pneg %p102
        %s807 = sand.u32 %s46, 1
        %s808 = scalar_lea.sflag [#allocation6], %s807
        %s809 = sand.u32 %s118, 1
        %s810 = scalar_lea.vmem [#allocation7], %s809
        %p811 = pneg %p131
        %p812 = pneg %p128
        %p813 = scmp.lt.s32.totalorder %s51, 1
        %s814 = scalar_select %p813, %s51, 1
        %s815 = scalar_lea.vmem %s3, %s814
        %p816 = pneg %p157
        %p817 = pneg %p154
        %s818 = sand.u32 %s46, 1
        %s819 = scalar_lea.sflag [#allocation9], %s818
        %s820 = sand.u32 %s170, 1
        %s821 = smul.addr %s820, 192
        %s822 = scalar_lea.vmem [#allocation8], %s821
        %p823 = pneg %p183
        %p824 = pneg %p180
        %s825 = sand.u32 %s46, 1
        %s826 = scalar_lea.sflag [#allocation9], %s825
        %s827 = sand.u32 %s196, 1
        %s828 = smul.addr %s827, 3
        %s829 = scalar_lea.vmem [#allocation10], %s828
        %p830 = pneg %p209
        %p831 = pneg %p206
        %s832 = sand.u32 %s46, 1
        %s833 = scalar_lea.sflag [#allocation12], %s832
        %s834 = sand.u32 %s222, 1
        %s835 = smul.addr %s834, 64
        %s836 = scalar_lea.vmem [#allocation11], %s835
        %p837 = pneg %p235
        %p838 = pneg %p232
        %s839 = sand.u32 %s46, 1
        %s840 = scalar_lea.sflag [#allocation12], %s839
        %s841 = sand.u32 %s248, 1
        %s842 = scalar_lea.vmem [#allocation13], %s841
        %p843 = pneg %p261
        %p844 = pneg %p258
        %s845 = sand.u32 %s46, 1
        %s846 = scalar_lea.sflag [#allocation15], %s845
        %s847 = sand.u32 %s274, 1
        %s848 = scalar_lea.vmem [#allocation14], %s847
        %p849 = pneg %p287
        %p850 = pneg %p284
        %p851 = scmp.lt.s32.totalorder %s51, 1
        %s852 = scalar_select %p851, %s51, 1
        %s853 = scalar_lea.vmem %s9, %s852
        %p854 = pneg %p313
        %p855 = pneg %p310
        %s856 = sand.u32 %s46, 1
        %s857 = scalar_lea.sflag [#allocation15], %s856
        %s858 = sand.u32 %s326, 1
        %s859 = smul.addr %s858, 128
        %s860 = scalar_lea.vmem [#allocation16], %s859
        %p861 = pneg %p339
        %p862 = pneg %p336
        %p863 = scmp.lt.s32.totalorder %s51, 1
        %s864 = scalar_select %p863, %s51, 1
        %s865 = smul.addr %s864, 2
        %s866 = scalar_lea.vmem %s11, %s865
        %p867 = pneg %p365
        %p868 = pneg %p362
        %s869 = sand.u32 %s378, 1
        %s870 = scalar_lea.sflag [#allocation18], %s869
        %s871 = sand.u32 %s378, 1
        %s872 = smul.addr %s871, 128
        %s873 = scalar_lea.vmem [#allocation17], %s872
        %p874 = pneg %p391
        %p875 = pneg %p388
        %p876 = scmp.lt.s32.totalorder %s51, 1
        %s877 = scalar_select %p876, %s51, 1
        %s878 = scalar_lea.vmem %s13, %s877
        %p879 = pneg %p417
        %p880 = pneg %p414
        %p881 = pneg %p443
        %p882 = pneg %p440
        %s883 = sand.u32 %s430, 1
        %s884 = scalar_lea.sflag [#allocation4], %s883
        %s885 = sand.u32 %s430, 1
        %s886 = smul.addr %s885, 128
        %s887 = scalar_lea.vmem [#allocation19], %s886
        %p888 = scmp.lt.s32.totalorder %s51, 1
        %s889 = scalar_select %p888, %s51, 1
        %s890 = scalar_lea.vmem %s3, %s889
        %p891 = scmp.lt.s32.totalorder %s51, 1
        %s892 = scalar_select %p891, %s51, 1
        %s893 = scalar_lea.vmem %s9, %s892
        %p894 = scmp.lt.s32.totalorder %s51, 1
        %s895 = scalar_select %p894, %s51, 1
        %s896 = smul.addr %s895, 2
        %s897 = scalar_lea.vmem %s11, %s896
        %p898 = scmp.lt.s32.totalorder %s51, 1
        %s899 = scalar_select %p898, %s51, 1
        %s900 = scalar_lea.vmem %s13, %s899
        %p901 = scmp.eq.s32.totalorder %s51, 0
        // Predicated region
        $region117: #{tpu_custom_call.1} parent=75 // pred_check
          %p902 = pneg %p901
        $region118: #{tpu_custom_call.1} parent=75 // pred_check_branch
          %904 = sbr.rel (%p902) target = $region120
        $region119: #{tpu_custom_call.1} parent=75 // pred_region
          %v905 = vld [vmem:[%s700] sm:$0xff]
          %v906 = vld [vmem:[%s700 + $0x8] sm:$0xff]
          %v907 = vld [vmem:[%s700 + $0x10] sm:$0xff]
          %v908 = vld [vmem:[%s700 + $0x18] sm:$0xff]
          %v909 = vld [vmem:[%s700 + $0x20] sm:$0xff]
          %v910 = vld [vmem:[%s700 + $0x28] sm:$0xff]
          %v911 = vld [vmem:[%s700 + $0x30] sm:$0xff]
          %v912 = vld [vmem:[%s700 + $0x38] sm:$0xff]
          %v913 = vld [vmem:[%s700 + $0x40] sm:$0xff]
          %v914 = vld [vmem:[%s700 + $0x48] sm:$0xff]
          %v915 = vld [vmem:[%s700 + $0x50] sm:$0xff]
          %v916 = vld [vmem:[%s700 + $0x58] sm:$0xff]
          %v917 = vld [vmem:[%s700 + $0x60] sm:$0xff]
          %v918 = vld [vmem:[%s700 + $0x68] sm:$0xff]
          %v919 = vld [vmem:[%s700 + $0x70] sm:$0xff]
          %v920 = vld [vmem:[%s700 + $0x78] sm:$0xff]
          %921 = vst [vmem:[%s887] sm:$0xff] %v905
          %922 = vst [vmem:[%s887 + $0x8] sm:$0xff] %v906
          %923 = vst [vmem:[%s887 + $0x10] sm:$0xff] %v907
          %924 = vst [vmem:[%s887 + $0x18] sm:$0xff] %v908
          %925 = vst [vmem:[%s887 + $0x20] sm:$0xff] %v909
          %926 = vst [vmem:[%s887 + $0x28] sm:$0xff] %v910
          %927 = vst [vmem:[%s887 + $0x30] sm:$0xff] %v911
          %928 = vst [vmem:[%s887 + $0x38] sm:$0xff] %v912
          %929 = vst [vmem:[%s887 + $0x40] sm:$0xff] %v913
          %930 = vst [vmem:[%s887 + $0x48] sm:$0xff] %v914
          %931 = vst [vmem:[%s887 + $0x50] sm:$0xff] %v915
          %932 = vst [vmem:[%s887 + $0x58] sm:$0xff] %v916
          %933 = vst [vmem:[%s887 + $0x60] sm:$0xff] %v917
          %934 = vst [vmem:[%s887 + $0x68] sm:$0xff] %v918
          %935 = vst [vmem:[%s887 + $0x70] sm:$0xff] %v919
          %936 = vst [vmem:[%s887 + $0x78] sm:$0xff] %v920
        $region120: #{tpu_custom_call.1} parent=75 // pred_fallthru
          _
        %v937 = vld [vmem:[%s887] sm:$0xff]
        %v938 = vld [vmem:[%s887 + $0x8] sm:$0xff]
        %v939 = vld [vmem:[%s887 + $0x10] sm:$0xff]
        %v940 = vld [vmem:[%s887 + $0x18] sm:$0xff]
        %v941 = vld [vmem:[%s887 + $0x20] sm:$0xff]
        %v942 = vld [vmem:[%s887 + $0x28] sm:$0xff]
        %v943 = vld [vmem:[%s887 + $0x30] sm:$0xff]
        %v944 = vld [vmem:[%s887 + $0x38] sm:$0xff]
        %v945 = vld [vmem:[%s887 + $0x40] sm:$0xff]
        %v946 = vld [vmem:[%s887 + $0x48] sm:$0xff]
        %v947 = vld [vmem:[%s887 + $0x50] sm:$0xff]
        %v948 = vld [vmem:[%s887 + $0x58] sm:$0xff]
        %v949 = vld [vmem:[%s887 + $0x60] sm:$0xff]
        %v950 = vld [vmem:[%s887 + $0x68] sm:$0xff]
        %v951 = vld [vmem:[%s887 + $0x70] sm:$0xff]
        %v952 = vld [vmem:[%s887 + $0x78] sm:$0xff]
        %v953 = vld [vmem:[%s710] sm:$0xff]
        %v954 = vld [vmem:[%s710 + $0x8] sm:$0xff]
        %v955 = vld [vmem:[%s710 + $0x10] sm:$0xff]
        %v956 = vld [vmem:[%s710 + $0x18] sm:$0xff]
        %v957 = vld [vmem:[%s710 + $0x20] sm:$0xff]
        %v958 = vld [vmem:[%s710 + $0x28] sm:$0xff]
        %v959 = vld [vmem:[%s710 + $0x30] sm:$0xff]
        %v960 = vld [vmem:[%s710 + $0x38] sm:$0xff]
        %v961 = vld [vmem:[%s710 + $0x40] sm:$0xff]
        %v962 = vld [vmem:[%s710 + $0x48] sm:$0xff]
        %v963 = vld [vmem:[%s710 + $0x50] sm:$0xff]
        %v964 = vld [vmem:[%s710 + $0x58] sm:$0xff]
        %v965 = vld [vmem:[%s710 + $0x60] sm:$0xff]
        %v966 = vld [vmem:[%s710 + $0x68] sm:$0xff]
        %v967 = vld [vmem:[%s710 + $0x70] sm:$0xff]
        %v968 = vld [vmem:[%s710 + $0x78] sm:$0xff]
        %v969 = vld [vmem:[%s719] sm:$0x1]
        %v970 = vld [vmem:[%s890] sm:$0x1]
        %971 = vadd.xlane.f32.xlu0 %v937
        %v972 = vpop.xlane.xlu0 %971
        %973 = vadd.xlane.f32.xlu0 %v938
        %v974 = vpop.xlane.xlu0 %973
        %975 = vadd.xlane.f32.xlu0 %v939
        %v976 = vpop.xlane.xlu0 %975
        %977 = vadd.xlane.f32.xlu0 %v940
        %v978 = vpop.xlane.xlu0 %977
        %979 = vadd.xlane.f32.xlu0 %v941
        %v980 = vpop.xlane.xlu0 %979
        %981 = vadd.xlane.f32.xlu0 %v942
        %v982 = vpop.xlane.xlu0 %981
        %983 = vadd.xlane.f32.xlu0 %v943
        %v984 = vpop.xlane.xlu0 %983
        %985 = vadd.xlane.f32.xlu0 %v944
        %v986 = vpop.xlane.xlu0 %985
        %987 = vadd.xlane.f32.xlu0 %v945
        %v988 = vpop.xlane.xlu0 %987
        %989 = vadd.xlane.f32.xlu0 %v946
        %v990 = vpop.xlane.xlu0 %989
        %991 = vadd.xlane.f32.xlu0 %v947
        %v992 = vpop.xlane.xlu0 %991
        %993 = vadd.xlane.f32.xlu0 %v948
        %v994 = vpop.xlane.xlu0 %993
        %995 = vadd.xlane.f32.xlu0 %v949
        %v996 = vpop.xlane.xlu0 %995
        %997 = vadd.xlane.f32.xlu0 %v950
        %v998 = vpop.xlane.xlu0 %997
        %999 = vadd.xlane.f32.xlu0 %v951
        %v1000 = vpop.xlane.xlu0 %999
        %1001 = vadd.xlane.f32.xlu0 %v952
        %v1002 = vpop.xlane.xlu0 %1001
        %v1003 = vrcp.pop 128.0
        %v1004 = vmul.f32 128.0, %v1003
        %v1005 = vsub.f32 1.0, %v1004
        %v1006 = vmul.f32 %v1003, %v1005
        %v1007 = vadd.f32 %v1003, %v1006
        %vm1008 = vweird.f32 %v1003
        %v1009 = vsel %vm1008, %v1003, %v1007
        %v1010 = vmul.f32 %v972, %v1009
        %v1011 = vmul.f32 %v974, %v1009
        %v1012 = vmul.f32 %v976, %v1009
        %v1013 = vmul.f32 %v978, %v1009
        %v1014 = vmul.f32 %v980, %v1009
        %v1015 = vmul.f32 %v982, %v1009
        %v1016 = vmul.f32 %v984, %v1009
        %v1017 = vmul.f32 %v986, %v1009
        %v1018 = vmul.f32 %v988, %v1009
        %v1019 = vmul.f32 %v990, %v1009
        %v1020 = vmul.f32 %v992, %v1009
        %v1021 = vmul.f32 %v994, %v1009
        %v1022 = vmul.f32 %v996, %v1009
        %v1023 = vmul.f32 %v998, %v1009
        %v1024 = vmul.f32 %v1000, %v1009
        %v1025 = vmul.f32 %v1002, %v1009
        %v1026 = vsub.f32 %v937, %v1010
        %v1027 = vsub.f32 %v938, %v1011
        %v1028 = vsub.f32 %v939, %v1012
        %v1029 = vsub.f32 %v940, %v1013
        %v1030 = vsub.f32 %v941, %v1014
        %v1031 = vsub.f32 %v942, %v1015
        %v1032 = vsub.f32 %v943, %v1016
        %v1033 = vsub.f32 %v944, %v1017
        %v1034 = vsub.f32 %v945, %v1018
        %v1035 = vsub.f32 %v946, %v1019
        %v1036 = vsub.f32 %v947, %v1020
        %v1037 = vsub.f32 %v948, %v1021
        %v1038 = vsub.f32 %v949, %v1022
        %v1039 = vsub.f32 %v950, %v1023
        %v1040 = vsub.f32 %v951, %v1024
        %v1041 = vsub.f32 %v952, %v1025
        %v1042 = vmul.f32 %v1026, %v1026
        %v1043 = vmul.f32 %v1027, %v1027
        %v1044 = vmul.f32 %v1028, %v1028
        %v1045 = vmul.f32 %v1029, %v1029
        %v1046 = vmul.f32 %v1030, %v1030
        %v1047 = vmul.f32 %v1031, %v1031
        %v1048 = vmul.f32 %v1032, %v1032
        %v1049 = vmul.f32 %v1033, %v1033
        %v1050 = vmul.f32 %v1034, %v1034
        %v1051 = vmul.f32 %v1035, %v1035
        %v1052 = vmul.f32 %v1036, %v1036
        %v1053 = vmul.f32 %v1037, %v1037
        %v1054 = vmul.f32 %v1038, %v1038
        %v1055 = vmul.f32 %v1039, %v1039
        %v1056 = vmul.f32 %v1040, %v1040
        %v1057 = vmul.f32 %v1041, %v1041
        %1058 = vadd.xlane.f32.xlu0 %v1042
        %v1059 = vpop.xlane.xlu0 %1058
        %1060 = vadd.xlane.f32.xlu0 %v1043
        %v1061 = vpop.xlane.xlu0 %1060
        %1062 = vadd.xlane.f32.xlu0 %v1044
        %v1063 = vpop.xlane.xlu0 %1062
        %1064 = vadd.xlane.f32.xlu0 %v1045
        %v1065 = vpop.xlane.xlu0 %1064
        %1066 = vadd.xlane.f32.xlu0 %v1046
        %v1067 = vpop.xlane.xlu0 %1066
        %1068 = vadd.xlane.f32.xlu0 %v1047
        %v1069 = vpop.xlane.xlu0 %1068
        %1070 = vadd.xlane.f32.xlu0 %v1048
        %v1071 = vpop.xlane.xlu0 %1070
        %1072 = vadd.xlane.f32.xlu0 %v1049
        %v1073 = vpop.xlane.xlu0 %1072
        %1074 = vadd.xlane.f32.xlu0 %v1050
        %v1075 = vpop.xlane.xlu0 %1074
        %1076 = vadd.xlane.f32.xlu0 %v1051
        %v1077 = vpop.xlane.xlu0 %1076
        %1078 = vadd.xlane.f32.xlu0 %v1052
        %v1079 = vpop.xlane.xlu0 %1078
        %1080 = vadd.xlane.f32.xlu0 %v1053
        %v1081 = vpop.xlane.xlu0 %1080
        %1082 = vadd.xlane.f32.xlu0 %v1054
        %v1083 = vpop.xlane.xlu0 %1082
        %1084 = vadd.xlane.f32.xlu0 %v1055
        %v1085 = vpop.xlane.xlu0 %1084
        %1086 = vadd.xlane.f32.xlu0 %v1056
        %v1087 = vpop.xlane.xlu0 %1086
        %1088 = vadd.xlane.f32.xlu0 %v1057
        %v1089 = vpop.xlane.xlu0 %1088
        %v1090 = vmul.f32 %v1059, %v1009
        %v1091 = vmul.f32 %v1061, %v1009
        %v1092 = vmul.f32 %v1063, %v1009
        %v1093 = vmul.f32 %v1065, %v1009
        %v1094 = vmul.f32 %v1067, %v1009
        %v1095 = vmul.f32 %v1069, %v1009
        %v1096 = vmul.f32 %v1071, %v1009
        %v1097 = vmul.f32 %v1073, %v1009
        %v1098 = vmul.f32 %v1075, %v1009
        %v1099 = vmul.f32 %v1077, %v1009
        %v1100 = vmul.f32 %v1079, %v1009
        %v1101 = vmul.f32 %v1081, %v1009
        %v1102 = vmul.f32 %v1083, %v1009
        %v1103 = vmul.f32 %v1085, %v1009
        %v1104 = vmul.f32 %v1087, %v1009
        %v1105 = vmul.f32 %v1089, %v1009
        %v1106 = vadd.f32 %v1090, 1e-05
        %v1107 = vadd.f32 %v1091, 1e-05
        %v1108 = vadd.f32 %v1092, 1e-05
        %v1109 = vadd.f32 %v1093, 1e-05
        %v1110 = vadd.f32 %v1094, 1e-05
        %v1111 = vadd.f32 %v1095, 1e-05
        %v1112 = vadd.f32 %v1096, 1e-05
        %v1113 = vadd.f32 %v1097, 1e-05
        %v1114 = vadd.f32 %v1098, 1e-05
        %v1115 = vadd.f32 %v1099, 1e-05
        %v1116 = vadd.f32 %v1100, 1e-05
        %v1117 = vadd.f32 %v1101, 1e-05
        %v1118 = vadd.f32 %v1102, 1e-05
        %v1119 = vadd.f32 %v1103, 1e-05
        %v1120 = vadd.f32 %v1104, 1e-05
        %v1121 = vadd.f32 %v1105, 1e-05
        %v1122 = vrsqrt.pop %v1106
        %v1123 = vmul.f32 %v1122, %v1106
        %v1124 = vmul.f32 %v1123, %v1122
        %v1125 = vmul.f32 0.5, %v1124
        %v1126 = vsub.f32 1.5, %v1125
        %v1127 = vmul.f32 %v1122, %v1126
        %vm1128 = vweird.f32 %v1106
        %vm1129 = vweird.f32 %v1122
        %vm1130 = vmor %vm1128, %vm1129
        %v1131 = vsel %vm1130, %v1122, %v1127
        %v1132 = vrsqrt.pop %v1107
        %v1133 = vmul.f32 %v1132, %v1107
        %v1134 = vmul.f32 %v1133, %v1132
        %v1135 = vmul.f32 0.5, %v1134
        %v1136 = vsub.f32 1.5, %v1135
        %v1137 = vmul.f32 %v1132, %v1136
        %vm1138 = vweird.f32 %v1107
        %vm1139 = vweird.f32 %v1132
        %vm1140 = vmor %vm1138, %vm1139
        %v1141 = vsel %vm1140, %v1132, %v1137
        %v1142 = vrsqrt.pop %v1108
        %v1143 = vmul.f32 %v1142, %v1108
        %v1144 = vmul.f32 %v1143, %v1142
        %v1145 = vmul.f32 0.5, %v1144
        %v1146 = vsub.f32 1.5, %v1145
        %v1147 = vmul.f32 %v1142, %v1146
        %vm1148 = vweird.f32 %v1108
        %vm1149 = vweird.f32 %v1142
        %vm1150 = vmor %vm1148, %vm1149
        %v1151 = vsel %vm1150, %v1142, %v1147
        %v1152 = vrsqrt.pop %v1109
        %v1153 = vmul.f32 %v1152, %v1109
        %v1154 = vmul.f32 %v1153, %v1152
        %v1155 = vmul.f32 0.5, %v1154
        %v1156 = vsub.f32 1.5, %v1155
        %v1157 = vmul.f32 %v1152, %v1156
        %vm1158 = vweird.f32 %v1109
        %vm1159 = vweird.f32 %v1152
        %vm1160 = vmor %vm1158, %vm1159
        %v1161 = vsel %vm1160, %v1152, %v1157
        %v1162 = vrsqrt.pop %v1110
        %v1163 = vmul.f32 %v1162, %v1110
        %v1164 = vmul.f32 %v1163, %v1162
        %v1165 = vmul.f32 0.5, %v1164
        %v1166 = vsub.f32 1.5, %v1165
        %v1167 = vmul.f32 %v1162, %v1166
        %vm1168 = vweird.f32 %v1110
        %vm1169 = vweird.f32 %v1162
        %vm1170 = vmor %vm1168, %vm1169
        %v1171 = vsel %vm1170, %v1162, %v1167
        %v1172 = vrsqrt.pop %v1111
        %v1173 = vmul.f32 %v1172, %v1111
        %v1174 = vmul.f32 %v1173, %v1172
        %v1175 = vmul.f32 0.5, %v1174
        %v1176 = vsub.f32 1.5, %v1175
        %v1177 = vmul.f32 %v1172, %v1176
        %vm1178 = vweird.f32 %v1111
        %vm1179 = vweird.f32 %v1172
        %vm1180 = vmor %vm1178, %vm1179
        %v1181 = vsel %vm1180, %v1172, %v1177
        %v1182 = vrsqrt.pop %v1112
        %v1183 = vmul.f32 %v1182, %v1112
        %v1184 = vmul.f32 %v1183, %v1182
        %v1185 = vmul.f32 0.5, %v1184
        %v1186 = vsub.f32 1.5, %v1185
        %v1187 = vmul.f32 %v1182, %v1186
        %vm1188 = vweird.f32 %v1112
        %vm1189 = vweird.f32 %v1182
        %vm1190 = vmor %vm1188, %vm1189
        %v1191 = vsel %vm1190, %v1182, %v1187
        %v1192 = vrsqrt.pop %v1113
        %v1193 = vmul.f32 %v1192, %v1113
        %v1194 = vmul.f32 %v1193, %v1192
        %v1195 = vmul.f32 0.5, %v1194
        %v1196 = vsub.f32 1.5, %v1195
        %v1197 = vmul.f32 %v1192, %v1196
        %vm1198 = vweird.f32 %v1113
        %vm1199 = vweird.f32 %v1192
        %vm1200 = vmor %vm1198, %vm1199
        %v1201 = vsel %vm1200, %v1192, %v1197
        %v1202 = vrsqrt.pop %v1114
        %v1203 = vmul.f32 %v1202, %v1114
        %v1204 = vmul.f32 %v1203, %v1202
        %v1205 = vmul.f32 0.5, %v1204
        %v1206 = vsub.f32 1.5, %v1205
        %v1207 = vmul.f32 %v1202, %v1206
        %vm1208 = vweird.f32 %v1114
        %vm1209 = vweird.f32 %v1202
        %vm1210 = vmor %vm1208, %vm1209
        %v1211 = vsel %vm1210, %v1202, %v1207
        %v1212 = vrsqrt.pop %v1115
        %v1213 = vmul.f32 %v1212, %v1115
        %v1214 = vmul.f32 %v1213, %v1212
        %v1215 = vmul.f32 0.5, %v1214
        %v1216 = vsub.f32 1.5, %v1215
        %v1217 = vmul.f32 %v1212, %v1216
        %vm1218 = vweird.f32 %v1115
        %vm1219 = vweird.f32 %v1212
        %vm1220 = vmor %vm1218, %vm1219
        %v1221 = vsel %vm1220, %v1212, %v1217
        %v1222 = vrsqrt.pop %v1116
        %v1223 = vmul.f32 %v1222, %v1116
        %v1224 = vmul.f32 %v1223, %v1222
        %v1225 = vmul.f32 0.5, %v1224
        %v1226 = vsub.f32 1.5, %v1225
        %v1227 = vmul.f32 %v1222, %v1226
        %vm1228 = vweird.f32 %v1116
        %vm1229 = vweird.f32 %v1222
        %vm1230 = vmor %vm1228, %vm1229
        %v1231 = vsel %vm1230, %v1222, %v1227
        %v1232 = vrsqrt.pop %v1117
        %v1233 = vmul.f32 %v1232, %v1117
        %v1234 = vmul.f32 %v1233, %v1232
        %v1235 = vmul.f32 0.5, %v1234
        %v1236 = vsub.f32 1.5, %v1235
        %v1237 = vmul.f32 %v1232, %v1236
        %vm1238 = vweird.f32 %v1117
        %vm1239 = vweird.f32 %v1232
        %vm1240 = vmor %vm1238, %vm1239
        %v1241 = vsel %vm1240, %v1232, %v1237
        %v1242 = vrsqrt.pop %v1118
        %v1243 = vmul.f32 %v1242, %v1118
        %v1244 = vmul.f32 %v1243, %v1242
        %v1245 = vmul.f32 0.5, %v1244
        %v1246 = vsub.f32 1.5, %v1245
        %v1247 = vmul.f32 %v1242, %v1246
        %vm1248 = vweird.f32 %v1118
        %vm1249 = vweird.f32 %v1242
        %vm1250 = vmor %vm1248, %vm1249
        %v1251 = vsel %vm1250, %v1242, %v1247
        %v1252 = vrsqrt.pop %v1119
        %v1253 = vmul.f32 %v1252, %v1119
        %v1254 = vmul.f32 %v1253, %v1252
        %v1255 = vmul.f32 0.5, %v1254
        %v1256 = vsub.f32 1.5, %v1255
        %v1257 = vmul.f32 %v1252, %v1256
        %vm1258 = vweird.f32 %v1119
        %vm1259 = vweird.f32 %v1252
        %vm1260 = vmor %vm1258, %vm1259
        %v1261 = vsel %vm1260, %v1252, %v1257
        %v1262 = vrsqrt.pop %v1120
        %v1263 = vmul.f32 %v1262, %v1120
        %v1264 = vmul.f32 %v1263, %v1262
        %v1265 = vmul.f32 0.5, %v1264
        %v1266 = vsub.f32 1.5, %v1265
        %v1267 = vmul.f32 %v1262, %v1266
        %vm1268 = vweird.f32 %v1120
        %vm1269 = vweird.f32 %v1262
        %vm1270 = vmor %vm1268, %vm1269
        %v1271 = vsel %vm1270, %v1262, %v1267
        %v1272 = vrsqrt.pop %v1121
        %v1273 = vmul.f32 %v1272, %v1121
        %v1274 = vmul.f32 %v1273, %v1272
        %v1275 = vmul.f32 0.5, %v1274
        %v1276 = vsub.f32 1.5, %v1275
        %v1277 = vmul.f32 %v1272, %v1276
        %vm1278 = vweird.f32 %v1121
        %vm1279 = vweird.f32 %v1272
        %vm1280 = vmor %vm1278, %vm1279
        %v1281 = vsel %vm1280, %v1272, %v1277
        %v1282 = vmul.f32 %v1026, %v1131
        %v1283 = vmul.f32 %v1027, %v1141
        %v1284 = vmul.f32 %v1028, %v1151
        %v1285 = vmul.f32 %v1029, %v1161
        %v1286 = vmul.f32 %v1030, %v1171
        %v1287 = vmul.f32 %v1031, %v1181
        %v1288 = vmul.f32 %v1032, %v1191
        %v1289 = vmul.f32 %v1033, %v1201
        %v1290 = vmul.f32 %v1034, %v1211
        %v1291 = vmul.f32 %v1035, %v1221
        %v1292 = vmul.f32 %v1036, %v1231
        %v1293 = vmul.f32 %v1037, %v1241
        %v1294 = vmul.f32 %v1038, %v1251
        %v1295 = vmul.f32 %v1039, %v1261
        %v1296 = vmul.f32 %v1040, %v1271
        %v1297 = vmul.f32 %v1041, %v1281
        %v1299 = vperm.slane %v969, 0
        %v1301 = vmul.f32 %v1282, %v1299
        %v1302 = vmul.f32 %v1283, %v1299
        %v1303 = vmul.f32 %v1284, %v1299
        %v1304 = vmul.f32 %v1285, %v1299
        %v1305 = vmul.f32 %v1286, %v1299
        %v1306 = vmul.f32 %v1287, %v1299
        %v1307 = vmul.f32 %v1288, %v1299
        %v1308 = vmul.f32 %v1289, %v1299
        %v1309 = vmul.f32 %v1290, %v1299
        %v1310 = vmul.f32 %v1291, %v1299
        %v1311 = vmul.f32 %v1292, %v1299
        %v1312 = vmul.f32 %v1293, %v1299
        %v1313 = vmul.f32 %v1294, %v1299
        %v1314 = vmul.f32 %v1295, %v1299
        %v1315 = vmul.f32 %v1296, %v1299
        %v1316 = vmul.f32 %v1297, %v1299
        %v1318 = vperm.slane %v970, 0
        %v1320 = vadd.f32 %v1301, %v1318
        %v1321 = vadd.f32 %v1302, %v1318
        %v1322 = vadd.f32 %v1303, %v1318
        %v1323 = vadd.f32 %v1304, %v1318
        %v1324 = vadd.f32 %v1305, %v1318
        %v1325 = vadd.f32 %v1306, %v1318
        %v1326 = vadd.f32 %v1307, %v1318
        %v1327 = vadd.f32 %v1308, %v1318
        %v1328 = vadd.f32 %v1309, %v1318
        %v1329 = vadd.f32 %v1310, %v1318
        %v1330 = vadd.f32 %v1311, %v1318
        %v1331 = vadd.f32 %v1312, %v1318
        %v1332 = vadd.f32 %v1313, %v1318
        %v1333 = vadd.f32 %v1314, %v1318
        %v1334 = vadd.f32 %v1315, %v1318
        %v1335 = vadd.f32 %v1316, %v1318
        %v1336 = vpack.c.bf16 %v1321, %v1320
        %v1337 = vpack.c.bf16 %v1323, %v1322
        %v1338 = vpack.c.bf16 %v1325, %v1324
        %v1339 = vpack.c.bf16 %v1327, %v1326
        %v1340 = vpack.c.bf16 %v1329, %v1328
        %v1341 = vpack.c.bf16 %v1331, %v1330
        %v1342 = vpack.c.bf16 %v1333, %v1332
        %v1343 = vpack.c.bf16 %v1335, %v1334
        %v1344 = vld [vmem:[%s729] sm:$0xff]
        %v1345 = vld [vmem:[%s729 + $0x8] sm:$0xf]
        %v1346 = vld [vmem:[%s729 + $0xc] sm:$0xff]
        %v1347 = vld [vmem:[%s729 + $0x14] sm:$0xf]
        %v1348 = vld [vmem:[%s729 + $0x18] sm:$0xff]
        %v1349 = vld [vmem:[%s729 + $0x20] sm:$0xf]
        %v1350 = vld [vmem:[%s729 + $0x24] sm:$0xff]
        %v1351 = vld [vmem:[%s729 + $0x2c] sm:$0xf]
        %v1352 = vld [vmem:[%s729 + $0x30] sm:$0xff]
        %v1353 = vld [vmem:[%s729 + $0x38] sm:$0xf]
        %v1354 = vld [vmem:[%s729 + $0x3c] sm:$0xff]
        %v1355 = vld [vmem:[%s729 + $0x44] sm:$0xf]
        %v1356 = vld [vmem:[%s729 + $0x48] sm:$0xff]
        %v1357 = vld [vmem:[%s729 + $0x50] sm:$0xf]
        %v1358 = vld [vmem:[%s729 + $0x54] sm:$0xff]
        %v1359 = vld [vmem:[%s729 + $0x5c] sm:$0xf]
        %v1360 = vld [vmem:[%s729 + $0x60] sm:$0xff]
        %v1361 = vld [vmem:[%s729 + $0x68] sm:$0xf]
        %v1362 = vld [vmem:[%s729 + $0x6c] sm:$0xff]
        %v1363 = vld [vmem:[%s729 + $0x74] sm:$0xf]
        %v1364 = vld [vmem:[%s729 + $0x78] sm:$0xff]
        %v1365 = vld [vmem:[%s729 + $0x80] sm:$0xf]
        %v1366 = vld [vmem:[%s729 + $0x84] sm:$0xff]
        %v1367 = vld [vmem:[%s729 + $0x8c] sm:$0xf]
        %v1368 = vld [vmem:[%s729 + $0x90] sm:$0xff]
        %v1369 = vld [vmem:[%s729 + $0x98] sm:$0xf]
        %v1370 = vld [vmem:[%s729 + $0x9c] sm:$0xff]
        %v1371 = vld [vmem:[%s729 + $0xa4] sm:$0xf]
        %v1372 = vld [vmem:[%s729 + $0xa8] sm:$0xff]
        %v1373 = vld [vmem:[%s729 + $0xb0] sm:$0xf]
        %v1374 = vld [vmem:[%s729 + $0xb4] sm:$0xff]
        %v1375 = vld [vmem:[%s729 + $0xbc] sm:$0xf]
        %v1376 = vld [vmem:[%s739] sm:$0x7]
        %v1378 = vperm.slane %v1376, 0
        %v1379 = vperm.slane %v1376, 1
        %v1380 = vperm.slane %v1376, 2
        %v1416 = vunpack.c.l.b16 %v1344
        %v1417 = vunpack.c.h.b16 %v1344
        %v1418 = vunpack.c.l.b16 %v1345
        %v1419 = vunpack.c.l.b16 %v1346
        %v1420 = vunpack.c.h.b16 %v1346
        %v1421 = vunpack.c.l.b16 %v1347
        %v1422 = vunpack.c.l.b16 %v1348
        %v1423 = vunpack.c.h.b16 %v1348
        %v1424 = vunpack.c.l.b16 %v1349
        %v1425 = vunpack.c.l.b16 %v1350
        %v1426 = vunpack.c.h.b16 %v1350
        %v1427 = vunpack.c.l.b16 %v1351
        %v1428 = vunpack.c.l.b16 %v1352
        %v1429 = vunpack.c.h.b16 %v1352
        %v1430 = vunpack.c.l.b16 %v1353
        %v1431 = vunpack.c.l.b16 %v1354
        %v1432 = vunpack.c.h.b16 %v1354
        %v1433 = vunpack.c.l.b16 %v1355
        %v1434 = vunpack.c.l.b16 %v1356
        %v1435 = vunpack.c.h.b16 %v1356
        %v1436 = vunpack.c.l.b16 %v1357
        %v1437 = vunpack.c.l.b16 %v1358
        %v1438 = vunpack.c.h.b16 %v1358
        %v1439 = vunpack.c.l.b16 %v1359
        %v1440 = vunpack.c.l.b16 %v1360
        %v1441 = vunpack.c.h.b16 %v1360
        %v1442 = vunpack.c.l.b16 %v1361
        %v1443 = vunpack.c.l.b16 %v1362
        %v1444 = vunpack.c.h.b16 %v1362
        %v1445 = vunpack.c.l.b16 %v1363
        %v1446 = vunpack.c.l.b16 %v1364
        %v1447 = vunpack.c.h.b16 %v1364
        %v1448 = vunpack.c.l.b16 %v1365
        %v1449 = vunpack.c.l.b16 %v1366
        %v1450 = vunpack.c.h.b16 %v1366
        %v1451 = vunpack.c.l.b16 %v1367
        %v1452 = vunpack.c.l.b16 %v1368
        %v1453 = vunpack.c.h.b16 %v1368
        %v1454 = vunpack.c.l.b16 %v1369
        %v1455 = vunpack.c.l.b16 %v1370
        %v1456 = vunpack.c.h.b16 %v1370
        %v1457 = vunpack.c.l.b16 %v1371
        %v1458 = vunpack.c.l.b16 %v1372
        %v1459 = vunpack.c.h.b16 %v1372
        %v1460 = vunpack.c.l.b16 %v1373
        %v1461 = vunpack.c.l.b16 %v1374
        %v1462 = vunpack.c.h.b16 %v1374
        %v1463 = vunpack.c.l.b16 %v1375
        %v1464 = vpack.c.b16 %v1419, %v1416
        %v1465 = vpack.c.b16 %v1420, %v1417
        %v1466 = vpack.c.b16 %v1421, %v1418
        %v1467 = vpack.c.b16 %v1425, %v1422
        %v1468 = vpack.c.b16 %v1426, %v1423
        %v1469 = vpack.c.b16 %v1427, %v1424
        %v1470 = vpack.c.b16 %v1431, %v1428
        %v1471 = vpack.c.b16 %v1432, %v1429
        %v1472 = vpack.c.b16 %v1433, %v1430
        %v1473 = vpack.c.b16 %v1437, %v1434
        %v1474 = vpack.c.b16 %v1438, %v1435
        %v1475 = vpack.c.b16 %v1439, %v1436
        %v1476 = vpack.c.b16 %v1443, %v1440
        %v1477 = vpack.c.b16 %v1444, %v1441
        %v1478 = vpack.c.b16 %v1445, %v1442
        %v1479 = vpack.c.b16 %v1449, %v1446
        %v1480 = vpack.c.b16 %v1450, %v1447
        %v1481 = vpack.c.b16 %v1451, %v1448
        %v1482 = vpack.c.b16 %v1455, %v1452
        %v1483 = vpack.c.b16 %v1456, %v1453
        %v1484 = vpack.c.b16 %v1457, %v1454
        %v1485 = vpack.c.b16 %v1461, %v1458
        %v1486 = vpack.c.b16 %v1462, %v1459
        %v1487 = vpack.c.b16 %v1463, %v1460
        %1512 = vmatpush.bf16.msra.mxu0 %v1485
        %1513 = vmatpush.bf16.msra.mxu0 %v1482
        %1514 = vmatpush.bf16.msra.mxu0 %v1479
        %1515 = vmatpush.bf16.msra.mxu0 %v1476
        %1516 = vmatpush.bf16.msra.mxu0 %v1473
        %1517 = vmatpush.bf16.msra.mxu0 %v1470
        %1518 = vmatpush.bf16.msra.mxu0 %v1467
        %1519 = vmatpush.bf16.msra.mxu0 %v1464
        %1520 = vmatmul.bf16.gmra.mxu0 %v1336
        %v1521 = vpop.f32.mrf.mxu0
        %v1522 = vadd.f32 %v1378, %v1521
        %v1523 = vpop.f32.mrf.mxu0
        %v1524 = vadd.f32 %v1378, %v1523
        %1525 = vmatmul.bf16.gmra.mxu0 %v1337
        %v1526 = vpop.f32.mrf.mxu0
        %v1527 = vadd.f32 %v1378, %v1526
        %v1528 = vpop.f32.mrf.mxu0
        %v1529 = vadd.f32 %v1378, %v1528
        %1530 = vmatmul.bf16.gmra.mxu0 %v1338
        %v1531 = vpop.f32.mrf.mxu0
        %v1532 = vadd.f32 %v1378, %v1531
        %v1533 = vpop.f32.mrf.mxu0
        %v1534 = vadd.f32 %v1378, %v1533
        %1535 = vmatmul.bf16.gmra.mxu0 %v1339
        %v1536 = vpop.f32.mrf.mxu0
        %v1537 = vadd.f32 %v1378, %v1536
        %v1538 = vpop.f32.mrf.mxu0
        %v1539 = vadd.f32 %v1378, %v1538
        %1540 = vmatmul.bf16.gmra.mxu0 %v1340
        %v1541 = vpop.f32.mrf.mxu0
        %v1542 = vadd.f32 %v1378, %v1541
        %v1543 = vpop.f32.mrf.mxu0
        %v1544 = vadd.f32 %v1378, %v1543
        %1545 = vmatmul.bf16.gmra.mxu0 %v1341
        %v1546 = vpop.f32.mrf.mxu0
        %v1547 = vadd.f32 %v1378, %v1546
        %v1548 = vpop.f32.mrf.mxu0
        %v1549 = vadd.f32 %v1378, %v1548
        %1550 = vmatmul.bf16.gmra.mxu0 %v1342
        %v1551 = vpop.f32.mrf.mxu0
        %v1552 = vadd.f32 %v1378, %v1551
        %v1553 = vpop.f32.mrf.mxu0
        %v1554 = vadd.f32 %v1378, %v1553
        %1555 = vmatmul.bf16.gmra.mxu0 %v1343
        %v1556 = vpop.f32.mrf.mxu0
        %v1557 = vadd.f32 %v1378, %v1556
        %v1558 = vpop.f32.mrf.mxu0
        %v1559 = vadd.f32 %v1378, %v1558
        %1560 = vdwg.mxu0
        %1561 = vmatpush.bf16.msra.mxu0 %v1486
        %1562 = vmatpush.bf16.msra.mxu0 %v1483
        %1563 = vmatpush.bf16.msra.mxu0 %v1480
        %1564 = vmatpush.bf16.msra.mxu0 %v1477
        %1565 = vmatpush.bf16.msra.mxu0 %v1474
        %1566 = vmatpush.bf16.msra.mxu0 %v1471
        %1567 = vmatpush.bf16.msra.mxu0 %v1468
        %1568 = vmatpush.bf16.msra.mxu0 %v1465
        %1569 = vmatmul.bf16.gmra.mxu0 %v1336
        %v1570 = vpop.f32.mrf.mxu0
        %v1571 = vadd.f32 %v1379, %v1570
        %v1572 = vpop.f32.mrf.mxu0
        %v1573 = vadd.f32 %v1379, %v1572
        %1574 = vmatmul.bf16.gmra.mxu0 %v1337
        %v1575 = vpop.f32.mrf.mxu0
        %v1576 = vadd.f32 %v1379, %v1575
        %v1577 = vpop.f32.mrf.mxu0
        %v1578 = vadd.f32 %v1379, %v1577
        %1579 = vmatmul.bf16.gmra.mxu0 %v1338
        %v1580 = vpop.f32.mrf.mxu0
        %v1581 = vadd.f32 %v1379, %v1580
        %v1582 = vpop.f32.mrf.mxu0
        %v1583 = vadd.f32 %v1379, %v1582
        %1584 = vmatmul.bf16.gmra.mxu0 %v1339
        %v1585 = vpop.f32.mrf.mxu0
        %v1586 = vadd.f32 %v1379, %v1585
        %v1587 = vpop.f32.mrf.mxu0
        %v1588 = vadd.f32 %v1379, %v1587
        %1589 = vmatmul.bf16.gmra.mxu0 %v1340
        %v1590 = vpop.f32.mrf.mxu0
        %v1591 = vadd.f32 %v1379, %v1590
        %v1592 = vpop.f32.mrf.mxu0
        %v1593 = vadd.f32 %v1379, %v1592
        %1594 = vmatmul.bf16.gmra.mxu0 %v1341
        %v1595 = vpop.f32.mrf.mxu0
        %v1596 = vadd.f32 %v1379, %v1595
        %v1597 = vpop.f32.mrf.mxu0
        %v1598 = vadd.f32 %v1379, %v1597
        %1599 = vmatmul.bf16.gmra.mxu0 %v1342
        %v1600 = vpop.f32.mrf.mxu0
        %v1601 = vadd.f32 %v1379, %v1600
        %v1602 = vpop.f32.mrf.mxu0
        %v1603 = vadd.f32 %v1379, %v1602
        %1604 = vmatmul.bf16.gmra.mxu0 %v1343
        %v1605 = vpop.f32.mrf.mxu0
        %v1606 = vadd.f32 %v1379, %v1605
        %v1607 = vpop.f32.mrf.mxu0
        %v1608 = vadd.f32 %v1379, %v1607
        %1609 = vdwg.mxu0
        %1610 = vmatpush.bf16.msra.mxu0 %v1487
        %1611 = vmatpush.bf16.msra.mxu0 %v1484
        %1612 = vmatpush.bf16.msra.mxu0 %v1481
        %1613 = vmatpush.bf16.msra.mxu0 %v1478
        %1614 = vmatpush.bf16.msra.mxu0 %v1475
        %1615 = vmatpush.bf16.msra.mxu0 %v1472
        %1616 = vmatpush.bf16.msra.mxu0 %v1469
        %1617 = vmatpush.bf16.msra.mxu0 %v1466
        %1618 = vmatmul.bf16.gmra.mxu0 %v1336
        %v1619 = vpop.f32.mrf.mxu0
        %v1620 = vadd.f32 %v1380, %v1619
        %v1621 = vpop.f32.mrf.mxu0
        %v1622 = vadd.f32 %v1380, %v1621
        %1623 = vmatmul.bf16.gmra.mxu0 %v1337
        %v1624 = vpop.f32.mrf.mxu0
        %v1625 = vadd.f32 %v1380, %v1624
        %v1626 = vpop.f32.mrf.mxu0
        %v1627 = vadd.f32 %v1380, %v1626
        %1628 = vmatmul.bf16.gmra.mxu0 %v1338
        %v1629 = vpop.f32.mrf.mxu0
        %v1630 = vadd.f32 %v1380, %v1629
        %v1631 = vpop.f32.mrf.mxu0
        %v1632 = vadd.f32 %v1380, %v1631
        %1633 = vmatmul.bf16.gmra.mxu0 %v1339
        %v1634 = vpop.f32.mrf.mxu0
        %v1635 = vadd.f32 %v1380, %v1634
        %v1636 = vpop.f32.mrf.mxu0
        %v1637 = vadd.f32 %v1380, %v1636
        %1638 = vmatmul.bf16.gmra.mxu0 %v1340
        %v1639 = vpop.f32.mrf.mxu0
        %v1640 = vadd.f32 %v1380, %v1639
        %v1641 = vpop.f32.mrf.mxu0
        %v1642 = vadd.f32 %v1380, %v1641
        %1643 = vmatmul.bf16.gmra.mxu0 %v1341
        %v1644 = vpop.f32.mrf.mxu0
        %v1645 = vadd.f32 %v1380, %v1644
        %v1646 = vpop.f32.mrf.mxu0
        %v1647 = vadd.f32 %v1380, %v1646
        %1648 = vmatmul.bf16.gmra.mxu0 %v1342
        %v1649 = vpop.f32.mrf.mxu0
        %v1650 = vadd.f32 %v1380, %v1649
        %v1651 = vpop.f32.mrf.mxu0
        %v1652 = vadd.f32 %v1380, %v1651
        %1653 = vmatmul.bf16.gmra.mxu0 %v1343
        %v1654 = vpop.f32.mrf.mxu0
        %v1655 = vadd.f32 %v1380, %v1654
        %v1656 = vpop.f32.mrf.mxu0
        %v1657 = vadd.f32 %v1380, %v1656
        %1658 = vdwg.mxu0
        %v1659 = vmul.f32 %v1522, 0.125
        %v1660 = vmul.f32 %v1524, 0.125
        %v1661 = vmul.f32 %v1527, 0.125
        %v1662 = vmul.f32 %v1529, 0.125
        %v1663 = vmul.f32 %v1532, 0.125
        %v1664 = vmul.f32 %v1534, 0.125
        %v1665 = vmul.f32 %v1537, 0.125
        %v1666 = vmul.f32 %v1539, 0.125
        %v1667 = vmul.f32 %v1542, 0.125
        %v1668 = vmul.f32 %v1544, 0.125
        %v1669 = vmul.f32 %v1547, 0.125
        %v1670 = vmul.f32 %v1549, 0.125
        %v1671 = vmul.f32 %v1552, 0.125
        %v1672 = vmul.f32 %v1554, 0.125
        %v1673 = vmul.f32 %v1557, 0.125
        %v1674 = vmul.f32 %v1559, 0.125
        %v1675 = vpack.c.bf16 %v1660, %v1659
        %v1676 = vpack.c.bf16 %v1662, %v1661
        %v1677 = vpack.c.bf16 %v1664, %v1663
        %v1678 = vpack.c.bf16 %v1666, %v1665
        %v1679 = vpack.c.bf16 %v1668, %v1667
        %v1680 = vpack.c.bf16 %v1670, %v1669
        %v1681 = vpack.c.bf16 %v1672, %v1671
        %v1682 = vpack.c.bf16 %v1674, %v1673
        %v1683 = vpack.c.bf16 %v1573, %v1571
        %v1684 = vpack.c.bf16 %v1578, %v1576
        %v1685 = vpack.c.bf16 %v1583, %v1581
        %v1686 = vpack.c.bf16 %v1588, %v1586
        %v1687 = vpack.c.bf16 %v1593, %v1591
        %v1688 = vpack.c.bf16 %v1598, %v1596
        %v1689 = vpack.c.bf16 %v1603, %v1601
        %v1690 = vpack.c.bf16 %v1608, %v1606
        %v1691 = vpack.c.bf16 %v1622, %v1620
        %v1692 = vpack.c.bf16 %v1627, %v1625
        %v1693 = vpack.c.bf16 %v1632, %v1630
        %v1694 = vpack.c.bf16 %v1637, %v1635
        %v1695 = vpack.c.bf16 %v1642, %v1640
        %v1696 = vpack.c.bf16 %v1647, %v1645
        %v1697 = vpack.c.bf16 %v1652, %v1650
        %v1698 = vpack.c.bf16 %v1657, %v1655
        %vm1699 = vcmask 523264
        %v1701 = vsel %vm1699, %v1675, 0
        %v1704 = vsel %vm1699, %v1676, 0
        %v1707 = vsel %vm1699, %v1677, 0
        %v1710 = vsel %vm1699, %v1678, 0
        %v1713 = vsel %vm1699, %v1679, 0
        %v1716 = vsel %vm1699, %v1680, 0
        %v1719 = vsel %vm1699, %v1681, 0
        %v1722 = vsel %vm1699, %v1682, 0
        %v1725 = vsel %vm1699, %v1683, 0
        %v1728 = vsel %vm1699, %v1684, 0
        %v1731 = vsel %vm1699, %v1685, 0
        %v1734 = vsel %vm1699, %v1686, 0
        %v1737 = vsel %vm1699, %v1687, 0
        %v1740 = vsel %vm1699, %v1688, 0
        %v1743 = vsel %vm1699, %v1689, 0
        %v1746 = vsel %vm1699, %v1690, 0
        %1748 = vmatpush.bf16.xpose.msra.mxu0 %v1746
        %1749 = vmatpush.bf16.xpose.msra.mxu0 %v1743
        %1750 = vmatpush.bf16.xpose.msra.mxu0 %v1740
        %1751 = vmatpush.bf16.xpose.msra.mxu0 %v1737
        %1752 = vmatpush.bf16.xpose.msra.mxu0 %v1734
        %1753 = vmatpush.bf16.xpose.msra.mxu0 %v1731
        %1754 = vmatpush.bf16.xpose.msra.mxu0 %v1728
        %1755 = vmatpush.bf16.xpose.msra.mxu0 %v1725
        %1756 = vmatmul.bf16.gmra.mxu0 %v1701
        %v1757 = vpop.f32.mrf.mxu0
        %v1758 = vadd.f32 %v953, %v1757
        %v1759 = vpop.f32.mrf.mxu0
        %v1760 = vadd.f32 %v954, %v1759
        %1761 = vmatmul.bf16.gmra.mxu0 %v1704
        %v1762 = vpop.f32.mrf.mxu0
        %v1763 = vadd.f32 %v955, %v1762
        %v1764 = vpop.f32.mrf.mxu0
        %v1765 = vadd.f32 %v956, %v1764
        %1766 = vmatmul.bf16.gmra.mxu0 %v1707
        %v1767 = vpop.f32.mrf.mxu0
        %v1768 = vadd.f32 %v957, %v1767
        %v1769 = vpop.f32.mrf.mxu0
        %v1770 = vadd.f32 %v958, %v1769
        %1771 = vmatmul.bf16.gmra.mxu0 %v1710
        %v1772 = vpop.f32.mrf.mxu0
        %v1773 = vadd.f32 %v959, %v1772
        %v1774 = vpop.f32.mrf.mxu0
        %v1775 = vadd.f32 %v960, %v1774
        %1776 = vmatmul.bf16.gmra.mxu0 %v1713
        %v1777 = vpop.f32.mrf.mxu0
        %v1778 = vadd.f32 %v961, %v1777
        %v1779 = vpop.f32.mrf.mxu0
        %v1780 = vadd.f32 %v962, %v1779
        %1781 = vmatmul.bf16.gmra.mxu0 %v1716
        %v1782 = vpop.f32.mrf.mxu0
        %v1783 = vadd.f32 %v963, %v1782
        %v1784 = vpop.f32.mrf.mxu0
        %v1785 = vadd.f32 %v964, %v1784
        %1786 = vmatmul.bf16.gmra.mxu0 %v1719
        %v1787 = vpop.f32.mrf.mxu0
        %v1788 = vadd.f32 %v965, %v1787
        %v1789 = vpop.f32.mrf.mxu0
        %v1790 = vadd.f32 %v966, %v1789
        %1791 = vmatmul.bf16.gmra.mxu0 %v1722
        %v1792 = vpop.f32.mrf.mxu0
        %v1793 = vadd.f32 %v967, %v1792
        %v1794 = vpop.f32.mrf.mxu0
        %v1795 = vadd.f32 %v968, %v1794
        %1796 = vdwg.mxu0
        %1797 = vmax.xlane.f32.xlu0 %v1758
        %v1798 = vpop.xlane.xlu0 %1797
        %1799 = vmax.xlane.f32.xlu0 %v1760
        %v1800 = vpop.xlane.xlu0 %1799
        %1801 = vmax.xlane.f32.xlu0 %v1763
        %v1802 = vpop.xlane.xlu0 %1801
        %1803 = vmax.xlane.f32.xlu0 %v1765
        %v1804 = vpop.xlane.xlu0 %1803
        %1805 = vmax.xlane.f32.xlu0 %v1768
        %v1806 = vpop.xlane.xlu0 %1805
        %1807 = vmax.xlane.f32.xlu0 %v1770
        %v1808 = vpop.xlane.xlu0 %1807
        %1809 = vmax.xlane.f32.xlu0 %v1773
        %v1810 = vpop.xlane.xlu0 %1809
        %1811 = vmax.xlane.f32.xlu0 %v1775
        %v1812 = vpop.xlane.xlu0 %1811
        %1813 = vmax.xlane.f32.xlu0 %v1778
        %v1814 = vpop.xlane.xlu0 %1813
        %1815 = vmax.xlane.f32.xlu0 %v1780
        %v1816 = vpop.xlane.xlu0 %1815
        %1817 = vmax.xlane.f32.xlu0 %v1783
        %v1818 = vpop.xlane.xlu0 %1817
        %1819 = vmax.xlane.f32.xlu0 %v1785
        %v1820 = vpop.xlane.xlu0 %1819
        %1821 = vmax.xlane.f32.xlu0 %v1788
        %v1822 = vpop.xlane.xlu0 %1821
        %1823 = vmax.xlane.f32.xlu0 %v1790
        %v1824 = vpop.xlane.xlu0 %1823
        %1825 = vmax.xlane.f32.xlu0 %v1793
        %v1826 = vpop.xlane.xlu0 %1825
        %1827 = vmax.xlane.f32.xlu0 %v1795
        %v1828 = vpop.xlane.xlu0 %1827
        %v1829 = vsub.f32 %v1758, %v1798
        %v1830 = vsub.f32 %v1760, %v1800
        %v1831 = vsub.f32 %v1763, %v1802
        %v1832 = vsub.f32 %v1765, %v1804
        %v1833 = vsub.f32 %v1768, %v1806
        %v1834 = vsub.f32 %v1770, %v1808
        %v1835 = vsub.f32 %v1773, %v1810
        %v1836 = vsub.f32 %v1775, %v1812
        %v1837 = vsub.f32 %v1778, %v1814
        %v1838 = vsub.f32 %v1780, %v1816
        %v1839 = vsub.f32 %v1783, %v1818
        %v1840 = vsub.f32 %v1785, %v1820
        %v1841 = vsub.f32 %v1788, %v1822
        %v1842 = vsub.f32 %v1790, %v1824
        %v1843 = vsub.f32 %v1793, %v1826
        %v1844 = vsub.f32 %v1795, %v1828
        %v1845 = vmul.f32 %v1829, 1.442695
        %v1846 = vpow.pop %v1845
        %v1847 = vmul.f32 %v1830, 1.442695
        %v1848 = vpow.pop %v1847
        %v1849 = vmul.f32 %v1831, 1.442695
        %v1850 = vpow.pop %v1849
        %v1851 = vmul.f32 %v1832, 1.442695
        %v1852 = vpow.pop %v1851
        %v1853 = vmul.f32 %v1833, 1.442695
        %v1854 = vpow.pop %v1853
        %v1855 = vmul.f32 %v1834, 1.442695
        %v1856 = vpow.pop %v1855
        %v1857 = vmul.f32 %v1835, 1.442695
        %v1858 = vpow.pop %v1857
        %v1859 = vmul.f32 %v1836, 1.442695
        %v1860 = vpow.pop %v1859
        %v1861 = vmul.f32 %v1837, 1.442695
        %v1862 = vpow.pop %v1861
        %v1863 = vmul.f32 %v1838, 1.442695
        %v1864 = vpow.pop %v1863
        %v1865 = vmul.f32 %v1839, 1.442695
        %v1866 = vpow.pop %v1865
        %v1867 = vmul.f32 %v1840, 1.442695
        %v1868 = vpow.pop %v1867
        %v1869 = vmul.f32 %v1841, 1.442695
        %v1870 = vpow.pop %v1869
        %v1871 = vmul.f32 %v1842, 1.442695
        %v1872 = vpow.pop %v1871
        %v1873 = vmul.f32 %v1843, 1.442695
        %v1874 = vpow.pop %v1873
        %v1875 = vmul.f32 %v1844, 1.442695
        %v1876 = vpow.pop %v1875
        %1877 = vadd.xlane.f32.xlu0 %v1846
        %v1878 = vpop.xlane.xlu0 %1877
        %1879 = vadd.xlane.f32.xlu0 %v1848
        %v1880 = vpop.xlane.xlu0 %1879
        %1881 = vadd.xlane.f32.xlu0 %v1850
        %v1882 = vpop.xlane.xlu0 %1881
        %1883 = vadd.xlane.f32.xlu0 %v1852
        %v1884 = vpop.xlane.xlu0 %1883
        %1885 = vadd.xlane.f32.xlu0 %v1854
        %v1886 = vpop.xlane.xlu0 %1885
        %1887 = vadd.xlane.f32.xlu0 %v1856
        %v1888 = vpop.xlane.xlu0 %1887
        %1889 = vadd.xlane.f32.xlu0 %v1858
        %v1890 = vpop.xlane.xlu0 %1889
        %1891 = vadd.xlane.f32.xlu0 %v1860
        %v1892 = vpop.xlane.xlu0 %1891
        %1893 = vadd.xlane.f32.xlu0 %v1862
        %v1894 = vpop.xlane.xlu0 %1893
        %1895 = vadd.xlane.f32.xlu0 %v1864
        %v1896 = vpop.xlane.xlu0 %1895
        %1897 = vadd.xlane.f32.xlu0 %v1866
        %v1898 = vpop.xlane.xlu0 %1897
        %1899 = vadd.xlane.f32.xlu0 %v1868
        %v1900 = vpop.xlane.xlu0 %1899
        %1901 = vadd.xlane.f32.xlu0 %v1870
        %v1902 = vpop.xlane.xlu0 %1901
        %1903 = vadd.xlane.f32.xlu0 %v1872
        %v1904 = vpop.xlane.xlu0 %1903
        %1905 = vadd.xlane.f32.xlu0 %v1874
        %v1906 = vpop.xlane.xlu0 %1905
        %1907 = vadd.xlane.f32.xlu0 %v1876
        %v1908 = vpop.xlane.xlu0 %1907
        %v1909 = vrcp.pop %v1878
        %v1910 = vrcp.pop %v1880
        %v1911 = vrcp.pop %v1882
        %v1912 = vrcp.pop %v1884
        %v1913 = vrcp.pop %v1886
        %v1914 = vrcp.pop %v1888
        %v1915 = vrcp.pop %v1890
        %v1916 = vrcp.pop %v1892
        %v1917 = vrcp.pop %v1894
        %v1918 = vrcp.pop %v1896
        %v1919 = vrcp.pop %v1898
        %v1920 = vrcp.pop %v1900
        %v1921 = vrcp.pop %v1902
        %v1922 = vrcp.pop %v1904
        %v1923 = vrcp.pop %v1906
        %v1924 = vrcp.pop %v1908
        %v1925 = vmul.f32 %v1846, %v1909
        %v1926 = vmul.f32 %v1848, %v1910
        %v1927 = vmul.f32 %v1850, %v1911
        %v1928 = vmul.f32 %v1852, %v1912
        %v1929 = vmul.f32 %v1854, %v1913
        %v1930 = vmul.f32 %v1856, %v1914
        %v1931 = vmul.f32 %v1858, %v1915
        %v1932 = vmul.f32 %v1860, %v1916
        %v1933 = vmul.f32 %v1862, %v1917
        %v1934 = vmul.f32 %v1864, %v1918
        %v1935 = vmul.f32 %v1866, %v1919
        %v1936 = vmul.f32 %v1868, %v1920
        %v1937 = vmul.f32 %v1870, %v1921
        %v1938 = vmul.f32 %v1872, %v1922
        %v1939 = vmul.f32 %v1874, %v1923
        %v1940 = vmul.f32 %v1876, %v1924
        %v1941 = vpack.c.bf16 %v1926, %v1925
        %v1942 = vpack.c.bf16 %v1928, %v1927
        %v1943 = vpack.c.bf16 %v1930, %v1929
        %v1944 = vpack.c.bf16 %v1932, %v1931
        %v1945 = vpack.c.bf16 %v1934, %v1933
        %v1946 = vpack.c.bf16 %v1936, %v1935
        %v1947 = vpack.c.bf16 %v1938, %v1937
        %v1948 = vpack.c.bf16 %v1940, %v1939
        %1949 = vmatpush.bf16.msra.mxu0 %v1698
        %1950 = vmatpush.bf16.msra.mxu0 %v1697
        %1951 = vmatpush.bf16.msra.mxu0 %v1696
        %1952 = vmatpush.bf16.msra.mxu0 %v1695
        %1953 = vmatpush.bf16.msra.mxu0 %v1694
        %1954 = vmatpush.bf16.msra.mxu0 %v1693
        %1955 = vmatpush.bf16.msra.mxu0 %v1692
        %1956 = vmatpush.bf16.msra.mxu0 %v1691
        %1957 = vmatmul.bf16.gmra.mxu0 %v1941
        %v1958 = vpop.f32.mrf.mxu0
        %v1959 = vadd.f32 0.0, %v1958
        %v1960 = vpop.f32.mrf.mxu0
        %v1961 = vadd.f32 0.0, %v1960
        %1962 = vmatmul.bf16.gmra.mxu0 %v1942
        %v1963 = vpop.f32.mrf.mxu0
        %v1964 = vadd.f32 0.0, %v1963
        %v1965 = vpop.f32.mrf.mxu0
        %v1966 = vadd.f32 0.0, %v1965
        %1967 = vmatmul.bf16.gmra.mxu0 %v1943
        %v1968 = vpop.f32.mrf.mxu0
        %v1969 = vadd.f32 0.0, %v1968
        %v1970 = vpop.f32.mrf.mxu0
        %v1971 = vadd.f32 0.0, %v1970
        %1972 = vmatmul.bf16.gmra.mxu0 %v1944
        %v1973 = vpop.f32.mrf.mxu0
        %v1974 = vadd.f32 0.0, %v1973
        %v1975 = vpop.f32.mrf.mxu0
        %v1976 = vadd.f32 0.0, %v1975
        %1977 = vmatmul.bf16.gmra.mxu0 %v1945
        %v1978 = vpop.f32.mrf.mxu0
        %v1979 = vadd.f32 0.0, %v1978
        %v1980 = vpop.f32.mrf.mxu0
        %v1981 = vadd.f32 0.0, %v1980
        %1982 = vmatmul.bf16.gmra.mxu0 %v1946
        %v1983 = vpop.f32.mrf.mxu0
        %v1984 = vadd.f32 0.0, %v1983
        %v1985 = vpop.f32.mrf.mxu0
        %v1986 = vadd.f32 0.0, %v1985
        %1987 = vmatmul.bf16.gmra.mxu0 %v1947
        %v1988 = vpop.f32.mrf.mxu0
        %v1989 = vadd.f32 0.0, %v1988
        %v1990 = vpop.f32.mrf.mxu0
        %v1991 = vadd.f32 0.0, %v1990
        %1992 = vmatmul.bf16.gmra.mxu0 %v1948
        %v1993 = vpop.f32.mrf.mxu0
        %v1994 = vadd.f32 0.0, %v1993
        %v1995 = vpop.f32.mrf.mxu0
        %v1996 = vadd.f32 0.0, %v1995
        %1997 = vdwg.mxu0
        %2006 = vrot.lane.b32.xlu0 %v1675, 64
        %v2007 = vpop.permute.xlu0 %2006
        %2008 = vrot.lane.b32.xlu0 %v1676, 64
        %v2009 = vpop.permute.xlu0 %2008
        %2010 = vrot.lane.b32.xlu0 %v1677, 64
        %v2011 = vpop.permute.xlu0 %2010
        %2012 = vrot.lane.b32.xlu0 %v1678, 64
        %v2013 = vpop.permute.xlu0 %2012
        %2014 = vrot.lane.b32.xlu0 %v1679, 64
        %v2015 = vpop.permute.xlu0 %2014
        %2016 = vrot.lane.b32.xlu0 %v1680, 64
        %v2017 = vpop.permute.xlu0 %2016
        %2018 = vrot.lane.b32.xlu0 %v1681, 64
        %v2019 = vpop.permute.xlu0 %2018
        %2020 = vrot.lane.b32.xlu0 %v1682, 64
        %v2021 = vpop.permute.xlu0 %2020
        %2030 = vrot.lane.b32.xlu0 %v1683, 64
        %v2031 = vpop.permute.xlu0 %2030
        %2032 = vrot.lane.b32.xlu0 %v1684, 64
        %v2033 = vpop.permute.xlu0 %2032
        %2034 = vrot.lane.b32.xlu0 %v1685, 64
        %v2035 = vpop.permute.xlu0 %2034
        %2036 = vrot.lane.b32.xlu0 %v1686, 64
        %v2037 = vpop.permute.xlu0 %2036
        %2038 = vrot.lane.b32.xlu0 %v1687, 64
        %v2039 = vpop.permute.xlu0 %2038
        %2040 = vrot.lane.b32.xlu0 %v1688, 64
        %v2041 = vpop.permute.xlu0 %2040
        %2042 = vrot.lane.b32.xlu0 %v1689, 64
        %v2043 = vpop.permute.xlu0 %2042
        %2044 = vrot.lane.b32.xlu0 %v1690, 64
        %v2045 = vpop.permute.xlu0 %2044
        %v2047 = vsel %vm1699, %v2007, 0
        %v2050 = vsel %vm1699, %v2009, 0
        %v2053 = vsel %vm1699, %v2011, 0
        %v2056 = vsel %vm1699, %v2013, 0
        %v2059 = vsel %vm1699, %v2015, 0
        %v2062 = vsel %vm1699, %v2017, 0
        %v2065 = vsel %vm1699, %v2019, 0
        %v2068 = vsel %vm1699, %v2021, 0
        %v2071 = vsel %vm1699, %v2031, 0
        %v2074 = vsel %vm1699, %v2033, 0
        %v2077 = vsel %vm1699, %v2035, 0
        %v2080 = vsel %vm1699, %v2037, 0
        %v2083 = vsel %vm1699, %v2039, 0
        %v2086 = vsel %vm1699, %v2041, 0
        %v2089 = vsel %vm1699, %v2043, 0
        %v2092 = vsel %vm1699, %v2045, 0
        %2094 = vmatpush.bf16.xpose.msra.mxu0 %v2092
        %2095 = vmatpush.bf16.xpose.msra.mxu0 %v2089
        %2096 = vmatpush.bf16.xpose.msra.mxu0 %v2086
        %2097 = vmatpush.bf16.xpose.msra.mxu0 %v2083
        %2098 = vmatpush.bf16.xpose.msra.mxu0 %v2080
        %2099 = vmatpush.bf16.xpose.msra.mxu0 %v2077
        %2100 = vmatpush.bf16.xpose.msra.mxu0 %v2074
        %2101 = vmatpush.bf16.xpose.msra.mxu0 %v2071
        %2102 = vmatmul.bf16.gmra.mxu0 %v2047
        %v2103 = vpop.f32.mrf.mxu0
        %v2104 = vadd.f32 %v953, %v2103
        %v2105 = vpop.f32.mrf.mxu0
        %v2106 = vadd.f32 %v954, %v2105
        %2107 = vmatmul.bf16.gmra.mxu0 %v2050
        %v2108 = vpop.f32.mrf.mxu0
        %v2109 = vadd.f32 %v955, %v2108
        %v2110 = vpop.f32.mrf.mxu0
        %v2111 = vadd.f32 %v956, %v2110
        %2112 = vmatmul.bf16.gmra.mxu0 %v2053
        %v2113 = vpop.f32.mrf.mxu0
        %v2114 = vadd.f32 %v957, %v2113
        %v2115 = vpop.f32.mrf.mxu0
        %v2116 = vadd.f32 %v958, %v2115
        %2117 = vmatmul.bf16.gmra.mxu0 %v2056
        %v2118 = vpop.f32.mrf.mxu0
        %v2119 = vadd.f32 %v959, %v2118
        %v2120 = vpop.f32.mrf.mxu0
        %v2121 = vadd.f32 %v960, %v2120
        %2122 = vmatmul.bf16.gmra.mxu0 %v2059
        %v2123 = vpop.f32.mrf.mxu0
        %v2124 = vadd.f32 %v961, %v2123
        %v2125 = vpop.f32.mrf.mxu0
        %v2126 = vadd.f32 %v962, %v2125
        %2127 = vmatmul.bf16.gmra.mxu0 %v2062
        %v2128 = vpop.f32.mrf.mxu0
        %v2129 = vadd.f32 %v963, %v2128
        %v2130 = vpop.f32.mrf.mxu0
        %v2131 = vadd.f32 %v964, %v2130
        %2132 = vmatmul.bf16.gmra.mxu0 %v2065
        %v2133 = vpop.f32.mrf.mxu0
        %v2134 = vadd.f32 %v965, %v2133
        %v2135 = vpop.f32.mrf.mxu0
        %v2136 = vadd.f32 %v966, %v2135
        %2137 = vmatmul.bf16.gmra.mxu0 %v2068
        %v2138 = vpop.f32.mrf.mxu0
        %v2139 = vadd.f32 %v967, %v2138
        %v2140 = vpop.f32.mrf.mxu0
        %v2141 = vadd.f32 %v968, %v2140
        %2142 = vdwg.mxu0
        %2143 = vmax.xlane.f32.xlu0 %v2104
        %v2144 = vpop.xlane.xlu0 %2143
        %2145 = vmax.xlane.f32.xlu0 %v2106
        %v2146 = vpop.xlane.xlu0 %2145
        %2147 = vmax.xlane.f32.xlu0 %v2109
        %v2148 = vpop.xlane.xlu0 %2147
        %2149 = vmax.xlane.f32.xlu0 %v2111
        %v2150 = vpop.xlane.xlu0 %2149
        %2151 = vmax.xlane.f32.xlu0 %v2114
        %v2152 = vpop.xlane.xlu0 %2151
        %2153 = vmax.xlane.f32.xlu0 %v2116
        %v2154 = vpop.xlane.xlu0 %2153
        %2155 = vmax.xlane.f32.xlu0 %v2119
        %v2156 = vpop.xlane.xlu0 %2155
        %2157 = vmax.xlane.f32.xlu0 %v2121
        %v2158 = vpop.xlane.xlu0 %2157
        %2159 = vmax.xlane.f32.xlu0 %v2124
        %v2160 = vpop.xlane.xlu0 %2159
        %2161 = vmax.xlane.f32.xlu0 %v2126
        %v2162 = vpop.xlane.xlu0 %2161
        %2163 = vmax.xlane.f32.xlu0 %v2129
        %v2164 = vpop.xlane.xlu0 %2163
        %2165 = vmax.xlane.f32.xlu0 %v2131
        %v2166 = vpop.xlane.xlu0 %2165
        %2167 = vmax.xlane.f32.xlu0 %v2134
        %v2168 = vpop.xlane.xlu0 %2167
        %2169 = vmax.xlane.f32.xlu0 %v2136
        %v2170 = vpop.xlane.xlu0 %2169
        %2171 = vmax.xlane.f32.xlu0 %v2139
        %v2172 = vpop.xlane.xlu0 %2171
        %2173 = vmax.xlane.f32.xlu0 %v2141
        %v2174 = vpop.xlane.xlu0 %2173
        %v2175 = vsub.f32 %v2104, %v2144
        %v2176 = vsub.f32 %v2106, %v2146
        %v2177 = vsub.f32 %v2109, %v2148
        %v2178 = vsub.f32 %v2111, %v2150
        %v2179 = vsub.f32 %v2114, %v2152
        %v2180 = vsub.f32 %v2116, %v2154
        %v2181 = vsub.f32 %v2119, %v2156
        %v2182 = vsub.f32 %v2121, %v2158
        %v2183 = vsub.f32 %v2124, %v2160
        %v2184 = vsub.f32 %v2126, %v2162
        %v2185 = vsub.f32 %v2129, %v2164
        %v2186 = vsub.f32 %v2131, %v2166
        %v2187 = vsub.f32 %v2134, %v2168
        %v2188 = vsub.f32 %v2136, %v2170
        %v2189 = vsub.f32 %v2139, %v2172
        %v2190 = vsub.f32 %v2141, %v2174
        %v2191 = vmul.f32 %v2175, 1.442695
        %v2192 = vpow.pop %v2191
        %v2193 = vmul.f32 %v2176, 1.442695
        %v2194 = vpow.pop %v2193
        %v2195 = vmul.f32 %v2177, 1.442695
        %v2196 = vpow.pop %v2195
        %v2197 = vmul.f32 %v2178, 1.442695
        %v2198 = vpow.pop %v2197
        %v2199 = vmul.f32 %v2179, 1.442695
        %v2200 = vpow.pop %v2199
        %v2201 = vmul.f32 %v2180, 1.442695
        %v2202 = vpow.pop %v2201
        %v2203 = vmul.f32 %v2181, 1.442695
        %v2204 = vpow.pop %v2203
        %v2205 = vmul.f32 %v2182, 1.442695
        %v2206 = vpow.pop %v2205
        %v2207 = vmul.f32 %v2183, 1.442695
        %v2208 = vpow.pop %v2207
        %v2209 = vmul.f32 %v2184, 1.442695
        %v2210 = vpow.pop %v2209
        %v2211 = vmul.f32 %v2185, 1.442695
        %v2212 = vpow.pop %v2211
        %v2213 = vmul.f32 %v2186, 1.442695
        %v2214 = vpow.pop %v2213
        %v2215 = vmul.f32 %v2187, 1.442695
        %v2216 = vpow.pop %v2215
        %v2217 = vmul.f32 %v2188, 1.442695
        %v2218 = vpow.pop %v2217
        %v2219 = vmul.f32 %v2189, 1.442695
        %v2220 = vpow.pop %v2219
        %v2221 = vmul.f32 %v2190, 1.442695
        %v2222 = vpow.pop %v2221
        %2223 = vadd.xlane.f32.xlu0 %v2192
        %v2224 = vpop.xlane.xlu0 %2223
        %2225 = vadd.xlane.f32.xlu0 %v2194
        %v2226 = vpop.xlane.xlu0 %2225
        %2227 = vadd.xlane.f32.xlu0 %v2196
        %v2228 = vpop.xlane.xlu0 %2227
        %2229 = vadd.xlane.f32.xlu0 %v2198
        %v2230 = vpop.xlane.xlu0 %2229
        %2231 = vadd.xlane.f32.xlu0 %v2200
        %v2232 = vpop.xlane.xlu0 %2231
        %2233 = vadd.xlane.f32.xlu0 %v2202
        %v2234 = vpop.xlane.xlu0 %2233
        %2235 = vadd.xlane.f32.xlu0 %v2204
        %v2236 = vpop.xlane.xlu0 %2235
        %2237 = vadd.xlane.f32.xlu0 %v2206
        %v2238 = vpop.xlane.xlu0 %2237
        %2239 = vadd.xlane.f32.xlu0 %v2208
        %v2240 = vpop.xlane.xlu0 %2239
        %2241 = vadd.xlane.f32.xlu0 %v2210
        %v2242 = vpop.xlane.xlu0 %2241
        %2243 = vadd.xlane.f32.xlu0 %v2212
        %v2244 = vpop.xlane.xlu0 %2243
        %2245 = vadd.xlane.f32.xlu0 %v2214
        %v2246 = vpop.xlane.xlu0 %2245
        %2247 = vadd.xlane.f32.xlu0 %v2216
        %v2248 = vpop.xlane.xlu0 %2247
        %2249 = vadd.xlane.f32.xlu0 %v2218
        %v2250 = vpop.xlane.xlu0 %2249
        %2251 = vadd.xlane.f32.xlu0 %v2220
        %v2252 = vpop.xlane.xlu0 %2251
        %2253 = vadd.xlane.f32.xlu0 %v2222
        %v2254 = vpop.xlane.xlu0 %2253
        %v2255 = vrcp.pop %v2224
        %v2256 = vrcp.pop %v2226
        %v2257 = vrcp.pop %v2228
        %v2258 = vrcp.pop %v2230
        %v2259 = vrcp.pop %v2232
        %v2260 = vrcp.pop %v2234
        %v2261 = vrcp.pop %v2236
        %v2262 = vrcp.pop %v2238
        %v2263 = vrcp.pop %v2240
        %v2264 = vrcp.pop %v2242
        %v2265 = vrcp.pop %v2244
        %v2266 = vrcp.pop %v2246
        %v2267 = vrcp.pop %v2248
        %v2268 = vrcp.pop %v2250
        %v2269 = vrcp.pop %v2252
        %v2270 = vrcp.pop %v2254
        %v2271 = vmul.f32 %v2192, %v2255
        %v2272 = vmul.f32 %v2194, %v2256
        %v2273 = vmul.f32 %v2196, %v2257
        %v2274 = vmul.f32 %v2198, %v2258
        %v2275 = vmul.f32 %v2200, %v2259
        %v2276 = vmul.f32 %v2202, %v2260
        %v2277 = vmul.f32 %v2204, %v2261
        %v2278 = vmul.f32 %v2206, %v2262
        %v2279 = vmul.f32 %v2208, %v2263
        %v2280 = vmul.f32 %v2210, %v2264
        %v2281 = vmul.f32 %v2212, %v2265
        %v2282 = vmul.f32 %v2214, %v2266
        %v2283 = vmul.f32 %v2216, %v2267
        %v2284 = vmul.f32 %v2218, %v2268
        %v2285 = vmul.f32 %v2220, %v2269
        %v2286 = vmul.f32 %v2222, %v2270
        %v2287 = vpack.c.bf16 %v2272, %v2271
        %v2288 = vpack.c.bf16 %v2274, %v2273
        %v2289 = vpack.c.bf16 %v2276, %v2275
        %v2290 = vpack.c.bf16 %v2278, %v2277
        %v2291 = vpack.c.bf16 %v2280, %v2279
        %v2292 = vpack.c.bf16 %v2282, %v2281
        %v2293 = vpack.c.bf16 %v2284, %v2283
        %v2294 = vpack.c.bf16 %v2286, %v2285
        %2303 = vrot.lane.b32.xlu0 %v1691, 64
        %v2304 = vpop.permute.xlu0 %2303
        %2305 = vrot.lane.b32.xlu0 %v1692, 64
        %v2306 = vpop.permute.xlu0 %2305
        %2307 = vrot.lane.b32.xlu0 %v1693, 64
        %v2308 = vpop.permute.xlu0 %2307
        %2309 = vrot.lane.b32.xlu0 %v1694, 64
        %v2310 = vpop.permute.xlu0 %2309
        %2311 = vrot.lane.b32.xlu0 %v1695, 64
        %v2312 = vpop.permute.xlu0 %2311
        %2313 = vrot.lane.b32.xlu0 %v1696, 64
        %v2314 = vpop.permute.xlu0 %2313
        %2315 = vrot.lane.b32.xlu0 %v1697, 64
        %v2316 = vpop.permute.xlu0 %2315
        %2317 = vrot.lane.b32.xlu0 %v1698, 64
        %v2318 = vpop.permute.xlu0 %2317
        %2327 = vmatpush.bf16.msra.mxu0 %v2318
        %2328 = vmatpush.bf16.msra.mxu0 %v2316
        %2329 = vmatpush.bf16.msra.mxu0 %v2314
        %2330 = vmatpush.bf16.msra.mxu0 %v2312
        %2331 = vmatpush.bf16.msra.mxu0 %v2310
        %2332 = vmatpush.bf16.msra.mxu0 %v2308
        %2333 = vmatpush.bf16.msra.mxu0 %v2306
        %2334 = vmatpush.bf16.msra.mxu0 %v2304
        %2335 = vmatmul.bf16.gmra.mxu0 %v2287
        %v2336 = vpop.f32.mrf.mxu0
        %v2337 = vadd.f32 0.0, %v2336
        %v2338 = vpop.f32.mrf.mxu0
        %v2339 = vadd.f32 0.0, %v2338
        %2340 = vmatmul.bf16.gmra.mxu0 %v2288
        %v2341 = vpop.f32.mrf.mxu0
        %v2342 = vadd.f32 0.0, %v2341
        %v2343 = vpop.f32.mrf.mxu0
        %v2344 = vadd.f32 0.0, %v2343
        %2345 = vmatmul.bf16.gmra.mxu0 %v2289
        %v2346 = vpop.f32.mrf.mxu0
        %v2347 = vadd.f32 0.0, %v2346
        %v2348 = vpop.f32.mrf.mxu0
        %v2349 = vadd.f32 0.0, %v2348
        %2350 = vmatmul.bf16.gmra.mxu0 %v2290
        %v2351 = vpop.f32.mrf.mxu0
        %v2352 = vadd.f32 0.0, %v2351
        %v2353 = vpop.f32.mrf.mxu0
        %v2354 = vadd.f32 0.0, %v2353
        %2355 = vmatmul.bf16.gmra.mxu0 %v2291
        %v2356 = vpop.f32.mrf.mxu0
        %v2357 = vadd.f32 0.0, %v2356
        %v2358 = vpop.f32.mrf.mxu0
        %v2359 = vadd.f32 0.0, %v2358
        %2360 = vmatmul.bf16.gmra.mxu0 %v2292
        %v2361 = vpop.f32.mrf.mxu0
        %v2362 = vadd.f32 0.0, %v2361
        %v2363 = vpop.f32.mrf.mxu0
        %v2364 = vadd.f32 0.0, %v2363
        %2365 = vmatmul.bf16.gmra.mxu0 %v2293
        %v2366 = vpop.f32.mrf.mxu0
        %v2367 = vadd.f32 0.0, %v2366
        %v2368 = vpop.f32.mrf.mxu0
        %v2369 = vadd.f32 0.0, %v2368
        %2370 = vmatmul.bf16.gmra.mxu0 %v2294
        %v2371 = vpop.f32.mrf.mxu0
        %v2372 = vadd.f32 0.0, %v2371
        %v2373 = vpop.f32.mrf.mxu0
        %v2374 = vadd.f32 0.0, %v2373
        %2375 = vdwg.mxu0
        %2392 = vrot.lane.b32.xlu0 %v2337, 64
        %v2393 = vpop.permute.xlu0 %2392
        %2394 = vrot.lane.b32.xlu0 %v2339, 64
        %v2395 = vpop.permute.xlu0 %2394
        %2396 = vrot.lane.b32.xlu0 %v2342, 64
        %v2397 = vpop.permute.xlu0 %2396
        %2398 = vrot.lane.b32.xlu0 %v2344, 64
        %v2399 = vpop.permute.xlu0 %2398
        %2400 = vrot.lane.b32.xlu0 %v2347, 64
        %v2401 = vpop.permute.xlu0 %2400
        %2402 = vrot.lane.b32.xlu0 %v2349, 64
        %v2403 = vpop.permute.xlu0 %2402
        %2404 = vrot.lane.b32.xlu0 %v2352, 64
        %v2405 = vpop.permute.xlu0 %2404
        %2406 = vrot.lane.b32.xlu0 %v2354, 64
        %v2407 = vpop.permute.xlu0 %2406
        %2408 = vrot.lane.b32.xlu0 %v2357, 64
        %v2409 = vpop.permute.xlu0 %2408
        %2410 = vrot.lane.b32.xlu0 %v2359, 64
        %v2411 = vpop.permute.xlu0 %2410
        %2412 = vrot.lane.b32.xlu0 %v2362, 64
        %v2413 = vpop.permute.xlu0 %2412
        %2414 = vrot.lane.b32.xlu0 %v2364, 64
        %v2415 = vpop.permute.xlu0 %2414
        %2416 = vrot.lane.b32.xlu0 %v2367, 64
        %v2417 = vpop.permute.xlu0 %2416
        %2418 = vrot.lane.b32.xlu0 %v2369, 64
        %v2419 = vpop.permute.xlu0 %2418
        %2420 = vrot.lane.b32.xlu0 %v2372, 64
        %v2421 = vpop.permute.xlu0 %2420
        %2422 = vrot.lane.b32.xlu0 %v2374, 64
        %v2423 = vpop.permute.xlu0 %2422
        %v2440 = vsel %vm1699, %v1959, %v2393
        %v2441 = vsel %vm1699, %v1961, %v2395
        %v2442 = vsel %vm1699, %v1964, %v2397
        %v2443 = vsel %vm1699, %v1966, %v2399
        %v2444 = vsel %vm1699, %v1969, %v2401
        %v2445 = vsel %vm1699, %v1971, %v2403
        %v2446 = vsel %vm1699, %v1974, %v2405
        %v2447 = vsel %vm1699, %v1976, %v2407
        %v2448 = vsel %vm1699, %v1979, %v2409
        %v2449 = vsel %vm1699, %v1981, %v2411
        %v2450 = vsel %vm1699, %v1984, %v2413
        %v2451 = vsel %vm1699, %v1986, %v2415
        %v2452 = vsel %vm1699, %v1989, %v2417
        %v2453 = vsel %vm1699, %v1991, %v2419
        %v2454 = vsel %vm1699, %v1994, %v2421
        %v2455 = vsel %vm1699, %v1996, %v2423
        %v2456 = vpack.c.bf16 %v2441, %v2440
        %v2457 = vpack.c.bf16 %v2443, %v2442
        %v2458 = vpack.c.bf16 %v2445, %v2444
        %v2459 = vpack.c.bf16 %v2447, %v2446
        %v2460 = vpack.c.bf16 %v2449, %v2448
        %v2461 = vpack.c.bf16 %v2451, %v2450
        %v2462 = vpack.c.bf16 %v2453, %v2452
        %v2463 = vpack.c.bf16 %v2455, %v2454
        %v2464 = vld [vmem:[%s749] sm:$0xf]
        %v2465 = vld [vmem:[%s749 + $0x4] sm:$0xf]
        %v2466 = vld [vmem:[%s749 + $0x8] sm:$0xf]
        %v2467 = vld [vmem:[%s749 + $0xc] sm:$0xf]
        %v2468 = vld [vmem:[%s749 + $0x10] sm:$0xf]
        %v2469 = vld [vmem:[%s749 + $0x14] sm:$0xf]
        %v2470 = vld [vmem:[%s749 + $0x18] sm:$0xf]
        %v2471 = vld [vmem:[%s749 + $0x1c] sm:$0xf]
        %v2472 = vld [vmem:[%s749 + $0x20] sm:$0xf]
        %v2473 = vld [vmem:[%s749 + $0x24] sm:$0xf]
        %v2474 = vld [vmem:[%s749 + $0x28] sm:$0xf]
        %v2475 = vld [vmem:[%s749 + $0x2c] sm:$0xf]
        %v2476 = vld [vmem:[%s749 + $0x30] sm:$0xf]
        %v2477 = vld [vmem:[%s749 + $0x34] sm:$0xf]
        %v2478 = vld [vmem:[%s749 + $0x38] sm:$0xf]
        %v2479 = vld [vmem:[%s749 + $0x3c] sm:$0xf]
        %v2480 = vld [vmem:[%s758] sm:$0x1]
        %v2482 = vperm.slane %v2480, 0
        %v2500 = vunpack.c.l.b16 %v2464
        %v2501 = vunpack.c.l.b16 %v2465
        %v2502 = vunpack.c.l.b16 %v2466
        %v2503 = vunpack.c.l.b16 %v2467
        %v2504 = vunpack.c.l.b16 %v2468
        %v2505 = vunpack.c.l.b16 %v2469
        %v2506 = vunpack.c.l.b16 %v2470
        %v2507 = vunpack.c.l.b16 %v2471
        %v2508 = vunpack.c.l.b16 %v2472
        %v2509 = vunpack.c.l.b16 %v2473
        %v2510 = vunpack.c.l.b16 %v2474
        %v2511 = vunpack.c.l.b16 %v2475
        %v2512 = vunpack.c.l.b16 %v2476
        %v2513 = vunpack.c.l.b16 %v2477
        %v2514 = vunpack.c.l.b16 %v2478
        %v2515 = vunpack.c.l.b16 %v2479
        %v2516 = vpack.c.b16 %v2501, %v2500
        %v2517 = vpack.c.b16 %v2503, %v2502
        %v2518 = vpack.c.b16 %v2505, %v2504
        %v2519 = vpack.c.b16 %v2507, %v2506
        %v2520 = vpack.c.b16 %v2509, %v2508
        %v2521 = vpack.c.b16 %v2511, %v2510
        %v2522 = vpack.c.b16 %v2513, %v2512
        %v2523 = vpack.c.b16 %v2515, %v2514
        %2532 = vmatpush.bf16.msra.mxu0 %v2523
        %2533 = vmatpush.bf16.msra.mxu0 %v2522
        %2534 = vmatpush.bf16.msra.mxu0 %v2521
        %2535 = vmatpush.bf16.msra.mxu0 %v2520
        %2536 = vmatpush.bf16.msra.mxu0 %v2519
        %2537 = vmatpush.bf16.msra.mxu0 %v2518
        %2538 = vmatpush.bf16.msra.mxu0 %v2517
        %2539 = vmatpush.bf16.msra.mxu0 %v2516
        %2540 = vmatmul.bf16.gmra.mxu0 %v2456
        %v2541 = vpop.f32.mrf.mxu0
        %v2542 = vadd.f32 %v2482, %v2541
        %v2543 = vpop.f32.mrf.mxu0
        %v2544 = vadd.f32 %v2482, %v2543
        %2545 = vmatmul.bf16.gmra.mxu0 %v2457
        %v2546 = vpop.f32.mrf.mxu0
        %v2547 = vadd.f32 %v2482, %v2546
        %v2548 = vpop.f32.mrf.mxu0
        %v2549 = vadd.f32 %v2482, %v2548
        %2550 = vmatmul.bf16.gmra.mxu0 %v2458
        %v2551 = vpop.f32.mrf.mxu0
        %v2552 = vadd.f32 %v2482, %v2551
        %v2553 = vpop.f32.mrf.mxu0
        %v2554 = vadd.f32 %v2482, %v2553
        %2555 = vmatmul.bf16.gmra.mxu0 %v2459
        %v2556 = vpop.f32.mrf.mxu0
        %v2557 = vadd.f32 %v2482, %v2556
        %v2558 = vpop.f32.mrf.mxu0
        %v2559 = vadd.f32 %v2482, %v2558
        %2560 = vmatmul.bf16.gmra.mxu0 %v2460
        %v2561 = vpop.f32.mrf.mxu0
        %v2562 = vadd.f32 %v2482, %v2561
        %v2563 = vpop.f32.mrf.mxu0
        %v2564 = vadd.f32 %v2482, %v2563
        %2565 = vmatmul.bf16.gmra.mxu0 %v2461
        %v2566 = vpop.f32.mrf.mxu0
        %v2567 = vadd.f32 %v2482, %v2566
        %v2568 = vpop.f32.mrf.mxu0
        %v2569 = vadd.f32 %v2482, %v2568
        %2570 = vmatmul.bf16.gmra.mxu0 %v2462
        %v2571 = vpop.f32.mrf.mxu0
        %v2572 = vadd.f32 %v2482, %v2571
        %v2573 = vpop.f32.mrf.mxu0
        %v2574 = vadd.f32 %v2482, %v2573
        %2575 = vmatmul.bf16.gmra.mxu0 %v2463
        %v2576 = vpop.f32.mrf.mxu0
        %v2577 = vadd.f32 %v2482, %v2576
        %v2578 = vpop.f32.mrf.mxu0
        %v2579 = vadd.f32 %v2482, %v2578
        %2580 = vdwg.mxu0
        %v2581 = vadd.f32 %v937, %v2542
        %v2582 = vadd.f32 %v938, %v2544
        %v2583 = vadd.f32 %v939, %v2547
        %v2584 = vadd.f32 %v940, %v2549
        %v2585 = vadd.f32 %v941, %v2552
        %v2586 = vadd.f32 %v942, %v2554
        %v2587 = vadd.f32 %v943, %v2557
        %v2588 = vadd.f32 %v944, %v2559
        %v2589 = vadd.f32 %v945, %v2562
        %v2590 = vadd.f32 %v946, %v2564
        %v2591 = vadd.f32 %v947, %v2567
        %v2592 = vadd.f32 %v948, %v2569
        %v2593 = vadd.f32 %v949, %v2572
        %v2594 = vadd.f32 %v950, %v2574
        %v2595 = vadd.f32 %v951, %v2577
        %v2596 = vadd.f32 %v952, %v2579
        %v2597 = vld [vmem:[%s767] sm:$0x1]
        %v2598 = vld [vmem:[%s893] sm:$0x1]
        %2599 = vadd.xlane.f32.xlu0 %v2581
        %v2600 = vpop.xlane.xlu0 %2599
        %2601 = vadd.xlane.f32.xlu0 %v2582
        %v2602 = vpop.xlane.xlu0 %2601
        %2603 = vadd.xlane.f32.xlu0 %v2583
        %v2604 = vpop.xlane.xlu0 %2603
        %2605 = vadd.xlane.f32.xlu0 %v2584
        %v2606 = vpop.xlane.xlu0 %2605
        %2607 = vadd.xlane.f32.xlu0 %v2585
        %v2608 = vpop.xlane.xlu0 %2607
        %2609 = vadd.xlane.f32.xlu0 %v2586
        %v2610 = vpop.xlane.xlu0 %2609
        %2611 = vadd.xlane.f32.xlu0 %v2587
        %v2612 = vpop.xlane.xlu0 %2611
        %2613 = vadd.xlane.f32.xlu0 %v2588
        %v2614 = vpop.xlane.xlu0 %2613
        %2615 = vadd.xlane.f32.xlu0 %v2589
        %v2616 = vpop.xlane.xlu0 %2615
        %2617 = vadd.xlane.f32.xlu0 %v2590
        %v2618 = vpop.xlane.xlu0 %2617
        %2619 = vadd.xlane.f32.xlu0 %v2591
        %v2620 = vpop.xlane.xlu0 %2619
        %2621 = vadd.xlane.f32.xlu0 %v2592
        %v2622 = vpop.xlane.xlu0 %2621
        %2623 = vadd.xlane.f32.xlu0 %v2593
        %v2624 = vpop.xlane.xlu0 %2623
        %2625 = vadd.xlane.f32.xlu0 %v2594
        %v2626 = vpop.xlane.xlu0 %2625
        %2627 = vadd.xlane.f32.xlu0 %v2595
        %v2628 = vpop.xlane.xlu0 %2627
        %2629 = vadd.xlane.f32.xlu0 %v2596
        %v2630 = vpop.xlane.xlu0 %2629
        %v2631 = vmul.f32 %v2600, %v1009
        %v2632 = vmul.f32 %v2602, %v1009
        %v2633 = vmul.f32 %v2604, %v1009
        %v2634 = vmul.f32 %v2606, %v1009
        %v2635 = vmul.f32 %v2608, %v1009
        %v2636 = vmul.f32 %v2610, %v1009
        %v2637 = vmul.f32 %v2612, %v1009
        %v2638 = vmul.f32 %v2614, %v1009
        %v2639 = vmul.f32 %v2616, %v1009
        %v2640 = vmul.f32 %v2618, %v1009
        %v2641 = vmul.f32 %v2620, %v1009
        %v2642 = vmul.f32 %v2622, %v1009
        %v2643 = vmul.f32 %v2624, %v1009
        %v2644 = vmul.f32 %v2626, %v1009
        %v2645 = vmul.f32 %v2628, %v1009
        %v2646 = vmul.f32 %v2630, %v1009
        %v2647 = vsub.f32 %v2581, %v2631
        %v2648 = vsub.f32 %v2582, %v2632
        %v2649 = vsub.f32 %v2583, %v2633
        %v2650 = vsub.f32 %v2584, %v2634
        %v2651 = vsub.f32 %v2585, %v2635
        %v2652 = vsub.f32 %v2586, %v2636
        %v2653 = vsub.f32 %v2587, %v2637
        %v2654 = vsub.f32 %v2588, %v2638
        %v2655 = vsub.f32 %v2589, %v2639
        %v2656 = vsub.f32 %v2590, %v2640
        %v2657 = vsub.f32 %v2591, %v2641
        %v2658 = vsub.f32 %v2592, %v2642
        %v2659 = vsub.f32 %v2593, %v2643
        %v2660 = vsub.f32 %v2594, %v2644
        %v2661 = vsub.f32 %v2595, %v2645
        %v2662 = vsub.f32 %v2596, %v2646
        %v2663 = vmul.f32 %v2647, %v2647
        %v2664 = vmul.f32 %v2648, %v2648
        %v2665 = vmul.f32 %v2649, %v2649
        %v2666 = vmul.f32 %v2650, %v2650
        %v2667 = vmul.f32 %v2651, %v2651
        %v2668 = vmul.f32 %v2652, %v2652
        %v2669 = vmul.f32 %v2653, %v2653
        %v2670 = vmul.f32 %v2654, %v2654
        %v2671 = vmul.f32 %v2655, %v2655
        %v2672 = vmul.f32 %v2656, %v2656
        %v2673 = vmul.f32 %v2657, %v2657
        %v2674 = vmul.f32 %v2658, %v2658
        %v2675 = vmul.f32 %v2659, %v2659
        %v2676 = vmul.f32 %v2660, %v2660
        %v2677 = vmul.f32 %v2661, %v2661
        %v2678 = vmul.f32 %v2662, %v2662
        %2679 = vadd.xlane.f32.xlu0 %v2663
        %v2680 = vpop.xlane.xlu0 %2679
        %2681 = vadd.xlane.f32.xlu0 %v2664
        %v2682 = vpop.xlane.xlu0 %2681
        %2683 = vadd.xlane.f32.xlu0 %v2665
        %v2684 = vpop.xlane.xlu0 %2683
        %2685 = vadd.xlane.f32.xlu0 %v2666
        %v2686 = vpop.xlane.xlu0 %2685
        %2687 = vadd.xlane.f32.xlu0 %v2667
        %v2688 = vpop.xlane.xlu0 %2687
        %2689 = vadd.xlane.f32.xlu0 %v2668
        %v2690 = vpop.xlane.xlu0 %2689
        %2691 = vadd.xlane.f32.xlu0 %v2669
        %v2692 = vpop.xlane.xlu0 %2691
        %2693 = vadd.xlane.f32.xlu0 %v2670
        %v2694 = vpop.xlane.xlu0 %2693
        %2695 = vadd.xlane.f32.xlu0 %v2671
        %v2696 = vpop.xlane.xlu0 %2695
        %2697 = vadd.xlane.f32.xlu0 %v2672
        %v2698 = vpop.xlane.xlu0 %2697
        %2699 = vadd.xlane.f32.xlu0 %v2673
        %v2700 = vpop.xlane.xlu0 %2699
        %2701 = vadd.xlane.f32.xlu0 %v2674
        %v2702 = vpop.xlane.xlu0 %2701
        %2703 = vadd.xlane.f32.xlu0 %v2675
        %v2704 = vpop.xlane.xlu0 %2703
        %2705 = vadd.xlane.f32.xlu0 %v2676
        %v2706 = vpop.xlane.xlu0 %2705
        %2707 = vadd.xlane.f32.xlu0 %v2677
        %v2708 = vpop.xlane.xlu0 %2707
        %2709 = vadd.xlane.f32.xlu0 %v2678
        %v2710 = vpop.xlane.xlu0 %2709
        %v2711 = vmul.f32 %v2680, %v1009
        %v2712 = vmul.f32 %v2682, %v1009
        %v2713 = vmul.f32 %v2684, %v1009
        %v2714 = vmul.f32 %v2686, %v1009
        %v2715 = vmul.f32 %v2688, %v1009
        %v2716 = vmul.f32 %v2690, %v1009
        %v2717 = vmul.f32 %v2692, %v1009
        %v2718 = vmul.f32 %v2694, %v1009
        %v2719 = vmul.f32 %v2696, %v1009
        %v2720 = vmul.f32 %v2698, %v1009
        %v2721 = vmul.f32 %v2700, %v1009
        %v2722 = vmul.f32 %v2702, %v1009
        %v2723 = vmul.f32 %v2704, %v1009
        %v2724 = vmul.f32 %v2706, %v1009
        %v2725 = vmul.f32 %v2708, %v1009
        %v2726 = vmul.f32 %v2710, %v1009
        %v2727 = vadd.f32 %v2711, 1e-05
        %v2728 = vadd.f32 %v2712, 1e-05
        %v2729 = vadd.f32 %v2713, 1e-05
        %v2730 = vadd.f32 %v2714, 1e-05
        %v2731 = vadd.f32 %v2715, 1e-05
        %v2732 = vadd.f32 %v2716, 1e-05
        %v2733 = vadd.f32 %v2717, 1e-05
        %v2734 = vadd.f32 %v2718, 1e-05
        %v2735 = vadd.f32 %v2719, 1e-05
        %v2736 = vadd.f32 %v2720, 1e-05
        %v2737 = vadd.f32 %v2721, 1e-05
        %v2738 = vadd.f32 %v2722, 1e-05
        %v2739 = vadd.f32 %v2723, 1e-05
        %v2740 = vadd.f32 %v2724, 1e-05
        %v2741 = vadd.f32 %v2725, 1e-05
        %v2742 = vadd.f32 %v2726, 1e-05
        %v2743 = vrsqrt.pop %v2727
        %v2744 = vmul.f32 %v2743, %v2727
        %v2745 = vmul.f32 %v2744, %v2743
        %v2746 = vmul.f32 0.5, %v2745
        %v2747 = vsub.f32 1.5, %v2746
        %v2748 = vmul.f32 %v2743, %v2747
        %vm2749 = vweird.f32 %v2727
        %vm2750 = vweird.f32 %v2743
        %vm2751 = vmor %vm2749, %vm2750
        %v2752 = vsel %vm2751, %v2743, %v2748
        %v2753 = vrsqrt.pop %v2728
        %v2754 = vmul.f32 %v2753, %v2728
        %v2755 = vmul.f32 %v2754, %v2753
        %v2756 = vmul.f32 0.5, %v2755
        %v2757 = vsub.f32 1.5, %v2756
        %v2758 = vmul.f32 %v2753, %v2757
        %vm2759 = vweird.f32 %v2728
        %vm2760 = vweird.f32 %v2753
        %vm2761 = vmor %vm2759, %vm2760
        %v2762 = vsel %vm2761, %v2753, %v2758
        %v2763 = vrsqrt.pop %v2729
        %v2764 = vmul.f32 %v2763, %v2729
        %v2765 = vmul.f32 %v2764, %v2763
        %v2766 = vmul.f32 0.5, %v2765
        %v2767 = vsub.f32 1.5, %v2766
        %v2768 = vmul.f32 %v2763, %v2767
        %vm2769 = vweird.f32 %v2729
        %vm2770 = vweird.f32 %v2763
        %vm2771 = vmor %vm2769, %vm2770
        %v2772 = vsel %vm2771, %v2763, %v2768
        %v2773 = vrsqrt.pop %v2730
        %v2774 = vmul.f32 %v2773, %v2730
        %v2775 = vmul.f32 %v2774, %v2773
        %v2776 = vmul.f32 0.5, %v2775
        %v2777 = vsub.f32 1.5, %v2776
        %v2778 = vmul.f32 %v2773, %v2777
        %vm2779 = vweird.f32 %v2730
        %vm2780 = vweird.f32 %v2773
        %vm2781 = vmor %vm2779, %vm2780
        %v2782 = vsel %vm2781, %v2773, %v2778
        %v2783 = vrsqrt.pop %v2731
        %v2784 = vmul.f32 %v2783, %v2731
        %v2785 = vmul.f32 %v2784, %v2783
        %v2786 = vmul.f32 0.5, %v2785
        %v2787 = vsub.f32 1.5, %v2786
        %v2788 = vmul.f32 %v2783, %v2787
        %vm2789 = vweird.f32 %v2731
        %vm2790 = vweird.f32 %v2783
        %vm2791 = vmor %vm2789, %vm2790
        %v2792 = vsel %vm2791, %v2783, %v2788
        %v2793 = vrsqrt.pop %v2732
        %v2794 = vmul.f32 %v2793, %v2732
        %v2795 = vmul.f32 %v2794, %v2793
        %v2796 = vmul.f32 0.5, %v2795
        %v2797 = vsub.f32 1.5, %v2796
        %v2798 = vmul.f32 %v2793, %v2797
        %vm2799 = vweird.f32 %v2732
        %vm2800 = vweird.f32 %v2793
        %vm2801 = vmor %vm2799, %vm2800
        %v2802 = vsel %vm2801, %v2793, %v2798
        %v2803 = vrsqrt.pop %v2733
        %v2804 = vmul.f32 %v2803, %v2733
        %v2805 = vmul.f32 %v2804, %v2803
        %v2806 = vmul.f32 0.5, %v2805
        %v2807 = vsub.f32 1.5, %v2806
        %v2808 = vmul.f32 %v2803, %v2807
        %vm2809 = vweird.f32 %v2733
        %vm2810 = vweird.f32 %v2803
        %vm2811 = vmor %vm2809, %vm2810
        %v2812 = vsel %vm2811, %v2803, %v2808
        %v2813 = vrsqrt.pop %v2734
        %v2814 = vmul.f32 %v2813, %v2734
        %v2815 = vmul.f32 %v2814, %v2813
        %v2816 = vmul.f32 0.5, %v2815
        %v2817 = vsub.f32 1.5, %v2816
        %v2818 = vmul.f32 %v2813, %v2817
        %vm2819 = vweird.f32 %v2734
        %vm2820 = vweird.f32 %v2813
        %vm2821 = vmor %vm2819, %vm2820
        %v2822 = vsel %vm2821, %v2813, %v2818
        %v2823 = vrsqrt.pop %v2735
        %v2824 = vmul.f32 %v2823, %v2735
        %v2825 = vmul.f32 %v2824, %v2823
        %v2826 = vmul.f32 0.5, %v2825
        %v2827 = vsub.f32 1.5, %v2826
        %v2828 = vmul.f32 %v2823, %v2827
        %vm2829 = vweird.f32 %v2735
        %vm2830 = vweird.f32 %v2823
        %vm2831 = vmor %vm2829, %vm2830
        %v2832 = vsel %vm2831, %v2823, %v2828
        %v2833 = vrsqrt.pop %v2736
        %v2834 = vmul.f32 %v2833, %v2736
        %v2835 = vmul.f32 %v2834, %v2833
        %v2836 = vmul.f32 0.5, %v2835
        %v2837 = vsub.f32 1.5, %v2836
        %v2838 = vmul.f32 %v2833, %v2837
        %vm2839 = vweird.f32 %v2736
        %vm2840 = vweird.f32 %v2833
        %vm2841 = vmor %vm2839, %vm2840
        %v2842 = vsel %vm2841, %v2833, %v2838
        %v2843 = vrsqrt.pop %v2737
        %v2844 = vmul.f32 %v2843, %v2737
        %v2845 = vmul.f32 %v2844, %v2843
        %v2846 = vmul.f32 0.5, %v2845
        %v2847 = vsub.f32 1.5, %v2846
        %v2848 = vmul.f32 %v2843, %v2847
        %vm2849 = vweird.f32 %v2737
        %vm2850 = vweird.f32 %v2843
        %vm2851 = vmor %vm2849, %vm2850
        %v2852 = vsel %vm2851, %v2843, %v2848
        %v2853 = vrsqrt.pop %v2738
        %v2854 = vmul.f32 %v2853, %v2738
        %v2855 = vmul.f32 %v2854, %v2853
        %v2856 = vmul.f32 0.5, %v2855
        %v2857 = vsub.f32 1.5, %v2856
        %v2858 = vmul.f32 %v2853, %v2857
        %vm2859 = vweird.f32 %v2738
        %vm2860 = vweird.f32 %v2853
        %vm2861 = vmor %vm2859, %vm2860
        %v2862 = vsel %vm2861, %v2853, %v2858
        %v2863 = vrsqrt.pop %v2739
        %v2864 = vmul.f32 %v2863, %v2739
        %v2865 = vmul.f32 %v2864, %v2863
        %v2866 = vmul.f32 0.5, %v2865
        %v2867 = vsub.f32 1.5, %v2866
        %v2868 = vmul.f32 %v2863, %v2867
        %vm2869 = vweird.f32 %v2739
        %vm2870 = vweird.f32 %v2863
        %vm2871 = vmor %vm2869, %vm2870
        %v2872 = vsel %vm2871, %v2863, %v2868
        %v2873 = vrsqrt.pop %v2740
        %v2874 = vmul.f32 %v2873, %v2740
        %v2875 = vmul.f32 %v2874, %v2873
        %v2876 = vmul.f32 0.5, %v2875
        %v2877 = vsub.f32 1.5, %v2876
        %v2878 = vmul.f32 %v2873, %v2877
        %vm2879 = vweird.f32 %v2740
        %vm2880 = vweird.f32 %v2873
        %vm2881 = vmor %vm2879, %vm2880
        %v2882 = vsel %vm2881, %v2873, %v2878
        %v2883 = vrsqrt.pop %v2741
        %v2884 = vmul.f32 %v2883, %v2741
        %v2885 = vmul.f32 %v2884, %v2883
        %v2886 = vmul.f32 0.5, %v2885
        %v2887 = vsub.f32 1.5, %v2886
        %v2888 = vmul.f32 %v2883, %v2887
        %vm2889 = vweird.f32 %v2741
        %vm2890 = vweird.f32 %v2883
        %vm2891 = vmor %vm2889, %vm2890
        %v2892 = vsel %vm2891, %v2883, %v2888
        %v2893 = vrsqrt.pop %v2742
        %v2894 = vmul.f32 %v2893, %v2742
        %v2895 = vmul.f32 %v2894, %v2893
        %v2896 = vmul.f32 0.5, %v2895
        %v2897 = vsub.f32 1.5, %v2896
        %v2898 = vmul.f32 %v2893, %v2897
        %vm2899 = vweird.f32 %v2742
        %vm2900 = vweird.f32 %v2893
        %vm2901 = vmor %vm2899, %vm2900
        %v2902 = vsel %vm2901, %v2893, %v2898
        %v2903 = vmul.f32 %v2647, %v2752
        %v2904 = vmul.f32 %v2648, %v2762
        %v2905 = vmul.f32 %v2649, %v2772
        %v2906 = vmul.f32 %v2650, %v2782
        %v2907 = vmul.f32 %v2651, %v2792
        %v2908 = vmul.f32 %v2652, %v2802
        %v2909 = vmul.f32 %v2653, %v2812
        %v2910 = vmul.f32 %v2654, %v2822
        %v2911 = vmul.f32 %v2655, %v2832
        %v2912 = vmul.f32 %v2656, %v2842
        %v2913 = vmul.f32 %v2657, %v2852
        %v2914 = vmul.f32 %v2658, %v2862
        %v2915 = vmul.f32 %v2659, %v2872
        %v2916 = vmul.f32 %v2660, %v2882
        %v2917 = vmul.f32 %v2661, %v2892
        %v2918 = vmul.f32 %v2662, %v2902
        %v2920 = vperm.slane %v2597, 0
        %v2922 = vmul.f32 %v2903, %v2920
        %v2923 = vmul.f32 %v2904, %v2920
        %v2924 = vmul.f32 %v2905, %v2920
        %v2925 = vmul.f32 %v2906, %v2920
        %v2926 = vmul.f32 %v2907, %v2920
        %v2927 = vmul.f32 %v2908, %v2920
        %v2928 = vmul.f32 %v2909, %v2920
        %v2929 = vmul.f32 %v2910, %v2920
        %v2930 = vmul.f32 %v2911, %v2920
        %v2931 = vmul.f32 %v2912, %v2920
        %v2932 = vmul.f32 %v2913, %v2920
        %v2933 = vmul.f32 %v2914, %v2920
        %v2934 = vmul.f32 %v2915, %v2920
        %v2935 = vmul.f32 %v2916, %v2920
        %v2936 = vmul.f32 %v2917, %v2920
        %v2937 = vmul.f32 %v2918, %v2920
        %v2939 = vperm.slane %v2598, 0
        %v2941 = vadd.f32 %v2922, %v2939
        %v2942 = vadd.f32 %v2923, %v2939
        %v2943 = vadd.f32 %v2924, %v2939
        %v2944 = vadd.f32 %v2925, %v2939
        %v2945 = vadd.f32 %v2926, %v2939
        %v2946 = vadd.f32 %v2927, %v2939
        %v2947 = vadd.f32 %v2928, %v2939
        %v2948 = vadd.f32 %v2929, %v2939
        %v2949 = vadd.f32 %v2930, %v2939
        %v2950 = vadd.f32 %v2931, %v2939
        %v2951 = vadd.f32 %v2932, %v2939
        %v2952 = vadd.f32 %v2933, %v2939
        %v2953 = vadd.f32 %v2934, %v2939
        %v2954 = vadd.f32 %v2935, %v2939
        %v2955 = vadd.f32 %v2936, %v2939
        %v2956 = vadd.f32 %v2937, %v2939
        %v2957 = vpack.c.bf16 %v2942, %v2941
        %v2958 = vpack.c.bf16 %v2944, %v2943
        %v2959 = vpack.c.bf16 %v2946, %v2945
        %v2960 = vpack.c.bf16 %v2948, %v2947
        %v2961 = vpack.c.bf16 %v2950, %v2949
        %v2962 = vpack.c.bf16 %v2952, %v2951
        %v2963 = vpack.c.bf16 %v2954, %v2953
        %v2964 = vpack.c.bf16 %v2956, %v2955
        %v2965 = vld [vmem:[%s777] sm:$0xff]
        %v2966 = vld [vmem:[%s777 + $0x8] sm:$0xff]
        %v2967 = vld [vmem:[%s777 + $0x10] sm:$0xff]
        %v2968 = vld [vmem:[%s777 + $0x18] sm:$0xff]
        %v2969 = vld [vmem:[%s777 + $0x20] sm:$0xff]
        %v2970 = vld [vmem:[%s777 + $0x28] sm:$0xff]
        %v2971 = vld [vmem:[%s777 + $0x30] sm:$0xff]
        %v2972 = vld [vmem:[%s777 + $0x38] sm:$0xff]
        %v2973 = vld [vmem:[%s777 + $0x40] sm:$0xff]
        %v2974 = vld [vmem:[%s777 + $0x48] sm:$0xff]
        %v2975 = vld [vmem:[%s777 + $0x50] sm:$0xff]
        %v2976 = vld [vmem:[%s777 + $0x58] sm:$0xff]
        %v2977 = vld [vmem:[%s777 + $0x60] sm:$0xff]
        %v2978 = vld [vmem:[%s777 + $0x68] sm:$0xff]
        %v2979 = vld [vmem:[%s777 + $0x70] sm:$0xff]
        %v2980 = vld [vmem:[%s777 + $0x78] sm:$0xff]
        %v2981 = vld [vmem:[%s897] sm:$0x3]
        %v2983 = vperm.slane %v2981, 0
        %v2984 = vperm.slane %v2981, 1
        %v3003 = vunpack.c.l.b16 %v2965
        %v3004 = vunpack.c.h.b16 %v2965
        %v3005 = vunpack.c.l.b16 %v2966
        %v3006 = vunpack.c.h.b16 %v2966
        %v3007 = vunpack.c.l.b16 %v2967
        %v3008 = vunpack.c.h.b16 %v2967
        %v3009 = vunpack.c.l.b16 %v2968
        %v3010 = vunpack.c.h.b16 %v2968
        %v3011 = vunpack.c.l.b16 %v2969
        %v3012 = vunpack.c.h.b16 %v2969
        %v3013 = vunpack.c.l.b16 %v2970
        %v3014 = vunpack.c.h.b16 %v2970
        %v3015 = vunpack.c.l.b16 %v2971
        %v3016 = vunpack.c.h.b16 %v2971
        %v3017 = vunpack.c.l.b16 %v2972
        %v3018 = vunpack.c.h.b16 %v2972
        %v3019 = vunpack.c.l.b16 %v2973
        %v3020 = vunpack.c.h.b16 %v2973
        %v3021 = vunpack.c.l.b16 %v2974
        %v3022 = vunpack.c.h.b16 %v2974
        %v3023 = vunpack.c.l.b16 %v2975
        %v3024 = vunpack.c.h.b16 %v2975
        %v3025 = vunpack.c.l.b16 %v2976
        %v3026 = vunpack.c.h.b16 %v2976
        %v3027 = vunpack.c.l.b16 %v2977
        %v3028 = vunpack.c.h.b16 %v2977
        %v3029 = vunpack.c.l.b16 %v2978
        %v3030 = vunpack.c.h.b16 %v2978
        %v3031 = vunpack.c.l.b16 %v2979
        %v3032 = vunpack.c.h.b16 %v2979
        %v3033 = vunpack.c.l.b16 %v2980
        %v3034 = vunpack.c.h.b16 %v2980
        %v3035 = vpack.c.b16 %v3005, %v3003
        %v3036 = vpack.c.b16 %v3006, %v3004
        %v3037 = vpack.c.b16 %v3009, %v3007
        %v3038 = vpack.c.b16 %v3010, %v3008
        %v3039 = vpack.c.b16 %v3013, %v3011
        %v3040 = vpack.c.b16 %v3014, %v3012
        %v3041 = vpack.c.b16 %v3017, %v3015
        %v3042 = vpack.c.b16 %v3018, %v3016
        %v3043 = vpack.c.b16 %v3021, %v3019
        %v3044 = vpack.c.b16 %v3022, %v3020
        %v3045 = vpack.c.b16 %v3025, %v3023
        %v3046 = vpack.c.b16 %v3026, %v3024
        %v3047 = vpack.c.b16 %v3029, %v3027
        %v3048 = vpack.c.b16 %v3030, %v3028
        %v3049 = vpack.c.b16 %v3033, %v3031
        %v3050 = vpack.c.b16 %v3034, %v3032
        %3067 = vmatpush.bf16.msra.mxu0 %v3049
        %3068 = vmatpush.bf16.msra.mxu0 %v3047
        %3069 = vmatpush.bf16.msra.mxu0 %v3045
        %3070 = vmatpush.bf16.msra.mxu0 %v3043
        %3071 = vmatpush.bf16.msra.mxu0 %v3041
        %3072 = vmatpush.bf16.msra.mxu0 %v3039
        %3073 = vmatpush.bf16.msra.mxu0 %v3037
        %3074 = vmatpush.bf16.msra.mxu0 %v3035
        %3075 = vmatmul.bf16.gmra.mxu0 %v2957
        %v3076 = vpop.f32.mrf.mxu0
        %v3077 = vadd.f32 %v2983, %v3076
        %v3078 = vpop.f32.mrf.mxu0
        %v3079 = vadd.f32 %v2983, %v3078
        %3080 = vmatmul.bf16.gmra.mxu0 %v2958
        %v3081 = vpop.f32.mrf.mxu0
        %v3082 = vadd.f32 %v2983, %v3081
        %v3083 = vpop.f32.mrf.mxu0
        %v3084 = vadd.f32 %v2983, %v3083
        %3085 = vmatmul.bf16.gmra.mxu0 %v2959
        %v3086 = vpop.f32.mrf.mxu0
        %v3087 = vadd.f32 %v2983, %v3086
        %v3088 = vpop.f32.mrf.mxu0
        %v3089 = vadd.f32 %v2983, %v3088
        %3090 = vmatmul.bf16.gmra.mxu0 %v2960
        %v3091 = vpop.f32.mrf.mxu0
        %v3092 = vadd.f32 %v2983, %v3091
        %v3093 = vpop.f32.mrf.mxu0
        %v3094 = vadd.f32 %v2983, %v3093
        %3095 = vmatmul.bf16.gmra.mxu0 %v2961
        %v3096 = vpop.f32.mrf.mxu0
        %v3097 = vadd.f32 %v2983, %v3096
        %v3098 = vpop.f32.mrf.mxu0
        %v3099 = vadd.f32 %v2983, %v3098
        %3100 = vmatmul.bf16.gmra.mxu0 %v2962
        %v3101 = vpop.f32.mrf.mxu0
        %v3102 = vadd.f32 %v2983, %v3101
        %v3103 = vpop.f32.mrf.mxu0
        %v3104 = vadd.f32 %v2983, %v3103
        %3105 = vmatmul.bf16.gmra.mxu0 %v2963
        %v3106 = vpop.f32.mrf.mxu0
        %v3107 = vadd.f32 %v2983, %v3106
        %v3108 = vpop.f32.mrf.mxu0
        %v3109 = vadd.f32 %v2983, %v3108
        %3110 = vmatmul.bf16.gmra.mxu0 %v2964
        %v3111 = vpop.f32.mrf.mxu0
        %v3112 = vadd.f32 %v2983, %v3111
        %v3113 = vpop.f32.mrf.mxu0
        %v3114 = vadd.f32 %v2983, %v3113
        %3115 = vdwg.mxu0
        %3116 = vmatpush.bf16.msra.mxu0 %v3050
        %3117 = vmatpush.bf16.msra.mxu0 %v3048
        %3118 = vmatpush.bf16.msra.mxu0 %v3046
        %3119 = vmatpush.bf16.msra.mxu0 %v3044
        %3120 = vmatpush.bf16.msra.mxu0 %v3042
        %3121 = vmatpush.bf16.msra.mxu0 %v3040
        %3122 = vmatpush.bf16.msra.mxu0 %v3038
        %3123 = vmatpush.bf16.msra.mxu0 %v3036
        %3124 = vmatmul.bf16.gmra.mxu0 %v2957
        %v3125 = vpop.f32.mrf.mxu0
        %v3126 = vadd.f32 %v2984, %v3125
        %v3127 = vpop.f32.mrf.mxu0
        %v3128 = vadd.f32 %v2984, %v3127
        %3129 = vmatmul.bf16.gmra.mxu0 %v2958
        %v3130 = vpop.f32.mrf.mxu0
        %v3131 = vadd.f32 %v2984, %v3130
        %v3132 = vpop.f32.mrf.mxu0
        %v3133 = vadd.f32 %v2984, %v3132
        %3134 = vmatmul.bf16.gmra.mxu0 %v2959
        %v3135 = vpop.f32.mrf.mxu0
        %v3136 = vadd.f32 %v2984, %v3135
        %v3137 = vpop.f32.mrf.mxu0
        %v3138 = vadd.f32 %v2984, %v3137
        %3139 = vmatmul.bf16.gmra.mxu0 %v2960
        %v3140 = vpop.f32.mrf.mxu0
        %v3141 = vadd.f32 %v2984, %v3140
        %v3142 = vpop.f32.mrf.mxu0
        %v3143 = vadd.f32 %v2984, %v3142
        %3144 = vmatmul.bf16.gmra.mxu0 %v2961
        %v3145 = vpop.f32.mrf.mxu0
        %v3146 = vadd.f32 %v2984, %v3145
        %v3147 = vpop.f32.mrf.mxu0
        %v3148 = vadd.f32 %v2984, %v3147
        %3149 = vmatmul.bf16.gmra.mxu0 %v2962
        %v3150 = vpop.f32.mrf.mxu0
        %v3151 = vadd.f32 %v2984, %v3150
        %v3152 = vpop.f32.mrf.mxu0
        %v3153 = vadd.f32 %v2984, %v3152
        %3154 = vmatmul.bf16.gmra.mxu0 %v2963
        %v3155 = vpop.f32.mrf.mxu0
        %v3156 = vadd.f32 %v2984, %v3155
        %v3157 = vpop.f32.mrf.mxu0
        %v3158 = vadd.f32 %v2984, %v3157
        %3159 = vmatmul.bf16.gmra.mxu0 %v2964
        %v3160 = vpop.f32.mrf.mxu0
        %v3161 = vadd.f32 %v2984, %v3160
        %v3162 = vpop.f32.mrf.mxu0
        %v3163 = vadd.f32 %v2984, %v3162
        %3164 = vdwg.mxu0
        %v3165 = vmul.f32 %v3077, 1.702
        %v3166 = vmul.f32 %v3126, 1.702
        %v3167 = vmul.f32 %v3079, 1.702
        %v3168 = vmul.f32 %v3128, 1.702
        %v3169 = vmul.f32 %v3082, 1.702
        %v3170 = vmul.f32 %v3131, 1.702
        %v3171 = vmul.f32 %v3084, 1.702
        %v3172 = vmul.f32 %v3133, 1.702
        %v3173 = vmul.f32 %v3087, 1.702
        %v3174 = vmul.f32 %v3136, 1.702
        %v3175 = vmul.f32 %v3089, 1.702
        %v3176 = vmul.f32 %v3138, 1.702
        %v3177 = vmul.f32 %v3092, 1.702
        %v3178 = vmul.f32 %v3141, 1.702
        %v3179 = vmul.f32 %v3094, 1.702
        %v3180 = vmul.f32 %v3143, 1.702
        %v3181 = vmul.f32 %v3097, 1.702
        %v3182 = vmul.f32 %v3146, 1.702
        %v3183 = vmul.f32 %v3099, 1.702
        %v3184 = vmul.f32 %v3148, 1.702
        %v3185 = vmul.f32 %v3102, 1.702
        %v3186 = vmul.f32 %v3151, 1.702
        %v3187 = vmul.f32 %v3104, 1.702
        %v3188 = vmul.f32 %v3153, 1.702
        %v3189 = vmul.f32 %v3107, 1.702
        %v3190 = vmul.f32 %v3156, 1.702
        %v3191 = vmul.f32 %v3109, 1.702
        %v3192 = vmul.f32 %v3158, 1.702
        %v3193 = vmul.f32 %v3112, 1.702
        %v3194 = vmul.f32 %v3161, 1.702
        %v3195 = vmul.f32 %v3114, 1.702
        %v3196 = vmul.f32 %v3163, 1.702
        %v3197 = vxor.u32 %v3165, 2147483648
        %v3198 = vxor.u32 %v3166, 2147483648
        %v3199 = vxor.u32 %v3167, 2147483648
        %v3200 = vxor.u32 %v3168, 2147483648
        %v3201 = vxor.u32 %v3169, 2147483648
        %v3202 = vxor.u32 %v3170, 2147483648
        %v3203 = vxor.u32 %v3171, 2147483648
        %v3204 = vxor.u32 %v3172, 2147483648
        %v3205 = vxor.u32 %v3173, 2147483648
        %v3206 = vxor.u32 %v3174, 2147483648
        %v3207 = vxor.u32 %v3175, 2147483648
        %v3208 = vxor.u32 %v3176, 2147483648
        %v3209 = vxor.u32 %v3177, 2147483648
        %v3210 = vxor.u32 %v3178, 2147483648
        %v3211 = vxor.u32 %v3179, 2147483648
        %v3212 = vxor.u32 %v3180, 2147483648
        %v3213 = vxor.u32 %v3181, 2147483648
        %v3214 = vxor.u32 %v3182, 2147483648
        %v3215 = vxor.u32 %v3183, 2147483648
        %v3216 = vxor.u32 %v3184, 2147483648
        %v3217 = vxor.u32 %v3185, 2147483648
        %v3218 = vxor.u32 %v3186, 2147483648
        %v3219 = vxor.u32 %v3187, 2147483648
        %v3220 = vxor.u32 %v3188, 2147483648
        %v3221 = vxor.u32 %v3189, 2147483648
        %v3222 = vxor.u32 %v3190, 2147483648
        %v3223 = vxor.u32 %v3191, 2147483648
        %v3224 = vxor.u32 %v3192, 2147483648
        %v3225 = vxor.u32 %v3193, 2147483648
        %v3226 = vxor.u32 %v3194, 2147483648
        %v3227 = vxor.u32 %v3195, 2147483648
        %v3228 = vxor.u32 %v3196, 2147483648
        %v3229 = vmul.f32 %v3197, 1.442695
        %v3230 = vpow.pop %v3229
        %v3231 = vmul.f32 %v3198, 1.442695
        %v3232 = vpow.pop %v3231
        %v3233 = vmul.f32 %v3199, 1.442695
        %v3234 = vpow.pop %v3233
        %v3235 = vmul.f32 %v3200, 1.442695
        %v3236 = vpow.pop %v3235
        %v3237 = vmul.f32 %v3201, 1.442695
        %v3238 = vpow.pop %v3237
        %v3239 = vmul.f32 %v3202, 1.442695
        %v3240 = vpow.pop %v3239
        %v3241 = vmul.f32 %v3203, 1.442695
        %v3242 = vpow.pop %v3241
        %v3243 = vmul.f32 %v3204, 1.442695
        %v3244 = vpow.pop %v3243
        %v3245 = vmul.f32 %v3205, 1.442695
        %v3246 = vpow.pop %v3245
        %v3247 = vmul.f32 %v3206, 1.442695
        %v3248 = vpow.pop %v3247
        %v3249 = vmul.f32 %v3207, 1.442695
        %v3250 = vpow.pop %v3249
        %v3251 = vmul.f32 %v3208, 1.442695
        %v3252 = vpow.pop %v3251
        %v3253 = vmul.f32 %v3209, 1.442695
        %v3254 = vpow.pop %v3253
        %v3255 = vmul.f32 %v3210, 1.442695
        %v3256 = vpow.pop %v3255
        %v3257 = vmul.f32 %v3211, 1.442695
        %v3258 = vpow.pop %v3257
        %v3259 = vmul.f32 %v3212, 1.442695
        %v3260 = vpow.pop %v3259
        %v3261 = vmul.f32 %v3213, 1.442695
        %v3262 = vpow.pop %v3261
        %v3263 = vmul.f32 %v3214, 1.442695
        %v3264 = vpow.pop %v3263
        %v3265 = vmul.f32 %v3215, 1.442695
        %v3266 = vpow.pop %v3265
        %v3267 = vmul.f32 %v3216, 1.442695
        %v3268 = vpow.pop %v3267
        %v3269 = vmul.f32 %v3217, 1.442695
        %v3270 = vpow.pop %v3269
        %v3271 = vmul.f32 %v3218, 1.442695
        %v3272 = vpow.pop %v3271
        %v3273 = vmul.f32 %v3219, 1.442695
        %v3274 = vpow.pop %v3273
        %v3275 = vmul.f32 %v3220, 1.442695
        %v3276 = vpow.pop %v3275
        %v3277 = vmul.f32 %v3221, 1.442695
        %v3278 = vpow.pop %v3277
        %v3279 = vmul.f32 %v3222, 1.442695
        %v3280 = vpow.pop %v3279
        %v3281 = vmul.f32 %v3223, 1.442695
        %v3282 = vpow.pop %v3281
        %v3283 = vmul.f32 %v3224, 1.442695
        %v3284 = vpow.pop %v3283
        %v3285 = vmul.f32 %v3225, 1.442695
        %v3286 = vpow.pop %v3285
        %v3287 = vmul.f32 %v3226, 1.442695
        %v3288 = vpow.pop %v3287
        %v3289 = vmul.f32 %v3227, 1.442695
        %v3290 = vpow.pop %v3289
        %v3291 = vmul.f32 %v3228, 1.442695
        %v3292 = vpow.pop %v3291
        %v3293 = vadd.f32 %v3230, 1.0
        %v3294 = vadd.f32 %v3232, 1.0
        %v3295 = vadd.f32 %v3234, 1.0
        %v3296 = vadd.f32 %v3236, 1.0
        %v3297 = vadd.f32 %v3238, 1.0
        %v3298 = vadd.f32 %v3240, 1.0
        %v3299 = vadd.f32 %v3242, 1.0
        %v3300 = vadd.f32 %v3244, 1.0
        %v3301 = vadd.f32 %v3246, 1.0
        %v3302 = vadd.f32 %v3248, 1.0
        %v3303 = vadd.f32 %v3250, 1.0
        %v3304 = vadd.f32 %v3252, 1.0
        %v3305 = vadd.f32 %v3254, 1.0
        %v3306 = vadd.f32 %v3256, 1.0
        %v3307 = vadd.f32 %v3258, 1.0
        %v3308 = vadd.f32 %v3260, 1.0
        %v3309 = vadd.f32 %v3262, 1.0
        %v3310 = vadd.f32 %v3264, 1.0
        %v3311 = vadd.f32 %v3266, 1.0
        %v3312 = vadd.f32 %v3268, 1.0
        %v3313 = vadd.f32 %v3270, 1.0
        %v3314 = vadd.f32 %v3272, 1.0
        %v3315 = vadd.f32 %v3274, 1.0
        %v3316 = vadd.f32 %v3276, 1.0
        %v3317 = vadd.f32 %v3278, 1.0
        %v3318 = vadd.f32 %v3280, 1.0
        %v3319 = vadd.f32 %v3282, 1.0
        %v3320 = vadd.f32 %v3284, 1.0
        %v3321 = vadd.f32 %v3286, 1.0
        %v3322 = vadd.f32 %v3288, 1.0
        %v3323 = vadd.f32 %v3290, 1.0
        %v3324 = vadd.f32 %v3292, 1.0
        %v3325 = vrcp.pop %v3293
        %v3326 = vmul.f32 %v3293, %v3325
        %v3327 = vsub.f32 1.0, %v3326
        %v3328 = vmul.f32 %v3325, %v3327
        %v3329 = vadd.f32 %v3325, %v3328
        %vm3330 = vweird.f32 %v3293
        %vm3331 = vweird.f32 %v3325
        %vm3332 = vmor %vm3330, %vm3331
        %v3333 = vsel %vm3332, %v3325, %v3329
        %v3334 = vand.u32 2147483647, %v3293
        %vm3335 = vcmp.eq.f32.partialorder %v3334, 8.507059e+37
        %v3336 = vand.u32 %v3293, 2147483648
        %v3337 = vor.u32 1.1754944e-38, %v3336
        %v3338 = vsel %vm3335, %v3337, %v3333
        %v3339 = vmul.f32 1.0, %v3338
        %v3340 = vrcp.pop %v3294
        %v3341 = vmul.f32 %v3294, %v3340
        %v3342 = vsub.f32 1.0, %v3341
        %v3343 = vmul.f32 %v3340, %v3342
        %v3344 = vadd.f32 %v3340, %v3343
        %vm3345 = vweird.f32 %v3294
        %vm3346 = vweird.f32 %v3340
        %vm3347 = vmor %vm3345, %vm3346
        %v3348 = vsel %vm3347, %v3340, %v3344
        %v3349 = vand.u32 2147483647, %v3294
        %vm3350 = vcmp.eq.f32.partialorder %v3349, 8.507059e+37
        %v3351 = vand.u32 %v3294, 2147483648
        %v3352 = vor.u32 1.1754944e-38, %v3351
        %v3353 = vsel %vm3350, %v3352, %v3348
        %v3354 = vmul.f32 1.0, %v3353
        %v3355 = vrcp.pop %v3295
        %v3356 = vmul.f32 %v3295, %v3355
        %v3357 = vsub.f32 1.0, %v3356
        %v3358 = vmul.f32 %v3355, %v3357
        %v3359 = vadd.f32 %v3355, %v3358
        %vm3360 = vweird.f32 %v3295
        %vm3361 = vweird.f32 %v3355
        %vm3362 = vmor %vm3360, %vm3361
        %v3363 = vsel %vm3362, %v3355, %v3359
        %v3364 = vand.u32 2147483647, %v3295
        %vm3365 = vcmp.eq.f32.partialorder %v3364, 8.507059e+37
        %v3366 = vand.u32 %v3295, 2147483648
        %v3367 = vor.u32 1.1754944e-38, %v3366
        %v3368 = vsel %vm3365, %v3367, %v3363
        %v3369 = vmul.f32 1.0, %v3368
        %v3370 = vrcp.pop %v3296
        %v3371 = vmul.f32 %v3296, %v3370
        %v3372 = vsub.f32 1.0, %v3371
        %v3373 = vmul.f32 %v3370, %v3372
        %v3374 = vadd.f32 %v3370, %v3373
        %vm3375 = vweird.f32 %v3296
        %vm3376 = vweird.f32 %v3370
        %vm3377 = vmor %vm3375, %vm3376
        %v3378 = vsel %vm3377, %v3370, %v3374
        %v3379 = vand.u32 2147483647, %v3296
        %vm3380 = vcmp.eq.f32.partialorder %v3379, 8.507059e+37
        %v3381 = vand.u32 %v3296, 2147483648
        %v3382 = vor.u32 1.1754944e-38, %v3381
        %v3383 = vsel %vm3380, %v3382, %v3378
        %v3384 = vmul.f32 1.0, %v3383
        %v3385 = vrcp.pop %v3297
        %v3386 = vmul.f32 %v3297, %v3385
        %v3387 = vsub.f32 1.0, %v3386
        %v3388 = vmul.f32 %v3385, %v3387
        %v3389 = vadd.f32 %v3385, %v3388
        %vm3390 = vweird.f32 %v3297
        %vm3391 = vweird.f32 %v3385
        %vm3392 = vmor %vm3390, %vm3391
        %v3393 = vsel %vm3392, %v3385, %v3389
        %v3394 = vand.u32 2147483647, %v3297
        %vm3395 = vcmp.eq.f32.partialorder %v3394, 8.507059e+37
        %v3396 = vand.u32 %v3297, 2147483648
        %v3397 = vor.u32 1.1754944e-38, %v3396
        %v3398 = vsel %vm3395, %v3397, %v3393
        %v3399 = vmul.f32 1.0, %v3398
        %v3400 = vrcp.pop %v3298
        %v3401 = vmul.f32 %v3298, %v3400
        %v3402 = vsub.f32 1.0, %v3401
        %v3403 = vmul.f32 %v3400, %v3402
        %v3404 = vadd.f32 %v3400, %v3403
        %vm3405 = vweird.f32 %v3298
        %vm3406 = vweird.f32 %v3400
        %vm3407 = vmor %vm3405, %vm3406
        %v3408 = vsel %vm3407, %v3400, %v3404
        %v3409 = vand.u32 2147483647, %v3298
        %vm3410 = vcmp.eq.f32.partialorder %v3409, 8.507059e+37
        %v3411 = vand.u32 %v3298, 2147483648
        %v3412 = vor.u32 1.1754944e-38, %v3411
        %v3413 = vsel %vm3410, %v3412, %v3408
        %v3414 = vmul.f32 1.0, %v3413
        %v3415 = vrcp.pop %v3299
        %v3416 = vmul.f32 %v3299, %v3415
        %v3417 = vsub.f32 1.0, %v3416
        %v3418 = vmul.f32 %v3415, %v3417
        %v3419 = vadd.f32 %v3415, %v3418
        %vm3420 = vweird.f32 %v3299
        %vm3421 = vweird.f32 %v3415
        %vm3422 = vmor %vm3420, %vm3421
        %v3423 = vsel %vm3422, %v3415, %v3419
        %v3424 = vand.u32 2147483647, %v3299
        %vm3425 = vcmp.eq.f32.partialorder %v3424, 8.507059e+37
        %v3426 = vand.u32 %v3299, 2147483648
        %v3427 = vor.u32 1.1754944e-38, %v3426
        %v3428 = vsel %vm3425, %v3427, %v3423
        %v3429 = vmul.f32 1.0, %v3428
        %v3430 = vrcp.pop %v3300
        %v3431 = vmul.f32 %v3300, %v3430
        %v3432 = vsub.f32 1.0, %v3431
        %v3433 = vmul.f32 %v3430, %v3432
        %v3434 = vadd.f32 %v3430, %v3433
        %vm3435 = vweird.f32 %v3300
        %vm3436 = vweird.f32 %v3430
        %vm3437 = vmor %vm3435, %vm3436
        %v3438 = vsel %vm3437, %v3430, %v3434
        %v3439 = vand.u32 2147483647, %v3300
        %vm3440 = vcmp.eq.f32.partialorder %v3439, 8.507059e+37
        %v3441 = vand.u32 %v3300, 2147483648
        %v3442 = vor.u32 1.1754944e-38, %v3441
        %v3443 = vsel %vm3440, %v3442, %v3438
        %v3444 = vmul.f32 1.0, %v3443
        %v3445 = vrcp.pop %v3301
        %v3446 = vmul.f32 %v3301, %v3445
        %v3447 = vsub.f32 1.0, %v3446
        %v3448 = vmul.f32 %v3445, %v3447
        %v3449 = vadd.f32 %v3445, %v3448
        %vm3450 = vweird.f32 %v3301
        %vm3451 = vweird.f32 %v3445
        %vm3452 = vmor %vm3450, %vm3451
        %v3453 = vsel %vm3452, %v3445, %v3449
        %v3454 = vand.u32 2147483647, %v3301
        %vm3455 = vcmp.eq.f32.partialorder %v3454, 8.507059e+37
        %v3456 = vand.u32 %v3301, 2147483648
        %v3457 = vor.u32 1.1754944e-38, %v3456
        %v3458 = vsel %vm3455, %v3457, %v3453
        %v3459 = vmul.f32 1.0, %v3458
        %v3460 = vrcp.pop %v3302
        %v3461 = vmul.f32 %v3302, %v3460
        %v3462 = vsub.f32 1.0, %v3461
        %v3463 = vmul.f32 %v3460, %v3462
        %v3464 = vadd.f32 %v3460, %v3463
        %vm3465 = vweird.f32 %v3302
        %vm3466 = vweird.f32 %v3460
        %vm3467 = vmor %vm3465, %vm3466
        %v3468 = vsel %vm3467, %v3460, %v3464
        %v3469 = vand.u32 2147483647, %v3302
        %vm3470 = vcmp.eq.f32.partialorder %v3469, 8.507059e+37
        %v3471 = vand.u32 %v3302, 2147483648
        %v3472 = vor.u32 1.1754944e-38, %v3471
        %v3473 = vsel %vm3470, %v3472, %v3468
        %v3474 = vmul.f32 1.0, %v3473
        %v3475 = vrcp.pop %v3303
        %v3476 = vmul.f32 %v3303, %v3475
        %v3477 = vsub.f32 1.0, %v3476
        %v3478 = vmul.f32 %v3475, %v3477
        %v3479 = vadd.f32 %v3475, %v3478
        %vm3480 = vweird.f32 %v3303
        %vm3481 = vweird.f32 %v3475
        %vm3482 = vmor %vm3480, %vm3481
        %v3483 = vsel %vm3482, %v3475, %v3479
        %v3484 = vand.u32 2147483647, %v3303
        %vm3485 = vcmp.eq.f32.partialorder %v3484, 8.507059e+37
        %v3486 = vand.u32 %v3303, 2147483648
        %v3487 = vor.u32 1.1754944e-38, %v3486
        %v3488 = vsel %vm3485, %v3487, %v3483
        %v3489 = vmul.f32 1.0, %v3488
        %v3490 = vrcp.pop %v3304
        %v3491 = vmul.f32 %v3304, %v3490
        %v3492 = vsub.f32 1.0, %v3491
        %v3493 = vmul.f32 %v3490, %v3492
        %v3494 = vadd.f32 %v3490, %v3493
        %vm3495 = vweird.f32 %v3304
        %vm3496 = vweird.f32 %v3490
        %vm3497 = vmor %vm3495, %vm3496
        %v3498 = vsel %vm3497, %v3490, %v3494
        %v3499 = vand.u32 2147483647, %v3304
        %vm3500 = vcmp.eq.f32.partialorder %v3499, 8.507059e+37
        %v3501 = vand.u32 %v3304, 2147483648
        %v3502 = vor.u32 1.1754944e-38, %v3501
        %v3503 = vsel %vm3500, %v3502, %v3498
        %v3504 = vmul.f32 1.0, %v3503
        %v3505 = vrcp.pop %v3305
        %v3506 = vmul.f32 %v3305, %v3505
        %v3507 = vsub.f32 1.0, %v3506
        %v3508 = vmul.f32 %v3505, %v3507
        %v3509 = vadd.f32 %v3505, %v3508
        %vm3510 = vweird.f32 %v3305
        %vm3511 = vweird.f32 %v3505
        %vm3512 = vmor %vm3510, %vm3511
        %v3513 = vsel %vm3512, %v3505, %v3509
        %v3514 = vand.u32 2147483647, %v3305
        %vm3515 = vcmp.eq.f32.partialorder %v3514, 8.507059e+37
        %v3516 = vand.u32 %v3305, 2147483648
        %v3517 = vor.u32 1.1754944e-38, %v3516
        %v3518 = vsel %vm3515, %v3517, %v3513
        %v3519 = vmul.f32 1.0, %v3518
        %v3520 = vrcp.pop %v3306
        %v3521 = vmul.f32 %v3306, %v3520
        %v3522 = vsub.f32 1.0, %v3521
        %v3523 = vmul.f32 %v3520, %v3522
        %v3524 = vadd.f32 %v3520, %v3523
        %vm3525 = vweird.f32 %v3306
        %vm3526 = vweird.f32 %v3520
        %vm3527 = vmor %vm3525, %vm3526
        %v3528 = vsel %vm3527, %v3520, %v3524
        %v3529 = vand.u32 2147483647, %v3306
        %vm3530 = vcmp.eq.f32.partialorder %v3529, 8.507059e+37
        %v3531 = vand.u32 %v3306, 2147483648
        %v3532 = vor.u32 1.1754944e-38, %v3531
        %v3533 = vsel %vm3530, %v3532, %v3528
        %v3534 = vmul.f32 1.0, %v3533
        %v3535 = vrcp.pop %v3307
        %v3536 = vmul.f32 %v3307, %v3535
        %v3537 = vsub.f32 1.0, %v3536
        %v3538 = vmul.f32 %v3535, %v3537
        %v3539 = vadd.f32 %v3535, %v3538
        %vm3540 = vweird.f32 %v3307
        %vm3541 = vweird.f32 %v3535
        %vm3542 = vmor %vm3540, %vm3541
        %v3543 = vsel %vm3542, %v3535, %v3539
        %v3544 = vand.u32 2147483647, %v3307
        %vm3545 = vcmp.eq.f32.partialorder %v3544, 8.507059e+37
        %v3546 = vand.u32 %v3307, 2147483648
        %v3547 = vor.u32 1.1754944e-38, %v3546
        %v3548 = vsel %vm3545, %v3547, %v3543
        %v3549 = vmul.f32 1.0, %v3548
        %v3550 = vrcp.pop %v3308
        %v3551 = vmul.f32 %v3308, %v3550
        %v3552 = vsub.f32 1.0, %v3551
        %v3553 = vmul.f32 %v3550, %v3552
        %v3554 = vadd.f32 %v3550, %v3553
        %vm3555 = vweird.f32 %v3308
        %vm3556 = vweird.f32 %v3550
        %vm3557 = vmor %vm3555, %vm3556
        %v3558 = vsel %vm3557, %v3550, %v3554
        %v3559 = vand.u32 2147483647, %v3308
        %vm3560 = vcmp.eq.f32.partialorder %v3559, 8.507059e+37
        %v3561 = vand.u32 %v3308, 2147483648
        %v3562 = vor.u32 1.1754944e-38, %v3561
        %v3563 = vsel %vm3560, %v3562, %v3558
        %v3564 = vmul.f32 1.0, %v3563
        %v3565 = vrcp.pop %v3309
        %v3566 = vmul.f32 %v3309, %v3565
        %v3567 = vsub.f32 1.0, %v3566
        %v3568 = vmul.f32 %v3565, %v3567
        %v3569 = vadd.f32 %v3565, %v3568
        %vm3570 = vweird.f32 %v3309
        %vm3571 = vweird.f32 %v3565
        %vm3572 = vmor %vm3570, %vm3571
        %v3573 = vsel %vm3572, %v3565, %v3569
        %v3574 = vand.u32 2147483647, %v3309
        %vm3575 = vcmp.eq.f32.partialorder %v3574, 8.507059e+37
        %v3576 = vand.u32 %v3309, 2147483648
        %v3577 = vor.u32 1.1754944e-38, %v3576
        %v3578 = vsel %vm3575, %v3577, %v3573
        %v3579 = vmul.f32 1.0, %v3578
        %v3580 = vrcp.pop %v3310
        %v3581 = vmul.f32 %v3310, %v3580
        %v3582 = vsub.f32 1.0, %v3581
        %v3583 = vmul.f32 %v3580, %v3582
        %v3584 = vadd.f32 %v3580, %v3583
        %vm3585 = vweird.f32 %v3310
        %vm3586 = vweird.f32 %v3580
        %vm3587 = vmor %vm3585, %vm3586
        %v3588 = vsel %vm3587, %v3580, %v3584
        %v3589 = vand.u32 2147483647, %v3310
        %vm3590 = vcmp.eq.f32.partialorder %v3589, 8.507059e+37
        %v3591 = vand.u32 %v3310, 2147483648
        %v3592 = vor.u32 1.1754944e-38, %v3591
        %v3593 = vsel %vm3590, %v3592, %v3588
        %v3594 = vmul.f32 1.0, %v3593
        %v3595 = vrcp.pop %v3311
        %v3596 = vmul.f32 %v3311, %v3595
        %v3597 = vsub.f32 1.0, %v3596
        %v3598 = vmul.f32 %v3595, %v3597
        %v3599 = vadd.f32 %v3595, %v3598
        %vm3600 = vweird.f32 %v3311
        %vm3601 = vweird.f32 %v3595
        %vm3602 = vmor %vm3600, %vm3601
        %v3603 = vsel %vm3602, %v3595, %v3599
        %v3604 = vand.u32 2147483647, %v3311
        %vm3605 = vcmp.eq.f32.partialorder %v3604, 8.507059e+37
        %v3606 = vand.u32 %v3311, 2147483648
        %v3607 = vor.u32 1.1754944e-38, %v3606
        %v3608 = vsel %vm3605, %v3607, %v3603
        %v3609 = vmul.f32 1.0, %v3608
        %v3610 = vrcp.pop %v3312
        %v3611 = vmul.f32 %v3312, %v3610
        %v3612 = vsub.f32 1.0, %v3611
        %v3613 = vmul.f32 %v3610, %v3612
        %v3614 = vadd.f32 %v3610, %v3613
        %vm3615 = vweird.f32 %v3312
        %vm3616 = vweird.f32 %v3610
        %vm3617 = vmor %vm3615, %vm3616
        %v3618 = vsel %vm3617, %v3610, %v3614
        %v3619 = vand.u32 2147483647, %v3312
        %vm3620 = vcmp.eq.f32.partialorder %v3619, 8.507059e+37
        %v3621 = vand.u32 %v3312, 2147483648
        %v3622 = vor.u32 1.1754944e-38, %v3621
        %v3623 = vsel %vm3620, %v3622, %v3618
        %v3624 = vmul.f32 1.0, %v3623
        %v3625 = vrcp.pop %v3313
        %v3626 = vmul.f32 %v3313, %v3625
        %v3627 = vsub.f32 1.0, %v3626
        %v3628 = vmul.f32 %v3625, %v3627
        %v3629 = vadd.f32 %v3625, %v3628
        %vm3630 = vweird.f32 %v3313
        %vm3631 = vweird.f32 %v3625
        %vm3632 = vmor %vm3630, %vm3631
        %v3633 = vsel %vm3632, %v3625, %v3629
        %v3634 = vand.u32 2147483647, %v3313
        %vm3635 = vcmp.eq.f32.partialorder %v3634, 8.507059e+37
        %v3636 = vand.u32 %v3313, 2147483648
        %v3637 = vor.u32 1.1754944e-38, %v3636
        %v3638 = vsel %vm3635, %v3637, %v3633
        %v3639 = vmul.f32 1.0, %v3638
        %v3640 = vrcp.pop %v3314
        %v3641 = vmul.f32 %v3314, %v3640
        %v3642 = vsub.f32 1.0, %v3641
        %v3643 = vmul.f32 %v3640, %v3642
        %v3644 = vadd.f32 %v3640, %v3643
        %vm3645 = vweird.f32 %v3314
        %vm3646 = vweird.f32 %v3640
        %vm3647 = vmor %vm3645, %vm3646
        %v3648 = vsel %vm3647, %v3640, %v3644
        %v3649 = vand.u32 2147483647, %v3314
        %vm3650 = vcmp.eq.f32.partialorder %v3649, 8.507059e+37
        %v3651 = vand.u32 %v3314, 2147483648
        %v3652 = vor.u32 1.1754944e-38, %v3651
        %v3653 = vsel %vm3650, %v3652, %v3648
        %v3654 = vmul.f32 1.0, %v3653
        %v3655 = vrcp.pop %v3315
        %v3656 = vmul.f32 %v3315, %v3655
        %v3657 = vsub.f32 1.0, %v3656
        %v3658 = vmul.f32 %v3655, %v3657
        %v3659 = vadd.f32 %v3655, %v3658
        %vm3660 = vweird.f32 %v3315
        %vm3661 = vweird.f32 %v3655
        %vm3662 = vmor %vm3660, %vm3661
        %v3663 = vsel %vm3662, %v3655, %v3659
        %v3664 = vand.u32 2147483647, %v3315
        %vm3665 = vcmp.eq.f32.partialorder %v3664, 8.507059e+37
        %v3666 = vand.u32 %v3315, 2147483648
        %v3667 = vor.u32 1.1754944e-38, %v3666
        %v3668 = vsel %vm3665, %v3667, %v3663
        %v3669 = vmul.f32 1.0, %v3668
        %v3670 = vrcp.pop %v3316
        %v3671 = vmul.f32 %v3316, %v3670
        %v3672 = vsub.f32 1.0, %v3671
        %v3673 = vmul.f32 %v3670, %v3672
        %v3674 = vadd.f32 %v3670, %v3673
        %vm3675 = vweird.f32 %v3316
        %vm3676 = vweird.f32 %v3670
        %vm3677 = vmor %vm3675, %vm3676
        %v3678 = vsel %vm3677, %v3670, %v3674
        %v3679 = vand.u32 2147483647, %v3316
        %vm3680 = vcmp.eq.f32.partialorder %v3679, 8.507059e+37
        %v3681 = vand.u32 %v3316, 2147483648
        %v3682 = vor.u32 1.1754944e-38, %v3681
        %v3683 = vsel %vm3680, %v3682, %v3678
        %v3684 = vmul.f32 1.0, %v3683
        %v3685 = vrcp.pop %v3317
        %v3686 = vmul.f32 %v3317, %v3685
        %v3687 = vsub.f32 1.0, %v3686
        %v3688 = vmul.f32 %v3685, %v3687
        %v3689 = vadd.f32 %v3685, %v3688
        %vm3690 = vweird.f32 %v3317
        %vm3691 = vweird.f32 %v3685
        %vm3692 = vmor %vm3690, %vm3691
        %v3693 = vsel %vm3692, %v3685, %v3689
        %v3694 = vand.u32 2147483647, %v3317
        %vm3695 = vcmp.eq.f32.partialorder %v3694, 8.507059e+37
        %v3696 = vand.u32 %v3317, 2147483648
        %v3697 = vor.u32 1.1754944e-38, %v3696
        %v3698 = vsel %vm3695, %v3697, %v3693
        %v3699 = vmul.f32 1.0, %v3698
        %v3700 = vrcp.pop %v3318
        %v3701 = vmul.f32 %v3318, %v3700
        %v3702 = vsub.f32 1.0, %v3701
        %v3703 = vmul.f32 %v3700, %v3702
        %v3704 = vadd.f32 %v3700, %v3703
        %vm3705 = vweird.f32 %v3318
        %vm3706 = vweird.f32 %v3700
        %vm3707 = vmor %vm3705, %vm3706
        %v3708 = vsel %vm3707, %v3700, %v3704
        %v3709 = vand.u32 2147483647, %v3318
        %vm3710 = vcmp.eq.f32.partialorder %v3709, 8.507059e+37
        %v3711 = vand.u32 %v3318, 2147483648
        %v3712 = vor.u32 1.1754944e-38, %v3711
        %v3713 = vsel %vm3710, %v3712, %v3708
        %v3714 = vmul.f32 1.0, %v3713
        %v3715 = vrcp.pop %v3319
        %v3716 = vmul.f32 %v3319, %v3715
        %v3717 = vsub.f32 1.0, %v3716
        %v3718 = vmul.f32 %v3715, %v3717
        %v3719 = vadd.f32 %v3715, %v3718
        %vm3720 = vweird.f32 %v3319
        %vm3721 = vweird.f32 %v3715
        %vm3722 = vmor %vm3720, %vm3721
        %v3723 = vsel %vm3722, %v3715, %v3719
        %v3724 = vand.u32 2147483647, %v3319
        %vm3725 = vcmp.eq.f32.partialorder %v3724, 8.507059e+37
        %v3726 = vand.u32 %v3319, 2147483648
        %v3727 = vor.u32 1.1754944e-38, %v3726
        %v3728 = vsel %vm3725, %v3727, %v3723
        %v3729 = vmul.f32 1.0, %v3728
        %v3730 = vrcp.pop %v3320
        %v3731 = vmul.f32 %v3320, %v3730
        %v3732 = vsub.f32 1.0, %v3731
        %v3733 = vmul.f32 %v3730, %v3732
        %v3734 = vadd.f32 %v3730, %v3733
        %vm3735 = vweird.f32 %v3320
        %vm3736 = vweird.f32 %v3730
        %vm3737 = vmor %vm3735, %vm3736
        %v3738 = vsel %vm3737, %v3730, %v3734
        %v3739 = vand.u32 2147483647, %v3320
        %vm3740 = vcmp.eq.f32.partialorder %v3739, 8.507059e+37
        %v3741 = vand.u32 %v3320, 2147483648
        %v3742 = vor.u32 1.1754944e-38, %v3741
        %v3743 = vsel %vm3740, %v3742, %v3738
        %v3744 = vmul.f32 1.0, %v3743
        %v3745 = vrcp.pop %v3321
        %v3746 = vmul.f32 %v3321, %v3745
        %v3747 = vsub.f32 1.0, %v3746
        %v3748 = vmul.f32 %v3745, %v3747
        %v3749 = vadd.f32 %v3745, %v3748
        %vm3750 = vweird.f32 %v3321
        %vm3751 = vweird.f32 %v3745
        %vm3752 = vmor %vm3750, %vm3751
        %v3753 = vsel %vm3752, %v3745, %v3749
        %v3754 = vand.u32 2147483647, %v3321
        %vm3755 = vcmp.eq.f32.partialorder %v3754, 8.507059e+37
        %v3756 = vand.u32 %v3321, 2147483648
        %v3757 = vor.u32 1.1754944e-38, %v3756
        %v3758 = vsel %vm3755, %v3757, %v3753
        %v3759 = vmul.f32 1.0, %v3758
        %v3760 = vrcp.pop %v3322
        %v3761 = vmul.f32 %v3322, %v3760
        %v3762 = vsub.f32 1.0, %v3761
        %v3763 = vmul.f32 %v3760, %v3762
        %v3764 = vadd.f32 %v3760, %v3763
        %vm3765 = vweird.f32 %v3322
        %vm3766 = vweird.f32 %v3760
        %vm3767 = vmor %vm3765, %vm3766
        %v3768 = vsel %vm3767, %v3760, %v3764
        %v3769 = vand.u32 2147483647, %v3322
        %vm3770 = vcmp.eq.f32.partialorder %v3769, 8.507059e+37
        %v3771 = vand.u32 %v3322, 2147483648
        %v3772 = vor.u32 1.1754944e-38, %v3771
        %v3773 = vsel %vm3770, %v3772, %v3768
        %v3774 = vmul.f32 1.0, %v3773
        %v3775 = vrcp.pop %v3323
        %v3776 = vmul.f32 %v3323, %v3775
        %v3777 = vsub.f32 1.0, %v3776
        %v3778 = vmul.f32 %v3775, %v3777
        %v3779 = vadd.f32 %v3775, %v3778
        %vm3780 = vweird.f32 %v3323
        %vm3781 = vweird.f32 %v3775
        %vm3782 = vmor %vm3780, %vm3781
        %v3783 = vsel %vm3782, %v3775, %v3779
        %v3784 = vand.u32 2147483647, %v3323
        %vm3785 = vcmp.eq.f32.partialorder %v3784, 8.507059e+37
        %v3786 = vand.u32 %v3323, 2147483648
        %v3787 = vor.u32 1.1754944e-38, %v3786
        %v3788 = vsel %vm3785, %v3787, %v3783
        %v3789 = vmul.f32 1.0, %v3788
        %v3790 = vrcp.pop %v3324
        %v3791 = vmul.f32 %v3324, %v3790
        %v3792 = vsub.f32 1.0, %v3791
        %v3793 = vmul.f32 %v3790, %v3792
        %v3794 = vadd.f32 %v3790, %v3793
        %vm3795 = vweird.f32 %v3324
        %vm3796 = vweird.f32 %v3790
        %vm3797 = vmor %vm3795, %vm3796
        %v3798 = vsel %vm3797, %v3790, %v3794
        %v3799 = vand.u32 2147483647, %v3324
        %vm3800 = vcmp.eq.f32.partialorder %v3799, 8.507059e+37
        %v3801 = vand.u32 %v3324, 2147483648
        %v3802 = vor.u32 1.1754944e-38, %v3801
        %v3803 = vsel %vm3800, %v3802, %v3798
        %v3804 = vmul.f32 1.0, %v3803
        %v3805 = vmul.f32 %v3077, %v3339
        %v3806 = vmul.f32 %v3126, %v3354
        %v3807 = vmul.f32 %v3079, %v3369
        %v3808 = vmul.f32 %v3128, %v3384
        %v3809 = vmul.f32 %v3082, %v3399
        %v3810 = vmul.f32 %v3131, %v3414
        %v3811 = vmul.f32 %v3084, %v3429
        %v3812 = vmul.f32 %v3133, %v3444
        %v3813 = vmul.f32 %v3087, %v3459
        %v3814 = vmul.f32 %v3136, %v3474
        %v3815 = vmul.f32 %v3089, %v3489
        %v3816 = vmul.f32 %v3138, %v3504
        %v3817 = vmul.f32 %v3092, %v3519
        %v3818 = vmul.f32 %v3141, %v3534
        %v3819 = vmul.f32 %v3094, %v3549
        %v3820 = vmul.f32 %v3143, %v3564
        %v3821 = vmul.f32 %v3097, %v3579
        %v3822 = vmul.f32 %v3146, %v3594
        %v3823 = vmul.f32 %v3099, %v3609
        %v3824 = vmul.f32 %v3148, %v3624
        %v3825 = vmul.f32 %v3102, %v3639
        %v3826 = vmul.f32 %v3151, %v3654
        %v3827 = vmul.f32 %v3104, %v3669
        %v3828 = vmul.f32 %v3153, %v3684
        %v3829 = vmul.f32 %v3107, %v3699
        %v3830 = vmul.f32 %v3156, %v3714
        %v3831 = vmul.f32 %v3109, %v3729
        %v3832 = vmul.f32 %v3158, %v3744
        %v3833 = vmul.f32 %v3112, %v3759
        %v3834 = vmul.f32 %v3161, %v3774
        %v3835 = vmul.f32 %v3114, %v3789
        %v3836 = vmul.f32 %v3163, %v3804
        %v3837 = vpack.c.bf16 %v3807, %v3805
        %v3838 = vpack.c.bf16 %v3808, %v3806
        %v3839 = vpack.c.bf16 %v3811, %v3809
        %v3840 = vpack.c.bf16 %v3812, %v3810
        %v3841 = vpack.c.bf16 %v3815, %v3813
        %v3842 = vpack.c.bf16 %v3816, %v3814
        %v3843 = vpack.c.bf16 %v3819, %v3817
        %v3844 = vpack.c.bf16 %v3820, %v3818
        %v3845 = vpack.c.bf16 %v3823, %v3821
        %v3846 = vpack.c.bf16 %v3824, %v3822
        %v3847 = vpack.c.bf16 %v3827, %v3825
        %v3848 = vpack.c.bf16 %v3828, %v3826
        %v3849 = vpack.c.bf16 %v3831, %v3829
        %v3850 = vpack.c.bf16 %v3832, %v3830
        %v3851 = vpack.c.bf16 %v3835, %v3833
        %v3852 = vpack.c.bf16 %v3836, %v3834
        %v3853 = vld [vmem:[%s787] sm:$0xf]
        %v3854 = vld [vmem:[%s787 + $0x4] sm:$0xf]
        %v3855 = vld [vmem:[%s787 + $0x8] sm:$0xf]
        %v3856 = vld [vmem:[%s787 + $0xc] sm:$0xf]
        %v3857 = vld [vmem:[%s787 + $0x10] sm:$0xf]
        %v3858 = vld [vmem:[%s787 + $0x14] sm:$0xf]
        %v3859 = vld [vmem:[%s787 + $0x18] sm:$0xf]
        %v3860 = vld [vmem:[%s787 + $0x1c] sm:$0xf]
        %v3861 = vld [vmem:[%s787 + $0x20] sm:$0xf]
        %v3862 = vld [vmem:[%s787 + $0x24] sm:$0xf]
        %v3863 = vld [vmem:[%s787 + $0x28] sm:$0xf]
        %v3864 = vld [vmem:[%s787 + $0x2c] sm:$0xf]
        %v3865 = vld [vmem:[%s787 + $0x30] sm:$0xf]
        %v3866 = vld [vmem:[%s787 + $0x34] sm:$0xf]
        %v3867 = vld [vmem:[%s787 + $0x38] sm:$0xf]
        %v3868 = vld [vmem:[%s787 + $0x3c] sm:$0xf]
        %v3869 = vld [vmem:[%s787 + $0x40] sm:$0xf]
        %v3870 = vld [vmem:[%s787 + $0x44] sm:$0xf]
        %v3871 = vld [vmem:[%s787 + $0x48] sm:$0xf]
        %v3872 = vld [vmem:[%s787 + $0x4c] sm:$0xf]
        %v3873 = vld [vmem:[%s787 + $0x50] sm:$0xf]
        %v3874 = vld [vmem:[%s787 + $0x54] sm:$0xf]
        %v3875 = vld [vmem:[%s787 + $0x58] sm:$0xf]
        %v3876 = vld [vmem:[%s787 + $0x5c] sm:$0xf]
        %v3877 = vld [vmem:[%s787 + $0x60] sm:$0xf]
        %v3878 = vld [vmem:[%s787 + $0x64] sm:$0xf]
        %v3879 = vld [vmem:[%s787 + $0x68] sm:$0xf]
        %v3880 = vld [vmem:[%s787 + $0x6c] sm:$0xf]
        %v3881 = vld [vmem:[%s787 + $0x70] sm:$0xf]
        %v3882 = vld [vmem:[%s787 + $0x74] sm:$0xf]
        %v3883 = vld [vmem:[%s787 + $0x78] sm:$0xf]
        %v3884 = vld [vmem:[%s787 + $0x7c] sm:$0xf]
        %v3885 = vld [vmem:[%s900] sm:$0x1]
        %v3887 = vperm.slane %v3885, 0
        %v3921 = vunpack.c.l.b16 %v3853
        %v3922 = vunpack.c.l.b16 %v3854
        %v3923 = vunpack.c.l.b16 %v3855
        %v3924 = vunpack.c.l.b16 %v3856
        %v3925 = vunpack.c.l.b16 %v3857
        %v3926 = vunpack.c.l.b16 %v3858
        %v3927 = vunpack.c.l.b16 %v3859
        %v3928 = vunpack.c.l.b16 %v3860
        %v3929 = vunpack.c.l.b16 %v3861
        %v3930 = vunpack.c.l.b16 %v3862
        %v3931 = vunpack.c.l.b16 %v3863
        %v3932 = vunpack.c.l.b16 %v3864
        %v3933 = vunpack.c.l.b16 %v3865
        %v3934 = vunpack.c.l.b16 %v3866
        %v3935 = vunpack.c.l.b16 %v3867
        %v3936 = vunpack.c.l.b16 %v3868
        %v3937 = vunpack.c.l.b16 %v3869
        %v3938 = vunpack.c.l.b16 %v3870
        %v3939 = vunpack.c.l.b16 %v3871
        %v3940 = vunpack.c.l.b16 %v3872
        %v3941 = vunpack.c.l.b16 %v3873
        %v3942 = vunpack.c.l.b16 %v3874
        %v3943 = vunpack.c.l.b16 %v3875
        %v3944 = vunpack.c.l.b16 %v3876
        %v3945 = vunpack.c.l.b16 %v3877
        %v3946 = vunpack.c.l.b16 %v3878
        %v3947 = vunpack.c.l.b16 %v3879
        %v3948 = vunpack.c.l.b16 %v3880
        %v3949 = vunpack.c.l.b16 %v3881
        %v3950 = vunpack.c.l.b16 %v3882
        %v3951 = vunpack.c.l.b16 %v3883
        %v3952 = vunpack.c.l.b16 %v3884
        %v3953 = vpack.c.b16 %v3922, %v3921
        %v3954 = vpack.c.b16 %v3924, %v3923
        %v3955 = vpack.c.b16 %v3926, %v3925
        %v3956 = vpack.c.b16 %v3928, %v3927
        %v3957 = vpack.c.b16 %v3930, %v3929
        %v3958 = vpack.c.b16 %v3932, %v3931
        %v3959 = vpack.c.b16 %v3934, %v3933
        %v3960 = vpack.c.b16 %v3936, %v3935
        %v3961 = vpack.c.b16 %v3938, %v3937
        %v3962 = vpack.c.b16 %v3940, %v3939
        %v3963 = vpack.c.b16 %v3942, %v3941
        %v3964 = vpack.c.b16 %v3944, %v3943
        %v3965 = vpack.c.b16 %v3946, %v3945
        %v3966 = vpack.c.b16 %v3948, %v3947
        %v3967 = vpack.c.b16 %v3950, %v3949
        %v3968 = vpack.c.b16 %v3952, %v3951
        %3985 = vmatpush.bf16.msra.mxu0 %v3960
        %3986 = vmatpush.bf16.msra.mxu0 %v3959
        %3987 = vmatpush.bf16.msra.mxu0 %v3958
        %3988 = vmatpush.bf16.msra.mxu0 %v3957
        %3989 = vmatpush.bf16.msra.mxu0 %v3956
        %3990 = vmatpush.bf16.msra.mxu0 %v3955
        %3991 = vmatpush.bf16.msra.mxu0 %v3954
        %3992 = vmatpush.bf16.msra.mxu0 %v3953
        %3993 = vmatmul.bf16.gmra.mxu0 %v3837
        %v3994 = vpop.f32.mrf.mxu0
        %v3995 = vadd.f32 %v3887, %v3994
        %v3996 = vpop.f32.mrf.mxu0
        %v3997 = vadd.f32 %v3887, %v3996
        %3998 = vmatmul.bf16.gmra.mxu0 %v3839
        %v3999 = vpop.f32.mrf.mxu0
        %v4000 = vadd.f32 %v3887, %v3999
        %v4001 = vpop.f32.mrf.mxu0
        %v4002 = vadd.f32 %v3887, %v4001
        %4003 = vmatmul.bf16.gmra.mxu0 %v3841
        %v4004 = vpop.f32.mrf.mxu0
        %v4005 = vadd.f32 %v3887, %v4004
        %v4006 = vpop.f32.mrf.mxu0
        %v4007 = vadd.f32 %v3887, %v4006
        %4008 = vmatmul.bf16.gmra.mxu0 %v3843
        %v4009 = vpop.f32.mrf.mxu0
        %v4010 = vadd.f32 %v3887, %v4009
        %v4011 = vpop.f32.mrf.mxu0
        %v4012 = vadd.f32 %v3887, %v4011
        %4013 = vmatmul.bf16.gmra.mxu0 %v3845
        %v4014 = vpop.f32.mrf.mxu0
        %v4015 = vadd.f32 %v3887, %v4014
        %v4016 = vpop.f32.mrf.mxu0
        %v4017 = vadd.f32 %v3887, %v4016
        %4018 = vmatmul.bf16.gmra.mxu0 %v3847
        %v4019 = vpop.f32.mrf.mxu0
        %v4020 = vadd.f32 %v3887, %v4019
        %v4021 = vpop.f32.mrf.mxu0
        %v4022 = vadd.f32 %v3887, %v4021
        %4023 = vmatmul.bf16.gmra.mxu0 %v3849
        %v4024 = vpop.f32.mrf.mxu0
        %v4025 = vadd.f32 %v3887, %v4024
        %v4026 = vpop.f32.mrf.mxu0
        %v4027 = vadd.f32 %v3887, %v4026
        %4028 = vmatmul.bf16.gmra.mxu0 %v3851
        %v4029 = vpop.f32.mrf.mxu0
        %v4030 = vadd.f32 %v3887, %v4029
        %v4031 = vpop.f32.mrf.mxu0
        %v4032 = vadd.f32 %v3887, %v4031
        %4033 = vdwg.mxu0
        %4034 = vmatpush.bf16.msra.mxu0 %v3968
        %4035 = vmatpush.bf16.msra.mxu0 %v3967
        %4036 = vmatpush.bf16.msra.mxu0 %v3966
        %4037 = vmatpush.bf16.msra.mxu0 %v3965
        %4038 = vmatpush.bf16.msra.mxu0 %v3964
        %4039 = vmatpush.bf16.msra.mxu0 %v3963
        %4040 = vmatpush.bf16.msra.mxu0 %v3962
        %4041 = vmatpush.bf16.msra.mxu0 %v3961
        %4042 = vmatmul.bf16.gmra.mxu0 %v3838
        %v4043 = vpop.f32.mrf.mxu0
        %v4044 = vadd.f32 %v3995, %v4043
        %v4045 = vpop.f32.mrf.mxu0
        %v4046 = vadd.f32 %v3997, %v4045
        %4047 = vmatmul.bf16.gmra.mxu0 %v3840
        %v4048 = vpop.f32.mrf.mxu0
        %v4049 = vadd.f32 %v4000, %v4048
        %v4050 = vpop.f32.mrf.mxu0
        %v4051 = vadd.f32 %v4002, %v4050
        %4052 = vmatmul.bf16.gmra.mxu0 %v3842
        %v4053 = vpop.f32.mrf.mxu0
        %v4054 = vadd.f32 %v4005, %v4053
        %v4055 = vpop.f32.mrf.mxu0
        %v4056 = vadd.f32 %v4007, %v4055
        %4057 = vmatmul.bf16.gmra.mxu0 %v3844
        %v4058 = vpop.f32.mrf.mxu0
        %v4059 = vadd.f32 %v4010, %v4058
        %v4060 = vpop.f32.mrf.mxu0
        %v4061 = vadd.f32 %v4012, %v4060
        %4062 = vmatmul.bf16.gmra.mxu0 %v3846
        %v4063 = vpop.f32.mrf.mxu0
        %v4064 = vadd.f32 %v4015, %v4063
        %v4065 = vpop.f32.mrf.mxu0
        %v4066 = vadd.f32 %v4017, %v4065
        %4067 = vmatmul.bf16.gmra.mxu0 %v3848
        %v4068 = vpop.f32.mrf.mxu0
        %v4069 = vadd.f32 %v4020, %v4068
        %v4070 = vpop.f32.mrf.mxu0
        %v4071 = vadd.f32 %v4022, %v4070
        %4072 = vmatmul.bf16.gmra.mxu0 %v3850
        %v4073 = vpop.f32.mrf.mxu0
        %v4074 = vadd.f32 %v4025, %v4073
        %v4075 = vpop.f32.mrf.mxu0
        %v4076 = vadd.f32 %v4027, %v4075
        %4077 = vmatmul.bf16.gmra.mxu0 %v3852
        %v4078 = vpop.f32.mrf.mxu0
        %v4079 = vadd.f32 %v4030, %v4078
        %v4080 = vpop.f32.mrf.mxu0
        %v4081 = vadd.f32 %v4032, %v4080
        %4082 = vdwg.mxu0
        %v4083 = vadd.f32 %v2581, %v4044
        %v4084 = vadd.f32 %v2582, %v4046
        %v4085 = vadd.f32 %v2583, %v4049
        %v4086 = vadd.f32 %v2584, %v4051
        %v4087 = vadd.f32 %v2585, %v4054
        %v4088 = vadd.f32 %v2586, %v4056
        %v4089 = vadd.f32 %v2587, %v4059
        %v4090 = vadd.f32 %v2588, %v4061
        %v4091 = vadd.f32 %v2589, %v4064
        %v4092 = vadd.f32 %v2590, %v4066
        %v4093 = vadd.f32 %v2591, %v4069
        %v4094 = vadd.f32 %v2592, %v4071
        %v4095 = vadd.f32 %v2593, %v4074
        %v4096 = vadd.f32 %v2594, %v4076
        %v4097 = vadd.f32 %v2595, %v4079
        %v4098 = vadd.f32 %v2596, %v4081
        %4099 = vst [vmem:[%s887] sm:$0xff] %v4083
        %4100 = vst [vmem:[%s887 + $0x8] sm:$0xff] %v4084
        %4101 = vst [vmem:[%s887 + $0x10] sm:$0xff] %v4085
        %4102 = vst [vmem:[%s887 + $0x18] sm:$0xff] %v4086
        %4103 = vst [vmem:[%s887 + $0x20] sm:$0xff] %v4087
        %4104 = vst [vmem:[%s887 + $0x28] sm:$0xff] %v4088
        %4105 = vst [vmem:[%s887 + $0x30] sm:$0xff] %v4089
        %4106 = vst [vmem:[%s887 + $0x38] sm:$0xff] %v4090
        %4107 = vst [vmem:[%s887 + $0x40] sm:$0xff] %v4091
        %4108 = vst [vmem:[%s887 + $0x48] sm:$0xff] %v4092
        %4109 = vst [vmem:[%s887 + $0x50] sm:$0xff] %v4093
        %4110 = vst [vmem:[%s887 + $0x58] sm:$0xff] %v4094
        %4111 = vst [vmem:[%s887 + $0x60] sm:$0xff] %v4095
        %4112 = vst [vmem:[%s887 + $0x68] sm:$0xff] %v4096
        %4113 = vst [vmem:[%s887 + $0x70] sm:$0xff] %v4097
        %4114 = vst [vmem:[%s887 + $0x78] sm:$0xff] %v4098
        %s4115 = sand.u32 %s430, 1
        %s4116 = scalar_lea.sflag [#allocation4], %s4115
        %s4117 = sand.u32 %s430, 1
        %s4118 = smul.addr %s4117, 128
        %s4119 = scalar_lea.vmem [#allocation19], %s4118
        // Predicated region
        $region121: #{tpu_custom_call.1} parent=75 // pred_check
          %p4120 = pneg %p440
        $region122: #{tpu_custom_call.1} parent=75 // pred_check_branch
          %4122 = sbr.rel (%p4120) target = $region124
        $region123: #{tpu_custom_call.1} parent=75 // pred_region
          %4124 = vsyncadd %s4116, 0
          %s4125 = smul.addr %s50, 16
          %s4126 = smul.addr %s4125, 8
          %s4127 = scalar_lea.hbm %s14, %s4126
          %s4128 = sshll.u32 %s4119, 4
          %s4129 = int_to_ptr.vmem [resolvable:$true] %s4128
          %s4130 = sshll.u32 %s4127, 4
          %s4131 = int_to_ptr.hbm [resolvable:$true] %s4130
          %4136 = dma.vmem_to_hbm [thread:$0]  %s4129, 2048, %s4131, %s4116, 128, 128, 8
        $region124: #{tpu_custom_call.1} parent=75 // pred_fallthru
          _
      $region76: #{tpu_custom_call.1} parent=5 // pred_fallthru
        _
      %p4137 = scmp.le.s32.totalorder 2, %s41
      // Predicated region
      $region125: #{tpu_custom_call.1} parent=5 // pred_check
        %p4138 = pneg %p4137
      $region126: #{tpu_custom_call.1} parent=5 // pred_check_branch
        %4140 = sbr.rel (%p4138) target = $region128
      $region127: #{tpu_custom_call.1} parent=5 // pred_region
        %s4141 = ssub.s32 %s41, 2
        // Predicated region
        $region129: #{tpu_custom_call.1} parent=127 // pred_check
          %p4142 = pneg %p446
        $region130: #{tpu_custom_call.1} parent=127 // pred_check_branch
          %4144 = sbr.rel (%p4142) target = $region132
        $region131: #{tpu_custom_call.1} parent=127 // pred_region
          %s4145 = sand.u32 %s431, 1
          %s4146 = scalar_lea.sflag [#allocation4], %s4145
          %s4147 = sand.u32 %s431, 1
          %s4148 = smul.addr %s4147, 128
          %s4149 = scalar_lea.vmem [#allocation19], %s4148
          %4151 = dma.done %s4146, 2048
        $region132: #{tpu_custom_call.1} parent=127 // pred_fallthru
          _
      $region128: #{tpu_custom_call.1} parent=5 // pred_fallthru
        _
    $region6: #{tpu_custom_call.1} parent=1 // loop_footer
      %s45 = sadd.s32 1, %s41
    $region7: #{tpu_custom_call.1} parent=1 // loop_footer_branch
      %40 = sbr.rel target = $region3
    $region8: #{tpu_custom_call.1} parent=1 // loop_exit
      _
    %4152 = vsyncpa [#allocation3], 1
    %s4153 = scalar_lea.sflag [#allocation3], 1
    %4154 = vsyncpa %s4153, 1
    %4155 = vsyncpa [#allocation6], 1
    %s4156 = scalar_lea.sflag [#allocation6], 1
    %4157 = vsyncpa %s4156, 1
    %4158 = vsyncpa [#allocation9], 1
    %s4159 = scalar_lea.sflag [#allocation9], 1
    %4160 = vsyncpa %s4159, 1
    %4161 = vsyncpa [#allocation12], 1
    %s4162 = scalar_lea.sflag [#allocation12], 1
    %4163 = vsyncpa %s4162, 1
    %4164 = vsyncpa [#allocation15], 1
    %s4165 = scalar_lea.sflag [#allocation15], 1
    %4166 = vsyncpa %s4165, 1
    %4167 = vsyncpa [#allocation18], 1
    %s4168 = scalar_lea.sflag [#allocation18], 1
    %4169 = vsyncpa %s4168, 1
    %4170 = vsyncpa [#allocation4], 1
    %s4171 = scalar_lea.sflag [#allocation4], 1
    %4172 = vsyncpa %s4171, 1

</llo_original>
